<compile_context>
chip_gen: v7x
topology: tpu7x:2x2x1
jax: 0.10.0
libtpu: 0.0.40
codegen_flags: <defaults>
</compile_context>

<pallas_src>
import functools

import jax
import jax.numpy as jnp
from jax import lax
from jax.experimental import pallas as pl
from jax.experimental.pallas import tpu as pltpu

C1 = 64          # hidden channels of the encoder
K1P = 32         # padded im2col K for layer 1 (9 * Cin = 27 -> 32)
COUTP = 128      # padded out-channel count for the layer-3 MXU matmul
PADW = 8         # aligned halo offset along the sublane (W) dim of the scratch
_TAPS = [(dy, dx) for dy in range(3) for dx in range(3)]


def _unet_fused_kernel(p1_ref, w1_ref, b1_ref, w2_ref, b2_ref, w3_ref, b3_ref,
                       o_ref, a_ref, p_ref, *, H, W, cout):
    # p1_ref: (1, H*W, K1P)  bf16 im2col patches of the input image
    # w1_ref: (K1P, C1)      bf16    b1_ref: (1, C1)  f32
    # w2_ref: (9*C1, C1)     bf16    b2_ref: (1, C1)  f32
    # w3_ref: (9*C1, COUTP)  bf16    b3_ref: (cout,1) f32
    # o_ref : (1, cout, H*W) f32  (lane-dense output row per channel)
    # a_ref : (H+2, W+2*PADW, C1) f32  halo-padded activation scratch (reused)
    # p_ref : (H*W, 9*C1) bf16         big-K patch scratch (reused)
    HW = H * W

    # ---- zero only the halo strips; the interior is always fully overwritten ----
    a_ref[0:1, :, :] = jnp.zeros((1, W + 2 * PADW, C1), jnp.float32)
    a_ref[H + 1:H + 2, :, :] = jnp.zeros((1, W + 2 * PADW, C1), jnp.float32)
    a_ref[:, PADW - 1:PADW, :] = jnp.zeros((H + 2, 1, C1), jnp.float32)
    a_ref[:, PADW + W:PADW + W + 1, :] = jnp.zeros((H + 2, 1, C1), jnp.float32)

    def store_interior(h):
        # Interior store at an aligned sublane offset (PADW is a multiple of 8).
        a_ref[1:H + 1, PADW:PADW + W, :] = h.reshape(H, W, C1)

    def build_patches():
        # Pack the 9 shifted taps of the VMEM-resident activation into one
        # (HW, 9*C1) bf16 matrix so each conv layer is a single big-K matmul.
        for t, (dy, dx) in enumerate(_TAPS):
            c0 = PADW - 1 + dx
            tap = a_ref[dy:dy + H, c0:c0 + W, :].reshape(HW, C1)
            p_ref[:, t * C1:(t + 1) * C1] = tap.astype(jnp.bfloat16)

    # ---- layer 1: single (HW, K1P) @ (K1P, C1) im2col matmul + ReLU ----
    h1 = jnp.dot(p1_ref[0], w1_ref[...], preferred_element_type=jnp.float32)
    store_interior(jnp.maximum(h1 + b1_ref[...], 0.0))

    # ---- layer 2: single (HW, 576) @ (576, C1) matmul + ReLU ----
    build_patches()
    h2 = jnp.dot(p_ref[...], w2_ref[...], preferred_element_type=jnp.float32)
    store_interior(jnp.maximum(h2 + b2_ref[...], 0.0))

    # ---- layer 3: single (HW, 576) @ (576, COUTP) matmul ----
    build_patches()
    z = jnp.dot(p_ref[...], w3_ref[...], preferred_element_type=jnp.float32)

    # Move the `cout` real channels from sublanes into lanes with a one-hot
    # selection matmul (the q @ k.T dot_general pattern), so the HBM store is a
    # lane-dense (cout, HW) row instead of a 128x-padded (HW, COUTP) tile.
    row_i = lax.broadcasted_iota(jnp.int32, (8, COUTP), 0)
    col_i = lax.broadcasted_iota(jnp.int32, (8, COUTP), 1)
    sel = ((row_i == col_i) & (col_i < cout)).astype(jnp.float32)
    zt = lax.dot_general(sel, z, (((1,), (1,)), ((), ())),
                         preferred_element_type=jnp.float32)       # (8, HW)
    logits = zt[0:cout, :] + b3_ref[...]                           # (cout, HW)

    # Numerically-stable sigmoid with exact reciprocal (keeps output in (0, 1));
    # elementwise math stays f32 (no bf16 VPU/EUP on v5e).
    e = jnp.exp(-jnp.abs(logits))
    inv = 1.0 / (1.0 + e)
    out = jnp.where(logits >= 0.0, inv, e * inv)
    o_ref[...] = out.reshape(1, cout, HW).astype(o_ref.dtype)


def _unet_pallas(x_nhwc, params):
    """x: (N, H, W, Cin) f32 -> (N, cout, H*W) f32 (already channel-major)."""
    N, H, W, Cin = x_nhwc.shape
    cout = params["w3"].shape[-1]
    assert cout <= 8, "selection matmul emits at most 8 output channels"
    HW = H * W
    K1 = 9 * Cin
    assert K1 <= K1P

    # --- wrapper-side layout plumbing (im2col for layer 1, dtype/pad packing) ---
    xp = jnp.pad(x_nhwc, ((0, 0), (1, 1), (1, 1), (0, 0)))
    taps = [xp[:, dy:dy + H, dx:dx + W, :] for dy, dx in _TAPS]
    p1 = jnp.concatenate(taps, axis=-1).reshape(N, HW, K1)        # (N, HW, 27)
    p1 = jnp.pad(p1, ((0, 0), (0, 0), (0, K1P - K1))).astype(jnp.bfloat16)

    w1 = jnp.pad(params["w1"].reshape(K1, C1),
                 ((0, K1P - K1), (0, 0))).astype(jnp.bfloat16)     # (K1P, C1)
    b1 = params["b1"].reshape(1, C1).astype(jnp.float32)
    w2 = params["w2"].reshape(9 * C1, C1).astype(jnp.bfloat16)     # (576, C1)
    b2 = params["b2"].reshape(1, C1).astype(jnp.float32)
    w3 = jnp.pad(params["w3"], ((0, 0), (0, 0), (0, 0), (0, COUTP - cout)))
    w3 = w3.reshape(9 * C1, COUTP).astype(jnp.bfloat16)            # (576, COUTP)
    b3 = params["b3"].reshape(cout, 1).astype(jnp.float32)

    kernel = functools.partial(_unet_fused_kernel, H=H, W=W, cout=cout)
    return pl.pallas_call(
        kernel,
        out_shape=jax.ShapeDtypeStruct((N, cout, HW), jnp.float32),
        grid_spec=pltpu.PrefetchScalarGridSpec(
            num_scalar_prefetch=0,
            grid=(N,),
            in_specs=[
                pl.BlockSpec((1, HW, K1P), lambda n: (n, 0, 0)),
                pl.BlockSpec((K1P, C1), lambda n: (0, 0)),
                pl.BlockSpec((1, C1), lambda n: (0, 0)),
                pl.BlockSpec((9 * C1, C1), lambda n: (0, 0)),
                pl.BlockSpec((1, C1), lambda n: (0, 0)),
                pl.BlockSpec((9 * C1, COUTP), lambda n: (0, 0)),
                pl.BlockSpec((cout, 1), lambda n: (0, 0)),
            ],
            out_specs=pl.BlockSpec((1, cout, HW), lambda n: (n, 0, 0)),
            scratch_shapes=[
                pltpu.VMEM((H + 2, W + 2 * PADW, C1), jnp.float32),
                pltpu.VMEM((HW, 9 * C1), jnp.bfloat16),
            ],
        ),
        compiler_params=pltpu.CompilerParams(
            dimension_semantics=("parallel",)),
    )(p1, w1, b1, w2, b2, w3, b3)


def unet_forward(x_nchw, params):
    """Matches UNet.forward: conv+ReLU, conv+ReLU, conv+Sigmoid (all 3x3, pad=1)."""
    N, _, H, W = x_nchw.shape
    cout = params["w3"].shape[-1]
    x = jnp.transpose(x_nchw, (0, 2, 3, 1))              # NCHW -> NHWC for im2col
    out = _unet_pallas(x, params)                        # (N, cout, H*W)
    return out.reshape(N, cout, H, W)                    # free reshape, already NCHW


def unet_reference(x_nchw, params):
    """Pure-JAX f32 reference (XLA conv) for a correctness cross-check."""
    x = jnp.transpose(x_nchw, (0, 2, 3, 1))

    def conv(x, w, b):
        y = jax.lax.conv_general_dilated(
            x, w, window_strides=(1, 1), padding="SAME",
            dimension_numbers=("NHWC", "HWIO", "NHWC"))
        return y + b

    x = jax.nn.relu(conv(x, params["w1"], params["b1"]))
    x = jax.nn.relu(conv(x, params["w2"], params["b2"]))
    x = jax.nn.sigmoid(conv(x, params["w3"], params["b3"]))
    return jnp.transpose(x, (0, 3, 1, 2))


def init_params(key, in_channels=3, out_channels=1):
    ks = jax.random.split(key, 6)

    def u(k, shape, fan_in):
        bound = 1.0 / float(fan_in) ** 0.5               # PyTorch-style uniform bound
        return jax.random.uniform(k, shape, jnp.float32, -bound, bound)

    return {
        "w1": u(ks[0], (3, 3, in_channels, C1), in_channels * 9),
        "b1": u(ks[1], (C1,), in_channels * 9),
        "w2": u(ks[2], (3, 3, C1, C1), C1 * 9),
        "b2": u(ks[3], (C1,), C1 * 9),
        "w3": u(ks[4], (3, 3, C1, out_channels), C1 * 9),
        "b3": u(ks[5], (out_channels,), C1 * 9),
    }


if __name__ == "__main__":
    key = jax.random.PRNGKey(0)
    pkey, xkey = jax.random.split(key)
    params = init_params(pkey, in_channels=3, out_channels=1)

    # Small NCHW input consistent with the module: batch=2, channels=3, spatial=16.
    x = jax.random.normal(xkey, (2, 3, 16, 16), jnp.float32)

    out = jax.jit(unet_forward)(x, params)
    out = jax.block_until_ready(out)

    assert out.shape == (2, 1, 16, 16), out.shape
    assert bool(jnp.all(jnp.isfinite(out)))
    # Sigmoid output must lie in [0, 1] (exact reciprocal keeps it inside).
    assert bool(jnp.all((out >= 0.0) & (out <= 1.0)))

    # Cross-check against the XLA f32 reference (bf16 MXU tolerance).
    ref = jax.jit(unet_reference)(x, params)
    max_err = float(jnp.max(jnp.abs(out - ref)))
    assert max_err < 5e-2, max_err

    print("KERNEL_OK")
</pallas_src>

<mosaic_0001>
module attributes {stable_mosaic.version = 11 : i64} {
  func.func @_unet_fused_kernel(%arg0: i32, %arg1: memref<1x256x32xbf16, #tpu.memory_space<vmem>>, %arg2: memref<32x64xbf16, #tpu.memory_space<vmem>>, %arg3: memref<1x64xf32, #tpu.memory_space<vmem>>, %arg4: memref<576x64xbf16, #tpu.memory_space<vmem>>, %arg5: memref<1x64xf32, #tpu.memory_space<vmem>>, %arg6: memref<576x128xbf16, #tpu.memory_space<vmem>>, %arg7: memref<1x1xf32, #tpu.memory_space<vmem>>, %arg8: memref<1x1x256xf32, #tpu.memory_space<vmem>>, %arg9: memref<18x32x64xf32, #tpu.memory_space<vmem>>, %arg10: memref<256x576xbf16, #tpu.memory_space<vmem>>) attributes {dimension_semantics = [#tpu.dimension_semantics<parallel>], iteration_bounds = array<i64: 2>, scalar_prefetch = 0 : i64, scratch_operands = 2 : i64, tpu.core_type = #tpu.core_type<tc>, window_params = [{transform_indices = @transform_0, window_bounds = array<i64: 1, 256, 32>}, {pipeline_mode = #tpu.pipeline_mode<synchronous>, transform_indices = @transform_1, window_bounds = array<i64: 32, 64>}, {pipeline_mode = #tpu.pipeline_mode<synchronous>, transform_indices = @transform_2, window_bounds = array<i64: 1, 64>}, {pipeline_mode = #tpu.pipeline_mode<synchronous>, transform_indices = @transform_3, window_bounds = array<i64: 576, 64>}, {pipeline_mode = #tpu.pipeline_mode<synchronous>, transform_indices = @transform_4, window_bounds = array<i64: 1, 64>}, {pipeline_mode = #tpu.pipeline_mode<synchronous>, transform_indices = @transform_5, window_bounds = array<i64: 576, 128>}, {pipeline_mode = #tpu.pipeline_mode<synchronous>, transform_indices = @transform_6, window_bounds = array<i64: 1, 1>}, {transform_indices = @transform_7, window_bounds = array<i64: 1, 1, 256>}]} {
    %cst = arith.constant 0.000000e+00 : f32
    %0 = vector.broadcast %cst : f32 to vector<1x32x64xf32>
    %c0 = arith.constant 0 : index
    %c0_0 = arith.constant 0 : index
    %c0_1 = arith.constant 0 : index
    %1 = vector.load %arg9[%c0, %c0_0, %c0_1] : memref<18x32x64xf32, #tpu.memory_space<vmem>>, vector<1x32x64xf32>
    tpu.vector_store %arg9[%c0, %c0_0, %c0_1], %0 {strides = array<i32>} : memref<18x32x64xf32, #tpu.memory_space<vmem>>, vector<1x32x64xf32>,
    %cst_2 = arith.constant 0.000000e+00 : f32
    %2 = vector.broadcast %cst_2 : f32 to vector<1x32x64xf32>
    %c17 = arith.constant 17 : index
    %c0_3 = arith.constant 0 : index
    %c0_4 = arith.constant 0 : index
    %3 = vector.load %arg9[%c17, %c0_3, %c0_4] : memref<18x32x64xf32, #tpu.memory_space<vmem>>, vector<1x32x64xf32>
    tpu.vector_store %arg9[%c17, %c0_3, %c0_4], %2 {strides = array<i32>} : memref<18x32x64xf32, #tpu.memory_space<vmem>>, vector<1x32x64xf32>,
    %cst_5 = arith.constant 0.000000e+00 : f32
    %4 = vector.broadcast %cst_5 : f32 to vector<18x1x64xf32>
    %c0_6 = arith.constant 0 : index
    %c7 = arith.constant 7 : index
    %c0_7 = arith.constant 0 : index
    %5 = vector.load %arg9[%c0_6, %c7, %c0_7] : memref<18x32x64xf32, #tpu.memory_space<vmem>>, vector<18x1x64xf32>
    tpu.vector_store %arg9[%c0_6, %c7, %c0_7], %4 {strides = array<i32>} : memref<18x32x64xf32, #tpu.memory_space<vmem>>, vector<18x1x64xf32>,
    %cst_8 = arith.constant 0.000000e+00 : f32
    %6 = vector.broadcast %cst_8 : f32 to vector<18x1x64xf32>
    %c0_9 = arith.constant 0 : index
    %c24 = arith.constant 24 : index
    %c0_10 = arith.constant 0 : index
    %7 = vector.load %arg9[%c0_9, %c24, %c0_10] : memref<18x32x64xf32, #tpu.memory_space<vmem>>, vector<18x1x64xf32>
    tpu.vector_store %arg9[%c0_9, %c24, %c0_10], %6 {strides = array<i32>} : memref<18x32x64xf32, #tpu.memory_space<vmem>>, vector<18x1x64xf32>,
    %c0_11 = arith.constant 0 : index
    %c0_12 = arith.constant 0 : index
    %c0_13 = arith.constant 0 : index
    %8 = vector.load %arg1[%c0_11, %c0_12, %c0_13] : memref<1x256x32xbf16, #tpu.memory_space<vmem>>, vector<1x256x32xbf16>
    %9 = vector.shape_cast %8 : vector<1x256x32xbf16> to vector<256x32xbf16>
    %c0_14 = arith.constant 0 : index
    %c0_15 = arith.constant 0 : index
    %10 = vector.load %arg2[%c0_14, %c0_15] : memref<32x64xbf16, #tpu.memory_space<vmem>>, vector<32x64xbf16>
    %cst_16 = arith.constant dense<0.000000e+00> : vector<256x64xf32>
    %11 = tpu.matmul %9, %10, %cst_16 {dimension_numbers = #tpu.dot_dimension_numbers<[1], [0], [0], [1], [0, 0, 1, 1], [], []>} : vector<256x32xbf16>, vector<32x64xbf16>, vector<256x64xf32> -> vector<256x64xf32>
    %c0_17 = arith.constant 0 : index
    %c0_18 = arith.constant 0 : index
    %12 = vector.load %arg3[%c0_17, %c0_18] : memref<1x64xf32, #tpu.memory_space<vmem>>, vector<1x64xf32>
    %13 = vector.broadcast %12 : vector<1x64xf32> to vector<256x64xf32>
    %14 = arith.addf %11, %13 : vector<256x64xf32>
    %cst_19 = arith.constant 0.000000e+00 : f32
    %15 = vector.broadcast %cst_19 : f32 to vector<256x64xf32>
    %16 = arith.maximumf %14, %15 : vector<256x64xf32>
    %17 = vector.shape_cast %16 : vector<256x64xf32> to vector<16x16x64xf32>
    %c1 = arith.constant 1 : index
    %c8 = arith.constant 8 : index
    %c0_20 = arith.constant 0 : index
    %18 = vector.load %arg9[%c1, %c8, %c0_20] : memref<18x32x64xf32, #tpu.memory_space<vmem>>, vector<16x16x64xf32>
    tpu.vector_store %arg9[%c1, %c8, %c0_20], %17 {strides = array<i32>} : memref<18x32x64xf32, #tpu.memory_space<vmem>>, vector<16x16x64xf32>,
    %c0_21 = arith.constant 0 : index
    %c7_22 = arith.constant 7 : index
    %c0_23 = arith.constant 0 : index
    %19 = vector.load %arg9[%c0_21, %c7_22, %c0_23] : memref<18x32x64xf32, #tpu.memory_space<vmem>>, vector<16x16x64xf32>
    %20 = vector.shape_cast %19 : vector<16x16x64xf32> to vector<256x64xf32>
    %21 = arith.truncf %20 : vector<256x64xf32> to vector<256x64xbf16>
    %c0_24 = arith.constant 0 : index
    %c0_25 = arith.constant 0 : index
    %22 = vector.load %arg10[%c0_24, %c0_25] : memref<256x576xbf16, #tpu.memory_space<vmem>>, vector<256x64xbf16>
    tpu.vector_store %arg10[%c0_24, %c0_25], %21 {strides = array<i32>} : memref<256x576xbf16, #tpu.memory_space<vmem>>, vector<256x64xbf16>,
    %c0_26 = arith.constant 0 : index
    %c8_27 = arith.constant 8 : index
    %c0_28 = arith.constant 0 : index
    %23 = vector.load %arg9[%c0_26, %c8_27, %c0_28] : memref<18x32x64xf32, #tpu.memory_space<vmem>>, vector<16x16x64xf32>
    %24 = vector.shape_cast %23 : vector<16x16x64xf32> to vector<256x64xf32>
    %25 = arith.truncf %24 : vector<256x64xf32> to vector<256x64xbf16>
    %c0_29 = arith.constant 0 : index
    %c64 = arith.constant 64 : index
    %26 = vector.load %arg10[%c0_29, %c64] : memref<256x576xbf16, #tpu.memory_space<vmem>>, vector<256x64xbf16>
    tpu.vector_store %arg10[%c0_29, %c64], %25 {strides = array<i32>} : memref<256x576xbf16, #tpu.memory_space<vmem>>, vector<256x64xbf16>,
    %c0_30 = arith.constant 0 : index
    %c9 = arith.constant 9 : index
    %c0_31 = arith.constant 0 : index
    %27 = vector.load %arg9[%c0_30, %c9, %c0_31] : memref<18x32x64xf32, #tpu.memory_space<vmem>>, vector<16x16x64xf32>
    %28 = vector.shape_cast %27 : vector<16x16x64xf32> to vector<256x64xf32>
    %29 = arith.truncf %28 : vector<256x64xf32> to vector<256x64xbf16>
    %c0_32 = arith.constant 0 : index
    %c128 = arith.constant 128 : index
    %30 = vector.load %arg10[%c0_32, %c128] : memref<256x576xbf16, #tpu.memory_space<vmem>>, vector<256x64xbf16>
    tpu.vector_store %arg10[%c0_32, %c128], %29 {strides = array<i32>} : memref<256x576xbf16, #tpu.memory_space<vmem>>, vector<256x64xbf16>,
    %c1_33 = arith.constant 1 : index
    %c7_34 = arith.constant 7 : index
    %c0_35 = arith.constant 0 : index
    %31 = vector.load %arg9[%c1_33, %c7_34, %c0_35] : memref<18x32x64xf32, #tpu.memory_space<vmem>>, vector<16x16x64xf32>
    %32 = vector.shape_cast %31 : vector<16x16x64xf32> to vector<256x64xf32>
    %33 = arith.truncf %32 : vector<256x64xf32> to vector<256x64xbf16>
    %c0_36 = arith.constant 0 : index
    %c192 = arith.constant 192 : index
    %34 = vector.load %arg10[%c0_36, %c192] : memref<256x576xbf16, #tpu.memory_space<vmem>>, vector<256x64xbf16>
    tpu.vector_store %arg10[%c0_36, %c192], %33 {strides = array<i32>} : memref<256x576xbf16, #tpu.memory_space<vmem>>, vector<256x64xbf16>,
    %c1_37 = arith.constant 1 : index
    %c8_38 = arith.constant 8 : index
    %c0_39 = arith.constant 0 : index
    %35 = vector.load %arg9[%c1_37, %c8_38, %c0_39] : memref<18x32x64xf32, #tpu.memory_space<vmem>>, vector<16x16x64xf32>
    %36 = vector.shape_cast %35 : vector<16x16x64xf32> to vector<256x64xf32>
    %37 = arith.truncf %36 : vector<256x64xf32> to vector<256x64xbf16>
    %c0_40 = arith.constant 0 : index
    %c256 = arith.constant 256 : index
    %38 = vector.load %arg10[%c0_40, %c256] : memref<256x576xbf16, #tpu.memory_space<vmem>>, vector<256x64xbf16>
    tpu.vector_store %arg10[%c0_40, %c256], %37 {strides = array<i32>} : memref<256x576xbf16, #tpu.memory_space<vmem>>, vector<256x64xbf16>,
    %c1_41 = arith.constant 1 : index
    %c9_42 = arith.constant 9 : index
    %c0_43 = arith.constant 0 : index
    %39 = vector.load %arg9[%c1_41, %c9_42, %c0_43] : memref<18x32x64xf32, #tpu.memory_space<vmem>>, vector<16x16x64xf32>
    %40 = vector.shape_cast %39 : vector<16x16x64xf32> to vector<256x64xf32>
    %41 = arith.truncf %40 : vector<256x64xf32> to vector<256x64xbf16>
    %c0_44 = arith.constant 0 : index
    %c320 = arith.constant 320 : index
    %42 = vector.load %arg10[%c0_44, %c320] : memref<256x576xbf16, #tpu.memory_space<vmem>>, vector<256x64xbf16>
    tpu.vector_store %arg10[%c0_44, %c320], %41 {strides = array<i32>} : memref<256x576xbf16, #tpu.memory_space<vmem>>, vector<256x64xbf16>,
    %c2 = arith.constant 2 : index
    %c7_45 = arith.constant 7 : index
    %c0_46 = arith.constant 0 : index
    %43 = vector.load %arg9[%c2, %c7_45, %c0_46] : memref<18x32x64xf32, #tpu.memory_space<vmem>>, vector<16x16x64xf32>
    %44 = vector.shape_cast %43 : vector<16x16x64xf32> to vector<256x64xf32>
    %45 = arith.truncf %44 : vector<256x64xf32> to vector<256x64xbf16>
    %c0_47 = arith.constant 0 : index
    %c384 = arith.constant 384 : index
    %46 = vector.load %arg10[%c0_47, %c384] : memref<256x576xbf16, #tpu.memory_space<vmem>>, vector<256x64xbf16>
    tpu.vector_store %arg10[%c0_47, %c384], %45 {strides = array<i32>} : memref<256x576xbf16, #tpu.memory_space<vmem>>, vector<256x64xbf16>,
    %c2_48 = arith.constant 2 : index
    %c8_49 = arith.constant 8 : index
    %c0_50 = arith.constant 0 : index
    %47 = vector.load %arg9[%c2_48, %c8_49, %c0_50] : memref<18x32x64xf32, #tpu.memory_space<vmem>>, vector<16x16x64xf32>
    %48 = vector.shape_cast %47 : vector<16x16x64xf32> to vector<256x64xf32>
    %49 = arith.truncf %48 : vector<256x64xf32> to vector<256x64xbf16>
    %c0_51 = arith.constant 0 : index
    %c448 = arith.constant 448 : index
    %50 = vector.load %arg10[%c0_51, %c448] : memref<256x576xbf16, #tpu.memory_space<vmem>>, vector<256x64xbf16>
    tpu.vector_store %arg10[%c0_51, %c448], %49 {strides = array<i32>} : memref<256x576xbf16, #tpu.memory_space<vmem>>, vector<256x64xbf16>,
    %c2_52 = arith.constant 2 : index
    %c9_53 = arith.constant 9 : index
    %c0_54 = arith.constant 0 : index
    %51 = vector.load %arg9[%c2_52, %c9_53, %c0_54] : memref<18x32x64xf32, #tpu.memory_space<vmem>>, vector<16x16x64xf32>
    %52 = vector.shape_cast %51 : vector<16x16x64xf32> to vector<256x64xf32>
    %53 = arith.truncf %52 : vector<256x64xf32> to vector<256x64xbf16>
    %c0_55 = arith.constant 0 : index
    %c512 = arith.constant 512 : index
    %54 = vector.load %arg10[%c0_55, %c512] : memref<256x576xbf16, #tpu.memory_space<vmem>>, vector<256x64xbf16>
    tpu.vector_store %arg10[%c0_55, %c512], %53 {strides = array<i32>} : memref<256x576xbf16, #tpu.memory_space<vmem>>, vector<256x64xbf16>,
    %c0_56 = arith.constant 0 : index
    %c0_57 = arith.constant 0 : index
    %55 = vector.load %arg10[%c0_56, %c0_57] : memref<256x576xbf16, #tpu.memory_space<vmem>>, vector<256x576xbf16>
    %c0_58 = arith.constant 0 : index
    %c0_59 = arith.constant 0 : index
    %56 = vector.load %arg4[%c0_58, %c0_59] : memref<576x64xbf16, #tpu.memory_space<vmem>>, vector<576x64xbf16>
    %cst_60 = arith.constant dense<0.000000e+00> : vector<256x64xf32>
    %57 = tpu.matmul %55, %56, %cst_60 {dimension_numbers = #tpu.dot_dimension_numbers<[1], [0], [0], [1], [0, 0, 1, 1], [], []>} : vector<256x576xbf16>, vector<576x64xbf16>, vector<256x64xf32> -> vector<256x64xf32>
    %c0_61 = arith.constant 0 : index
    %c0_62 = arith.constant 0 : index
    %58 = vector.load %arg5[%c0_61, %c0_62] : memref<1x64xf32, #tpu.memory_space<vmem>>, vector<1x64xf32>
    %59 = vector.broadcast %58 : vector<1x64xf32> to vector<256x64xf32>
    %60 = arith.addf %57, %59 : vector<256x64xf32>
    %cst_63 = arith.constant 0.000000e+00 : f32
    %61 = vector.broadcast %cst_63 : f32 to vector<256x64xf32>
    %62 = arith.maximumf %60, %61 : vector<256x64xf32>
    %63 = vector.shape_cast %62 : vector<256x64xf32> to vector<16x16x64xf32>
    %c1_64 = arith.constant 1 : index
    %c8_65 = arith.constant 8 : index
    %c0_66 = arith.constant 0 : index
    %64 = vector.load %arg9[%c1_64, %c8_65, %c0_66] : memref<18x32x64xf32, #tpu.memory_space<vmem>>, vector<16x16x64xf32>
    tpu.vector_store %arg9[%c1_64, %c8_65, %c0_66], %63 {strides = array<i32>} : memref<18x32x64xf32, #tpu.memory_space<vmem>>, vector<16x16x64xf32>,
    %c0_67 = arith.constant 0 : index
    %c7_68 = arith.constant 7 : index
    %c0_69 = arith.constant 0 : index
    %65 = vector.load %arg9[%c0_67, %c7_68, %c0_69] : memref<18x32x64xf32, #tpu.memory_space<vmem>>, vector<16x16x64xf32>
    %66 = vector.shape_cast %65 : vector<16x16x64xf32> to vector<256x64xf32>
    %67 = arith.truncf %66 : vector<256x64xf32> to vector<256x64xbf16>
    %c0_70 = arith.constant 0 : index
    %c0_71 = arith.constant 0 : index
    %68 = vector.load %arg10[%c0_70, %c0_71] : memref<256x576xbf16, #tpu.memory_space<vmem>>, vector<256x64xbf16>
    tpu.vector_store %arg10[%c0_70, %c0_71], %67 {strides = array<i32>} : memref<256x576xbf16, #tpu.memory_space<vmem>>, vector<256x64xbf16>,
    %c0_72 = arith.constant 0 : index
    %c8_73 = arith.constant 8 : index
    %c0_74 = arith.constant 0 : index
    %69 = vector.load %arg9[%c0_72, %c8_73, %c0_74] : memref<18x32x64xf32, #tpu.memory_space<vmem>>, vector<16x16x64xf32>
    %70 = vector.shape_cast %69 : vector<16x16x64xf32> to vector<256x64xf32>
    %71 = arith.truncf %70 : vector<256x64xf32> to vector<256x64xbf16>
    %c0_75 = arith.constant 0 : index
    %c64_76 = arith.constant 64 : index
    %72 = vector.load %arg10[%c0_75, %c64_76] : memref<256x576xbf16, #tpu.memory_space<vmem>>, vector<256x64xbf16>
    tpu.vector_store %arg10[%c0_75, %c64_76], %71 {strides = array<i32>} : memref<256x576xbf16, #tpu.memory_space<vmem>>, vector<256x64xbf16>,
    %c0_77 = arith.constant 0 : index
    %c9_78 = arith.constant 9 : index
    %c0_79 = arith.constant 0 : index
    %73 = vector.load %arg9[%c0_77, %c9_78, %c0_79] : memref<18x32x64xf32, #tpu.memory_space<vmem>>, vector<16x16x64xf32>
    %74 = vector.shape_cast %73 : vector<16x16x64xf32> to vector<256x64xf32>
    %75 = arith.truncf %74 : vector<256x64xf32> to vector<256x64xbf16>
    %c0_80 = arith.constant 0 : index
    %c128_81 = arith.constant 128 : index
    %76 = vector.load %arg10[%c0_80, %c128_81] : memref<256x576xbf16, #tpu.memory_space<vmem>>, vector<256x64xbf16>
    tpu.vector_store %arg10[%c0_80, %c128_81], %75 {strides = array<i32>} : memref<256x576xbf16, #tpu.memory_space<vmem>>, vector<256x64xbf16>,
    %c1_82 = arith.constant 1 : index
    %c7_83 = arith.constant 7 : index
    %c0_84 = arith.constant 0 : index
    %77 = vector.load %arg9[%c1_82, %c7_83, %c0_84] : memref<18x32x64xf32, #tpu.memory_space<vmem>>, vector<16x16x64xf32>
    %78 = vector.shape_cast %77 : vector<16x16x64xf32> to vector<256x64xf32>
    %79 = arith.truncf %78 : vector<256x64xf32> to vector<256x64xbf16>
    %c0_85 = arith.constant 0 : index
    %c192_86 = arith.constant 192 : index
    %80 = vector.load %arg10[%c0_85, %c192_86] : memref<256x576xbf16, #tpu.memory_space<vmem>>, vector<256x64xbf16>
    tpu.vector_store %arg10[%c0_85, %c192_86], %79 {strides = array<i32>} : memref<256x576xbf16, #tpu.memory_space<vmem>>, vector<256x64xbf16>,
    %c1_87 = arith.constant 1 : index
    %c8_88 = arith.constant 8 : index
    %c0_89 = arith.constant 0 : index
    %81 = vector.load %arg9[%c1_87, %c8_88, %c0_89] : memref<18x32x64xf32, #tpu.memory_space<vmem>>, vector<16x16x64xf32>
    %82 = vector.shape_cast %81 : vector<16x16x64xf32> to vector<256x64xf32>
    %83 = arith.truncf %82 : vector<256x64xf32> to vector<256x64xbf16>
    %c0_90 = arith.constant 0 : index
    %c256_91 = arith.constant 256 : index
    %84 = vector.load %arg10[%c0_90, %c256_91] : memref<256x576xbf16, #tpu.memory_space<vmem>>, vector<256x64xbf16>
    tpu.vector_store %arg10[%c0_90, %c256_91], %83 {strides = array<i32>} : memref<256x576xbf16, #tpu.memory_space<vmem>>, vector<256x64xbf16>,
    %c1_92 = arith.constant 1 : index
    %c9_93 = arith.constant 9 : index
    %c0_94 = arith.constant 0 : index
    %85 = vector.load %arg9[%c1_92, %c9_93, %c0_94] : memref<18x32x64xf32, #tpu.memory_space<vmem>>, vector<16x16x64xf32>
    %86 = vector.shape_cast %85 : vector<16x16x64xf32> to vector<256x64xf32>
    %87 = arith.truncf %86 : vector<256x64xf32> to vector<256x64xbf16>
    %c0_95 = arith.constant 0 : index
    %c320_96 = arith.constant 320 : index
    %88 = vector.load %arg10[%c0_95, %c320_96] : memref<256x576xbf16, #tpu.memory_space<vmem>>, vector<256x64xbf16>
    tpu.vector_store %arg10[%c0_95, %c320_96], %87 {strides = array<i32>} : memref<256x576xbf16, #tpu.memory_space<vmem>>, vector<256x64xbf16>,
    %c2_97 = arith.constant 2 : index
    %c7_98 = arith.constant 7 : index
    %c0_99 = arith.constant 0 : index
    %89 = vector.load %arg9[%c2_97, %c7_98, %c0_99] : memref<18x32x64xf32, #tpu.memory_space<vmem>>, vector<16x16x64xf32>
    %90 = vector.shape_cast %89 : vector<16x16x64xf32> to vector<256x64xf32>
    %91 = arith.truncf %90 : vector<256x64xf32> to vector<256x64xbf16>
    %c0_100 = arith.constant 0 : index
    %c384_101 = arith.constant 384 : index
    %92 = vector.load %arg10[%c0_100, %c384_101] : memref<256x576xbf16, #tpu.memory_space<vmem>>, vector<256x64xbf16>
    tpu.vector_store %arg10[%c0_100, %c384_101], %91 {strides = array<i32>} : memref<256x576xbf16, #tpu.memory_space<vmem>>, vector<256x64xbf16>,
    %c2_102 = arith.constant 2 : index
    %c8_103 = arith.constant 8 : index
    %c0_104 = arith.constant 0 : index
    %93 = vector.load %arg9[%c2_102, %c8_103, %c0_104] : memref<18x32x64xf32, #tpu.memory_space<vmem>>, vector<16x16x64xf32>
    %94 = vector.shape_cast %93 : vector<16x16x64xf32> to vector<256x64xf32>
    %95 = arith.truncf %94 : vector<256x64xf32> to vector<256x64xbf16>
    %c0_105 = arith.constant 0 : index
    %c448_106 = arith.constant 448 : index
    %96 = vector.load %arg10[%c0_105, %c448_106] : memref<256x576xbf16, #tpu.memory_space<vmem>>, vector<256x64xbf16>
    tpu.vector_store %arg10[%c0_105, %c448_106], %95 {strides = array<i32>} : memref<256x576xbf16, #tpu.memory_space<vmem>>, vector<256x64xbf16>,
    %c2_107 = arith.constant 2 : index
    %c9_108 = arith.constant 9 : index
    %c0_109 = arith.constant 0 : index
    %97 = vector.load %arg9[%c2_107, %c9_108, %c0_109] : memref<18x32x64xf32, #tpu.memory_space<vmem>>, vector<16x16x64xf32>
    %98 = vector.shape_cast %97 : vector<16x16x64xf32> to vector<256x64xf32>
    %99 = arith.truncf %98 : vector<256x64xf32> to vector<256x64xbf16>
    %c0_110 = arith.constant 0 : index
    %c512_111 = arith.constant 512 : index
    %100 = vector.load %arg10[%c0_110, %c512_111] : memref<256x576xbf16, #tpu.memory_space<vmem>>, vector<256x64xbf16>
    tpu.vector_store %arg10[%c0_110, %c512_111], %99 {strides = array<i32>} : memref<256x576xbf16, #tpu.memory_space<vmem>>, vector<256x64xbf16>,
    %c0_112 = arith.constant 0 : index
    %c0_113 = arith.constant 0 : index
    %101 = vector.load %arg10[%c0_112, %c0_113] : memref<256x576xbf16, #tpu.memory_space<vmem>>, vector<256x576xbf16>
    %c0_114 = arith.constant 0 : index
    %c0_115 = arith.constant 0 : index
    %102 = vector.load %arg6[%c0_114, %c0_115] : memref<576x128xbf16, #tpu.memory_space<vmem>>, vector<576x128xbf16>
    %cst_116 = arith.constant dense<0.000000e+00> : vector<256x128xf32>
    %103 = tpu.matmul %101, %102, %cst_116 {dimension_numbers = #tpu.dot_dimension_numbers<[1], [0], [0], [1], [0, 0, 1, 1], [], []>} : vector<256x576xbf16>, vector<576x128xbf16>, vector<256x128xf32> -> vector<256x128xf32>
    %104 = tpu.iota {dimensions = array<i32: 0>} : vector<8x128xi32>
    %105 = tpu.iota {dimensions = array<i32: 1>} : vector<8x128xi32>
    %106 = arith.cmpi eq, %104, %105 : vector<8x128xi32>
    %c1_i32 = arith.constant 1 : i32
    %107 = vector.broadcast %c1_i32 : i32 to vector<8x128xi32>
    %108 = arith.cmpi slt, %105, %107 : vector<8x128xi32>
    %109 = arith.andi %106, %108 : vector<8x128xi1>
    %110 = arith.extui %109 : vector<8x128xi1> to vector<8x128xi32>
    %111 = arith.sitofp %110 : vector<8x128xi32> to vector<8x128xf32>
    %cst_117 = arith.constant dense<0.000000e+00> : vector<8x256xf32>
    %112 = tpu.matmul %111, %103, %cst_117 {dimension_numbers = #tpu.dot_dimension_numbers<[1], [1], [0], [0], [0, 0, 1, 0], [], []>} : vector<8x128xf32>, vector<256x128xf32>, vector<8x256xf32> -> vector<8x256xf32>
    %113 = vector.extract_strided_slice %112 {offsets = [0, 0], sizes = [1, 256], strides = [1, 1]} : vector<8x256xf32> to vector<1x256xf32>
    %c0_118 = arith.constant 0 : index
    %c0_119 = arith.constant 0 : index
    %114 = vector.load %arg7[%c0_118, %c0_119] : memref<1x1xf32, #tpu.memory_space<vmem>>, vector<1x1xf32>
    %115 = vector.broadcast %114 : vector<1x1xf32> to vector<1x256xf32>
    %116 = arith.addf %113, %115 : vector<1x256xf32>
    %117 = math.absf %116 : vector<1x256xf32>
    %cst_120 = arith.constant 0.000000e+00 : f32
    %118 = vector.broadcast %cst_120 : f32 to vector<1x256xf32>
    %119 = arith.subf %118, %117 : vector<1x256xf32>
    %120 = math.exp %119 : vector<1x256xf32>
    %cst_121 = arith.constant 1.000000e+00 : f32
    %121 = vector.broadcast %cst_121 : f32 to vector<1x256xf32>
    %122 = arith.addf %121, %120 : vector<1x256xf32>
    %cst_122 = arith.constant 1.000000e+00 : f32
    %123 = vector.broadcast %cst_122 : f32 to vector<1x256xf32>
    %124 = arith.divf %123, %122 : vector<1x256xf32>
    %cst_123 = arith.constant 0.000000e+00 : f32
    %125 = vector.broadcast %cst_123 : f32 to vector<1x256xf32>
    %126 = arith.cmpf oge, %116, %125 : vector<1x256xf32>
    %127 = arith.mulf %120, %124 : vector<1x256xf32>
    %128 = arith.select %126, %124, %127 : vector<1x256xi1>, vector<1x256xf32>
    %129 = vector.shape_cast %128 : vector<1x256xf32> to vector<1x1x256xf32>
    %c0_124 = arith.constant 0 : index
    %c0_125 = arith.constant 0 : index
    %c0_126 = arith.constant 0 : index
    %130 = vector.load %arg8[%c0_124, %c0_125, %c0_126] : memref<1x1x256xf32, #tpu.memory_space<vmem>>, vector<1x1x256xf32>
    tpu.vector_store %arg8[%c0_124, %c0_125, %c0_126], %129 {strides = array<i32>} : memref<1x1x256xf32, #tpu.memory_space<vmem>>, vector<1x1x256xf32>,
    return
  }
  func.func @transform_0(%arg0: i32) -> (i32, i32, i32) {
    %c0_i32 = arith.constant 0 : i32
    %c0_i32_0 = arith.constant 0 : i32
    %c0_i32_1 = arith.constant 0 : i32
    return %arg0, %c0_i32, %c0_i32_0 : i32, i32, i32
  }
  func.func @transform_1(%arg0: i32) -> (i32, i32) {
    %c0_i32 = arith.constant 0 : i32
    %c0_i32_0 = arith.constant 0 : i32
    %c0_i32_1 = arith.constant 0 : i32
    return %c0_i32, %c0_i32_0 : i32, i32
  }
  func.func @transform_2(%arg0: i32) -> (i32, i32) {
    %c0_i32 = arith.constant 0 : i32
    %c0_i32_0 = arith.constant 0 : i32
    %c0_i32_1 = arith.constant 0 : i32
    return %c0_i32, %c0_i32_0 : i32, i32
  }
  func.func @transform_3(%arg0: i32) -> (i32, i32) {
    %c0_i32 = arith.constant 0 : i32
    %c0_i32_0 = arith.constant 0 : i32
    %c0_i32_1 = arith.constant 0 : i32
    return %c0_i32, %c0_i32_0 : i32, i32
  }
  func.func @transform_4(%arg0: i32) -> (i32, i32) {
    %c0_i32 = arith.constant 0 : i32
    %c0_i32_0 = arith.constant 0 : i32
    %c0_i32_1 = arith.constant 0 : i32
    return %c0_i32, %c0_i32_0 : i32, i32
  }
  func.func @transform_5(%arg0: i32) -> (i32, i32) {
    %c0_i32 = arith.constant 0 : i32
    %c0_i32_0 = arith.constant 0 : i32
    %c0_i32_1 = arith.constant 0 : i32
    return %c0_i32, %c0_i32_0 : i32, i32
  }
  func.func @transform_6(%arg0: i32) -> (i32, i32) {
    %c0_i32 = arith.constant 0 : i32
    %c0_i32_0 = arith.constant 0 : i32
    %c0_i32_1 = arith.constant 0 : i32
    return %c0_i32, %c0_i32_0 : i32, i32
  }
  func.func @transform_7(%arg0: i32) -> (i32, i32, i32) {
    %c0_i32 = arith.constant 0 : i32
    %c0_i32_0 = arith.constant 0 : i32
    %c0_i32_1 = arith.constant 0 : i32
    return %arg0, %c0_i32, %c0_i32_0 : i32, i32, i32
  }
}

</mosaic_0001>

<llo_original>
// kernel: unet_forward.1
$region0: #{unet_forward.1}
  #allocation0 [shape = 'u32[]', space=smem, size = 0x4, offset = 0x4, fixed_abs, tag = 'smem constant byte address 0x4 - core index']
  #allocation1 [shape = 'u32[144,128]{1,0:T(1,128)}', space=vmem, size = 0x12000, scoped, tag = 'internal scratch']
  #allocation2 [shape = 'f32[18,32,64]{2,1,0:T(8,128)}', space=vmem, size = 0x48000, scoped, tag = 'scratch operand']
  #allocation3 [shape = 'bf16[256,576]{1,0:T(16,128)(2,1)}', space=vmem, size = 0x50000, scoped, tag = 'scratch operand']
  #allocation4 [shape = 'f32[1,1]{1,0:T(1,128)S(1)}', space=vmem, size = 0x200, scoped, tag = 'scoped memory for unet_forward.1']
  %s0 = inlined_call_operand.vmem [shape: bf16[2,256,32], index: 0, kind: input, shape index: {}]
  %s1 = inlined_call_operand.vmem [shape: bf16[32,64], index: 1, kind: input, shape index: {}]
  %s2 = inlined_call_operand.vmem [shape: f32[1,64], index: 2, kind: input, shape index: {}]
  %s3 = inlined_call_operand.vmem [shape: bf16[576,64], index: 3, kind: input, shape index: {}]
  %s4 = inlined_call_operand.vmem [shape: f32[1,64], index: 4, kind: input, shape index: {}]
  %s5 = inlined_call_operand.vmem [shape: bf16[576,128], index: 5, kind: input, shape index: {}]
  %s6 = inlined_call_operand.<no memory space> [shape: f32[1,1], index: 6, kind: input, shape index: {}]
  %s7 = inlined_call_operand.vmem [shape: f32[2,1,256], index: 7, kind: output, shape index: {}]
  %s8 = sld [smem:[#allocation0]]
  $region61: #{unet_forward.1} parent=0
    _
  %s10 = ssub.s32 1, %s8
  %s11 = scalar_select 0, %s10, %s8
  %v12 = vstv %s6
  %13 = vst [vmem:[#allocation4] sm:$0x1] %v12
  loop: start=0, step=1, limit=4
  $region2: #{unet_forward.1} parent=0 // loop_pre_header
    _
  $region3: #{unet_forward.1} parent=0 // loop_header
    %s15 = sphi 0, %s19
    %p16 = scmp.ge.s32.totalorder %s15, 4
    %s25 = sphi 0, %s27
    %s28 = sphi 0, %s25
    %s29 = sphi 0, %s28
    %s45 = sphi 0, %s29
    %s49 = sphi 0, %s49
    %s51 = sphi 0, %s49
    %s52 = sphi 0, %s51
    %s66 = sphi 0, %s52
    %s70 = sphi 0, %s70
    %s72 = sphi 0, %s70
    %s73 = sphi 0, %s72
    %s87 = sphi 0, %s73
    %s91 = sphi 0, %s91
    %s93 = sphi 0, %s91
    %s94 = sphi 0, %s93
    %s108 = sphi 0, %s94
    %s112 = sphi 0, %s112
    %s114 = sphi 0, %s112
    %s115 = sphi 0, %s114
    %s129 = sphi 0, %s115
    %s133 = sphi 0, %s133
    %s135 = sphi 0, %s133
    %s136 = sphi 0, %s135
    %s150 = sphi 0, %s136
    %s154 = sphi 0, %s154
    %s156 = sphi 0, %s154
    %s157 = sphi 0, %s156
    %s171 = sphi 0, %s157
    %s177 = sphi 0, %s179
    %s180 = sphi 0, %s177
    %s181 = sphi 0, %s180
    %s197 = sphi 0, %s181
  $region4: #{unet_forward.1} parent=0 // loop_header_branch
    %18 = sbr.rel (%p16) target = $region8
  $region5: #{unet_forward.1} parent=0 // loop_body
    %s20 = ssub.s32 %s15, 1
    %s21 = ssub.s32 %s15, 2
    %s22 = sadd.s32 %s15, 1
    %s23 = ssub.s32 %s15, %s22
    %p24 = scmp.eq.s32.totalorder %s23, 0
    %s26 = sadd.s32 %s25, 1
    %s27 = scalar_select %p24, %s25, %s26
    %p30 = pneg %p24
    %p31 = scmp.eq.s32.totalorder %s15, 1
    %p32 = por %p30, %p31
    %p33 = scmp.ne.s32.totalorder %s25, %s28
    %p34 = scmp.eq.s32.totalorder %s15, 0
    %p35 = por %p33, %p34
    %p36 = scmp.ne.s32.totalorder %s25, %s28
    %p37 = scmp.eq.s32.totalorder %s20, 1
    %p38 = por %p36, %p37
    %p39 = scmp.ne.s32.totalorder %s28, %s29
    %p40 = scmp.eq.s32.totalorder %s20, 0
    %p41 = por %p39, %p40
    %p42 = scmp.ne.s32.totalorder %s28, %s29
    %p43 = scmp.eq.s32.totalorder %s21, 1
    %p44 = por %p42, %p43
    %p46 = scmp.ne.s32.totalorder %s29, %s45
    %p47 = scmp.eq.s32.totalorder %s21, 0
    %p48 = por %p46, %p47
    %s50 = sadd.s32 %s49, 1
    %p53 = scmp.eq.s32.totalorder %s15, 1
    %p54 = scmp.ne.s32.totalorder %s49, %s51
    %p55 = scmp.eq.s32.totalorder %s15, 0
    %p56 = por %p54, %p55
    %p57 = scmp.ne.s32.totalorder %s49, %s51
    %p58 = scmp.eq.s32.totalorder %s20, 1
    %p59 = por %p57, %p58
    %p60 = scmp.ne.s32.totalorder %s51, %s52
    %p61 = scmp.eq.s32.totalorder %s20, 0
    %p62 = por %p60, %p61
    %p63 = scmp.ne.s32.totalorder %s51, %s52
    %p64 = scmp.eq.s32.totalorder %s21, 1
    %p65 = por %p63, %p64
    %p67 = scmp.ne.s32.totalorder %s52, %s66
    %p68 = scmp.eq.s32.totalorder %s21, 0
    %p69 = por %p67, %p68
    %s71 = sadd.s32 %s70, 1
    %p74 = scmp.eq.s32.totalorder %s15, 1
    %p75 = scmp.ne.s32.totalorder %s70, %s72
    %p76 = scmp.eq.s32.totalorder %s15, 0
    %p77 = por %p75, %p76
    %p78 = scmp.ne.s32.totalorder %s70, %s72
    %p79 = scmp.eq.s32.totalorder %s20, 1
    %p80 = por %p78, %p79
    %p81 = scmp.ne.s32.totalorder %s72, %s73
    %p82 = scmp.eq.s32.totalorder %s20, 0
    %p83 = por %p81, %p82
    %p84 = scmp.ne.s32.totalorder %s72, %s73
    %p85 = scmp.eq.s32.totalorder %s21, 1
    %p86 = por %p84, %p85
    %p88 = scmp.ne.s32.totalorder %s73, %s87
    %p89 = scmp.eq.s32.totalorder %s21, 0
    %p90 = por %p88, %p89
    %s92 = sadd.s32 %s91, 1
    %p95 = scmp.eq.s32.totalorder %s15, 1
    %p96 = scmp.ne.s32.totalorder %s91, %s93
    %p97 = scmp.eq.s32.totalorder %s15, 0
    %p98 = por %p96, %p97
    %p99 = scmp.ne.s32.totalorder %s91, %s93
    %p100 = scmp.eq.s32.totalorder %s20, 1
    %p101 = por %p99, %p100
    %p102 = scmp.ne.s32.totalorder %s93, %s94
    %p103 = scmp.eq.s32.totalorder %s20, 0
    %p104 = por %p102, %p103
    %p105 = scmp.ne.s32.totalorder %s93, %s94
    %p106 = scmp.eq.s32.totalorder %s21, 1
    %p107 = por %p105, %p106
    %p109 = scmp.ne.s32.totalorder %s94, %s108
    %p110 = scmp.eq.s32.totalorder %s21, 0
    %p111 = por %p109, %p110
    %s113 = sadd.s32 %s112, 1
    %p116 = scmp.eq.s32.totalorder %s15, 1
    %p117 = scmp.ne.s32.totalorder %s112, %s114
    %p118 = scmp.eq.s32.totalorder %s15, 0
    %p119 = por %p117, %p118
    %p120 = scmp.ne.s32.totalorder %s112, %s114
    %p121 = scmp.eq.s32.totalorder %s20, 1
    %p122 = por %p120, %p121
    %p123 = scmp.ne.s32.totalorder %s114, %s115
    %p124 = scmp.eq.s32.totalorder %s20, 0
    %p125 = por %p123, %p124
    %p126 = scmp.ne.s32.totalorder %s114, %s115
    %p127 = scmp.eq.s32.totalorder %s21, 1
    %p128 = por %p126, %p127
    %p130 = scmp.ne.s32.totalorder %s115, %s129
    %p131 = scmp.eq.s32.totalorder %s21, 0
    %p132 = por %p130, %p131
    %s134 = sadd.s32 %s133, 1
    %p137 = scmp.eq.s32.totalorder %s15, 1
    %p138 = scmp.ne.s32.totalorder %s133, %s135
    %p139 = scmp.eq.s32.totalorder %s15, 0
    %p140 = por %p138, %p139
    %p141 = scmp.ne.s32.totalorder %s133, %s135
    %p142 = scmp.eq.s32.totalorder %s20, 1
    %p143 = por %p141, %p142
    %p144 = scmp.ne.s32.totalorder %s135, %s136
    %p145 = scmp.eq.s32.totalorder %s20, 0
    %p146 = por %p144, %p145
    %p147 = scmp.ne.s32.totalorder %s135, %s136
    %p148 = scmp.eq.s32.totalorder %s21, 1
    %p149 = por %p147, %p148
    %p151 = scmp.ne.s32.totalorder %s136, %s150
    %p152 = scmp.eq.s32.totalorder %s21, 0
    %p153 = por %p151, %p152
    %s155 = sadd.s32 %s154, 1
    %p158 = scmp.eq.s32.totalorder %s15, 1
    %p159 = scmp.ne.s32.totalorder %s154, %s156
    %p160 = scmp.eq.s32.totalorder %s15, 0
    %p161 = por %p159, %p160
    %p162 = scmp.ne.s32.totalorder %s154, %s156
    %p163 = scmp.eq.s32.totalorder %s20, 1
    %p164 = por %p162, %p163
    %p165 = scmp.ne.s32.totalorder %s156, %s157
    %p166 = scmp.eq.s32.totalorder %s20, 0
    %p167 = por %p165, %p166
    %p168 = scmp.ne.s32.totalorder %s156, %s157
    %p169 = scmp.eq.s32.totalorder %s21, 1
    %p170 = por %p168, %p169
    %p172 = scmp.ne.s32.totalorder %s157, %s171
    %p173 = scmp.eq.s32.totalorder %s21, 0
    %p174 = por %p172, %p173
    %s175 = ssub.s32 %s15, %s22
    %p176 = scmp.eq.s32.totalorder %s175, 0
    %s178 = sadd.s32 %s177, 1
    %s179 = scalar_select %p176, %s177, %s178
    %p182 = pneg %p176
    %p183 = scmp.eq.s32.totalorder %s15, 1
    %p184 = por %p182, %p183
    %p185 = scmp.ne.s32.totalorder %s177, %s180
    %p186 = scmp.eq.s32.totalorder %s15, 0
    %p187 = por %p185, %p186
    %p188 = scmp.ne.s32.totalorder %s177, %s180
    %p189 = scmp.eq.s32.totalorder %s20, 1
    %p190 = por %p188, %p189
    %p191 = scmp.ne.s32.totalorder %s180, %s181
    %p192 = scmp.eq.s32.totalorder %s20, 0
    %p193 = por %p191, %p192
    %p194 = scmp.ne.s32.totalorder %s180, %s181
    %p195 = scmp.eq.s32.totalorder %s21, 1
    %p196 = por %p194, %p195
    %p198 = scmp.ne.s32.totalorder %s181, %s197
    %p199 = scmp.eq.s32.totalorder %s21, 0
    %p200 = por %p198, %p199
    %p201 = scmp.le.s32.totalorder 1, %s15
    %p202 = scmp.lt.s32.totalorder %s15, 3
    %p203 = pnand %p201, %p202
    %p204 = pneg %p203
    // Predicated region
    $region9: #{unet_forward.1} parent=5 // pred_check
      _
    $region10: #{unet_forward.1} parent=5 // pred_check_branch
      %206 = sbr.rel (%p203) target = $region12
    $region11: #{unet_forward.1} parent=5 // pred_region
      %s207 = ssub.s32 %s15, 1
      // Predicated region
      $region13: #{unet_forward.1} parent=11 // pred_check
        %p208 = pneg %p62
      $region14: #{unet_forward.1} parent=11 // pred_check_branch
        %210 = sbr.rel (%p208) target = $region16
      $region15: #{unet_forward.1} parent=11 // pred_region
        _
      $region16: #{unet_forward.1} parent=11 // pred_fallthru
        _
      // Predicated region
      $region17: #{unet_forward.1} parent=11 // pred_check
        %p211 = pneg %p83
      $region18: #{unet_forward.1} parent=11 // pred_check_branch
        %213 = sbr.rel (%p211) target = $region20
      $region19: #{unet_forward.1} parent=11 // pred_region
        _
      $region20: #{unet_forward.1} parent=11 // pred_fallthru
        _
      // Predicated region
      $region21: #{unet_forward.1} parent=11 // pred_check
        %p214 = pneg %p104
      $region22: #{unet_forward.1} parent=11 // pred_check_branch
        %216 = sbr.rel (%p214) target = $region24
      $region23: #{unet_forward.1} parent=11 // pred_region
        _
      $region24: #{unet_forward.1} parent=11 // pred_fallthru
        _
      // Predicated region
      $region25: #{unet_forward.1} parent=11 // pred_check
        %p217 = pneg %p125
      $region26: #{unet_forward.1} parent=11 // pred_check_branch
        %219 = sbr.rel (%p217) target = $region28
      $region27: #{unet_forward.1} parent=11 // pred_region
        _
      $region28: #{unet_forward.1} parent=11 // pred_fallthru
        _
      // Predicated region
      $region29: #{unet_forward.1} parent=11 // pred_check
        %p220 = pneg %p146
      $region30: #{unet_forward.1} parent=11 // pred_check_branch
        %222 = sbr.rel (%p220) target = $region32
      $region31: #{unet_forward.1} parent=11 // pred_region
        _
      $region32: #{unet_forward.1} parent=11 // pred_fallthru
        _
      // Predicated region
      $region33: #{unet_forward.1} parent=11 // pred_check
        %p223 = pneg %p167
      $region34: #{unet_forward.1} parent=11 // pred_check_branch
        %225 = sbr.rel (%p223) target = $region36
      $region35: #{unet_forward.1} parent=11 // pred_region
        _
      $region36: #{unet_forward.1} parent=11 // pred_fallthru
        _
    $region12: #{unet_forward.1} parent=5 // pred_fallthru
      _
    %p226 = scmp.lt.s32.totalorder %s15, 2
    // Predicated region
    $region37: #{unet_forward.1} parent=5 // pred_check
      %p227 = pneg %p226
    $region38: #{unet_forward.1} parent=5 // pred_check_branch
      %229 = sbr.rel (%p227) target = $region40
    $region39: #{unet_forward.1} parent=5 // pred_region
      // Predicated region
      $region41: #{unet_forward.1} parent=39 // pred_check
        %p230 = pneg %p35
      $region42: #{unet_forward.1} parent=39 // pred_check_branch
        %232 = sbr.rel (%p230) target = $region44
      $region43: #{unet_forward.1} parent=39 // pred_region
        %p233 = scmp.lt.s32.totalorder %s15, 1
        %s234 = scalar_select %p233, %s15, 1
        %s235 = smul.addr %s234, 32
        %s236 = smul.addr %s235, 4
        %s237 = scalar_lea.vmem %s0, %s236
      $region44: #{unet_forward.1} parent=39 // pred_fallthru
        _
    $region40: #{unet_forward.1} parent=5 // pred_fallthru
      _
    %p238 = scmp.le.s32.totalorder 1, %s15
    %p239 = scmp.lt.s32.totalorder %s15, 3
    %p240 = pnand %p238, %p239
    %p241 = pneg %p240
    // Predicated region
    $region45: #{unet_forward.1} parent=5 // pred_check
      _
    $region46: #{unet_forward.1} parent=5 // pred_check_branch
      %243 = sbr.rel (%p240) target = $region48
    $region47: #{unet_forward.1} parent=5 // pred_region
      %s244 = ssub.s32 %s15, 1
      %p245 = scmp.lt.s32.totalorder %s20, 1
      %s246 = scalar_select %p245, %s20, 1
      %s247 = smul.addr %s246, 32
      %s248 = smul.addr %s247, 4
      %s249 = scalar_lea.vmem %s0, %s248
      %p250 = pneg %p41
      %p251 = pneg %p38
      %p252 = pneg %p62
      %p253 = pneg %p59
      %p254 = pneg %p83
      %p255 = pneg %p80
      %p256 = pneg %p104
      %p257 = pneg %p101
      %p258 = pneg %p125
      %p259 = pneg %p122
      %p260 = pneg %p146
      %p261 = pneg %p143
      %p262 = pneg %p167
      %p263 = pneg %p164
      %p264 = pneg %p193
      %p265 = pneg %p190
      %p266 = scmp.lt.s32.totalorder %s20, 1
      %s267 = scalar_select %p266, %s20, 1
      %s268 = smul.addr %s267, 2
      %s269 = scalar_lea.vmem %s7, %s268
      %p270 = scmp.lt.s32.totalorder %s20, 1
      %s271 = scalar_select %p270, %s20, 1
      %s272 = smul.addr %s271, 32
      %s273 = smul.addr %s272, 4
      %s274 = scalar_lea.vmem %s0, %s273
      %p275 = scmp.lt.s32.totalorder %s20, 1
      %s276 = scalar_select %p275, %s20, 1
      %s277 = smul.addr %s276, 2
      %s278 = scalar_lea.vmem %s7, %s277
      %vm280 = vcmask 523264
      %281 = vst.msk [vmem:[#allocation2] sm:$0xff] %vm280, 0.0
      %282 = vst.msk [vmem:[#allocation2 + $0x8] sm:$0xff] %vm280, 0.0
      %283 = vst.msk [vmem:[#allocation2 + $0x10] sm:$0xff] %vm280, 0.0
      %284 = vst.msk [vmem:[#allocation2 + $0x18] sm:$0xff] %vm280, 0.0
      %s285 = scalar_lea.vmem [#allocation2], 544
      %286 = vst.msk [vmem:[%s285] sm:$0xff] %vm280, 0.0
      %287 = vst.msk [vmem:[%s285 + $0x8] sm:$0xff] %vm280, 0.0
      %288 = vst.msk [vmem:[%s285 + $0x10] sm:$0xff] %vm280, 0.0
      %289 = vst.msk [vmem:[%s285 + $0x18] sm:$0xff] %vm280, 0.0
      %vm290 = vcmask 516096
      %291 = vst.msk [vmem:[#allocation2 + $0x7] sm:$0x1] %vm290, 0.0
      %292 = vst.msk [vmem:[#allocation2 + $0x27] sm:$0x1] %vm290, 0.0
      %293 = vst.msk [vmem:[#allocation2 + $0x47] sm:$0x1] %vm290, 0.0
      %294 = vst.msk [vmem:[#allocation2 + $0x67] sm:$0x1] %vm290, 0.0
      %295 = vst.msk [vmem:[#allocation2 + $0x87] sm:$0x1] %vm290, 0.0
      %296 = vst.msk [vmem:[#allocation2 + $0xa7] sm:$0x1] %vm290, 0.0
      %297 = vst.msk [vmem:[#allocation2 + $0xc7] sm:$0x1] %vm290, 0.0
      %298 = vst.msk [vmem:[#allocation2 + $0xe7] sm:$0x1] %vm290, 0.0
      %299 = vst.msk [vmem:[#allocation2 + $0x107] sm:$0x1] %vm290, 0.0
      %300 = vst.msk [vmem:[#allocation2 + $0x127] sm:$0x1] %vm290, 0.0
      %301 = vst.msk [vmem:[#allocation2 + $0x147] sm:$0x1] %vm290, 0.0
      %302 = vst.msk [vmem:[#allocation2 + $0x167] sm:$0x1] %vm290, 0.0
      %303 = vst.msk [vmem:[#allocation2 + $0x187] sm:$0x1] %vm290, 0.0
      %304 = vst.msk [vmem:[#allocation2 + $0x1a7] sm:$0x1] %vm290, 0.0
      %305 = vst.msk [vmem:[#allocation2 + $0x1c7] sm:$0x1] %vm290, 0.0
      %306 = vst.msk [vmem:[#allocation2 + $0x1e7] sm:$0x1] %vm290, 0.0
      %307 = vst.msk [vmem:[#allocation2 + $0x207] sm:$0x1] %vm290, 0.0
      %308 = vst.msk [vmem:[#allocation2 + $0x227] sm:$0x1] %vm290, 0.0
      %309 = vst.msk [vmem:[#allocation2 + $0x18] sm:$0x1] %vm290, 0.0
      %310 = vst.msk [vmem:[#allocation2 + $0x38] sm:$0x1] %vm290, 0.0
      %311 = vst.msk [vmem:[#allocation2 + $0x58] sm:$0x1] %vm290, 0.0
      %312 = vst.msk [vmem:[#allocation2 + $0x78] sm:$0x1] %vm290, 0.0
      %313 = vst.msk [vmem:[#allocation2 + $0x98] sm:$0x1] %vm290, 0.0
      %314 = vst.msk [vmem:[#allocation2 + $0xb8] sm:$0x1] %vm290, 0.0
      %315 = vst.msk [vmem:[#allocation2 + $0xd8] sm:$0x1] %vm290, 0.0
      %316 = vst.msk [vmem:[#allocation2 + $0xf8] sm:$0x1] %vm290, 0.0
      %317 = vst.msk [vmem:[#allocation2 + $0x118] sm:$0x1] %vm290, 0.0
      %318 = vst.msk [vmem:[#allocation2 + $0x138] sm:$0x1] %vm290, 0.0
      %319 = vst.msk [vmem:[#allocation2 + $0x158] sm:$0x1] %vm290, 0.0
      %320 = vst.msk [vmem:[#allocation2 + $0x178] sm:$0x1] %vm290, 0.0
      %321 = vst.msk [vmem:[#allocation2 + $0x198] sm:$0x1] %vm290, 0.0
      %322 = vst.msk [vmem:[#allocation2 + $0x1b8] sm:$0x1] %vm290, 0.0
      %323 = vst.msk [vmem:[#allocation2 + $0x1d8] sm:$0x1] %vm290, 0.0
      %324 = vst.msk [vmem:[#allocation2 + $0x1f8] sm:$0x1] %vm290, 0.0
      %325 = vst.msk [vmem:[#allocation2 + $0x218] sm:$0x1] %vm290, 0.0
      %326 = vst.msk [vmem:[#allocation2 + $0x238] sm:$0x1] %vm290, 0.0
      %v327 = vld [vmem:[%s274] sm:$0xf]
      %v328 = vld [vmem:[%s274 + $0x4] sm:$0xf]
      %v329 = vld [vmem:[%s274 + $0x8] sm:$0xf]
      %v330 = vld [vmem:[%s274 + $0xc] sm:$0xf]
      %v331 = vld [vmem:[%s274 + $0x10] sm:$0xf]
      %v332 = vld [vmem:[%s274 + $0x14] sm:$0xf]
      %v333 = vld [vmem:[%s274 + $0x18] sm:$0xf]
      %v334 = vld [vmem:[%s274 + $0x1c] sm:$0xf]
      %v335 = vld [vmem:[%s274 + $0x20] sm:$0xf]
      %v336 = vld [vmem:[%s274 + $0x24] sm:$0xf]
      %v337 = vld [vmem:[%s274 + $0x28] sm:$0xf]
      %v338 = vld [vmem:[%s274 + $0x2c] sm:$0xf]
      %v339 = vld [vmem:[%s274 + $0x30] sm:$0xf]
      %v340 = vld [vmem:[%s274 + $0x34] sm:$0xf]
      %v341 = vld [vmem:[%s274 + $0x38] sm:$0xf]
      %v342 = vld [vmem:[%s274 + $0x3c] sm:$0xf]
      %v343 = vld [vmem:[%s274 + $0x40] sm:$0xf]
      %v344 = vld [vmem:[%s274 + $0x44] sm:$0xf]
      %v345 = vld [vmem:[%s274 + $0x48] sm:$0xf]
      %v346 = vld [vmem:[%s274 + $0x4c] sm:$0xf]
      %v347 = vld [vmem:[%s274 + $0x50] sm:$0xf]
      %v348 = vld [vmem:[%s274 + $0x54] sm:$0xf]
      %v349 = vld [vmem:[%s274 + $0x58] sm:$0xf]
      %v350 = vld [vmem:[%s274 + $0x5c] sm:$0xf]
      %v351 = vld [vmem:[%s274 + $0x60] sm:$0xf]
      %v352 = vld [vmem:[%s274 + $0x64] sm:$0xf]
      %v353 = vld [vmem:[%s274 + $0x68] sm:$0xf]
      %v354 = vld [vmem:[%s274 + $0x6c] sm:$0xf]
      %v355 = vld [vmem:[%s274 + $0x70] sm:$0xf]
      %v356 = vld [vmem:[%s274 + $0x74] sm:$0xf]
      %v357 = vld [vmem:[%s274 + $0x78] sm:$0xf]
      %v358 = vld [vmem:[%s274 + $0x7c] sm:$0xf]
      %v359 = vld [vmem:[%s1] sm:$0xf]
      %v360 = vld [vmem:[%s1 + $0x4] sm:$0xf]
      %v361 = vld [vmem:[%s1 + $0x8] sm:$0xf]
      %v362 = vld [vmem:[%s1 + $0xc] sm:$0xf]
      %v363 = vld [vmem:[%s2] sm:$0x1]
      %v365 = vlaneseq
      %v366 = vshrl.u32 %v365, 7
      %v367 = vsub.s32 0, %v366
      %v368 = vrot.slane %v363, %v367
      %v402 = vunpack.c.l.b16 %v327
      %v403 = vunpack.c.l.b16 %v328
      %v404 = vunpack.c.l.b16 %v329
      %v405 = vunpack.c.l.b16 %v330
      %v406 = vunpack.c.l.b16 %v331
      %v407 = vunpack.c.l.b16 %v332
      %v408 = vunpack.c.l.b16 %v333
      %v409 = vunpack.c.l.b16 %v334
      %v410 = vunpack.c.l.b16 %v335
      %v411 = vunpack.c.l.b16 %v336
      %v412 = vunpack.c.l.b16 %v337
      %v413 = vunpack.c.l.b16 %v338
      %v414 = vunpack.c.l.b16 %v339
      %v415 = vunpack.c.l.b16 %v340
      %v416 = vunpack.c.l.b16 %v341
      %v417 = vunpack.c.l.b16 %v342
      %v418 = vunpack.c.l.b16 %v343
      %v419 = vunpack.c.l.b16 %v344
      %v420 = vunpack.c.l.b16 %v345
      %v421 = vunpack.c.l.b16 %v346
      %v422 = vunpack.c.l.b16 %v347
      %v423 = vunpack.c.l.b16 %v348
      %v424 = vunpack.c.l.b16 %v349
      %v425 = vunpack.c.l.b16 %v350
      %v426 = vunpack.c.l.b16 %v351
      %v427 = vunpack.c.l.b16 %v352
      %v428 = vunpack.c.l.b16 %v353
      %v429 = vunpack.c.l.b16 %v354
      %v430 = vunpack.c.l.b16 %v355
      %v431 = vunpack.c.l.b16 %v356
      %v432 = vunpack.c.l.b16 %v357
      %v433 = vunpack.c.l.b16 %v358
      %v434 = vpack.c.b16 %v403, %v402
      %v435 = vpack.c.b16 %v405, %v404
      %v436 = vpack.c.b16 %v407, %v406
      %v437 = vpack.c.b16 %v409, %v408
      %v438 = vpack.c.b16 %v411, %v410
      %v439 = vpack.c.b16 %v413, %v412
      %v440 = vpack.c.b16 %v415, %v414
      %v441 = vpack.c.b16 %v417, %v416
      %v442 = vpack.c.b16 %v419, %v418
      %v443 = vpack.c.b16 %v421, %v420
      %v444 = vpack.c.b16 %v423, %v422
      %v445 = vpack.c.b16 %v425, %v424
      %v446 = vpack.c.b16 %v427, %v426
      %v447 = vpack.c.b16 %v429, %v428
      %v448 = vpack.c.b16 %v431, %v430
      %v449 = vpack.c.b16 %v433, %v432
      %v454 = vunpack.c.l.b16 %v359
      %v455 = vunpack.c.l.b16 %v360
      %v456 = vunpack.c.l.b16 %v361
      %v457 = vunpack.c.l.b16 %v362
      %v458 = vpack.c.b16 %v455, %v454
      %v459 = vpack.c.b16 %v457, %v456
      %vm462 = vcmask 261120
      %v464 = vsel %vm462, %v434, 0
      %v467 = vsel %vm462, %v435, 0
      %v470 = vsel %vm462, %v436, 0
      %v473 = vsel %vm462, %v437, 0
      %v476 = vsel %vm462, %v438, 0
      %v479 = vsel %vm462, %v439, 0
      %v482 = vsel %vm462, %v440, 0
      %v485 = vsel %vm462, %v441, 0
      %v488 = vsel %vm462, %v442, 0
      %v491 = vsel %vm462, %v443, 0
      %v494 = vsel %vm462, %v444, 0
      %v497 = vsel %vm462, %v445, 0
      %v500 = vsel %vm462, %v446, 0
      %v503 = vsel %vm462, %v447, 0
      %v506 = vsel %vm462, %v448, 0
      %v509 = vsel %vm462, %v449, 0
      %511 = vmatprep.subr.bf16.mxu0 0
      %512 = vmatpush1.bf16.msra.mxu0 %v458
      %513 = vmatprep.subr.bf16.mxu0 0
      %514 = vmatpush1.bf16.msra.mxu0 %v459
      %515 = vmatprep.subr.bf16.mxu0 0
      %516 = vmatpush1.bf16.msra.mxu0 0
      %517 = vmatprep.subr.bf16.mxu0 0
      %518 = vmatpush1.bf16.msra.mxu0 0
      %519 = vmatprep.subr.bf16.mxu0 0
      %520 = vmatpush1.bf16.msra.mxu0 0
      %521 = vmatprep.subr.bf16.mxu0 0
      %522 = vmatpush1.bf16.msra.mxu0 0
      %523 = vmatprep.subr.bf16.mxu0 0
      %524 = vmatpush1.bf16.msra.mxu0 0
      %525 = vmatprep.subr.bf16.mxu0 0
      %526 = vmatpush1.bf16.msra.mxu0 0
      %527 = vmatprep.subr.bf16.mxu0 0
      %528 = vmatpush1.bf16.msra.mxu0 0
      %529 = vmatprep.subr.bf16.mxu0 0
      %530 = vmatpush1.bf16.msra.mxu0 0
      %531 = vmatprep.subr.bf16.mxu0 0
      %532 = vmatpush1.bf16.msra.mxu0 0
      %533 = vmatprep.subr.bf16.mxu0 0
      %534 = vmatpush1.bf16.msra.mxu0 0
      %535 = vmatprep.subr.bf16.mxu0 0
      %536 = vmatpush1.bf16.msra.mxu0 0
      %537 = vmatprep.subr.bf16.mxu0 0
      %538 = vmatpush1.bf16.msra.mxu0 0
      %539 = vmatprep.subr.bf16.mxu0 0
      %540 = vmatpush1.bf16.msra.mxu0 0
      %541 = vmatprep.subr.bf16.mxu0 0
      %542 = vmatpush1.bf16.msra.mxu0 0
      %543 = vmatprep.mubr.bf16.mxu0 0
      %544 = vmatmul.mubr.bf16.gmra.mrb[0].mxu0 %v464
      %v545 = vpop.f32.mrb[0].mxu0
      %v546 = vadd.f32 %v368, %v545
      %v547 = vpop.f32.mrb[0].mxu0
      %v548 = vpop.f32.mrb[0].mxu0
      %v549 = vadd.f32 %v368, %v548
      %v550 = vpop.f32.mrb[0].mxu0
      %551 = vmatprep.mubr.bf16.mxu0 0
      %552 = vmatmul.mubr.bf16.gmra.mrb[0].mxu0 %v467
      %v553 = vpop.f32.mrb[0].mxu0
      %v554 = vadd.f32 %v368, %v553
      %v555 = vpop.f32.mrb[0].mxu0
      %v556 = vpop.f32.mrb[0].mxu0
      %v557 = vadd.f32 %v368, %v556
      %v558 = vpop.f32.mrb[0].mxu0
      %559 = vmatprep.mubr.bf16.mxu0 0
      %560 = vmatmul.mubr.bf16.gmra.mrb[0].mxu0 %v470
      %v561 = vpop.f32.mrb[0].mxu0
      %v562 = vadd.f32 %v368, %v561
      %v563 = vpop.f32.mrb[0].mxu0
      %v564 = vpop.f32.mrb[0].mxu0
      %v565 = vadd.f32 %v368, %v564
      %v566 = vpop.f32.mrb[0].mxu0
      %567 = vmatprep.mubr.bf16.mxu0 0
      %568 = vmatmul.mubr.bf16.gmra.mrb[0].mxu0 %v473
      %v569 = vpop.f32.mrb[0].mxu0
      %v570 = vadd.f32 %v368, %v569
      %v571 = vpop.f32.mrb[0].mxu0
      %v572 = vpop.f32.mrb[0].mxu0
      %v573 = vadd.f32 %v368, %v572
      %v574 = vpop.f32.mrb[0].mxu0
      %575 = vmatprep.mubr.bf16.mxu0 0
      %576 = vmatmul.mubr.bf16.gmra.mrb[0].mxu0 %v476
      %v577 = vpop.f32.mrb[0].mxu0
      %v578 = vadd.f32 %v368, %v577
      %v579 = vpop.f32.mrb[0].mxu0
      %v580 = vpop.f32.mrb[0].mxu0
      %v581 = vadd.f32 %v368, %v580
      %v582 = vpop.f32.mrb[0].mxu0
      %583 = vmatprep.mubr.bf16.mxu0 0
      %584 = vmatmul.mubr.bf16.gmra.mrb[0].mxu0 %v479
      %v585 = vpop.f32.mrb[0].mxu0
      %v586 = vadd.f32 %v368, %v585
      %v587 = vpop.f32.mrb[0].mxu0
      %v588 = vpop.f32.mrb[0].mxu0
      %v589 = vadd.f32 %v368, %v588
      %v590 = vpop.f32.mrb[0].mxu0
      %591 = vmatprep.mubr.bf16.mxu0 0
      %592 = vmatmul.mubr.bf16.gmra.mrb[0].mxu0 %v482
      %v593 = vpop.f32.mrb[0].mxu0
      %v594 = vadd.f32 %v368, %v593
      %v595 = vpop.f32.mrb[0].mxu0
      %v596 = vpop.f32.mrb[0].mxu0
      %v597 = vadd.f32 %v368, %v596
      %v598 = vpop.f32.mrb[0].mxu0
      %599 = vmatprep.mubr.bf16.mxu0 0
      %600 = vmatmul.mubr.bf16.gmra.mrb[0].mxu0 %v485
      %v601 = vpop.f32.mrb[0].mxu0
      %v602 = vadd.f32 %v368, %v601
      %v603 = vpop.f32.mrb[0].mxu0
      %v604 = vpop.f32.mrb[0].mxu0
      %v605 = vadd.f32 %v368, %v604
      %v606 = vpop.f32.mrb[0].mxu0
      %607 = vmatprep.mubr.bf16.mxu0 0
      %608 = vmatmul.mubr.bf16.gmra.mrb[0].mxu0 %v488
      %v609 = vpop.f32.mrb[0].mxu0
      %v610 = vadd.f32 %v368, %v609
      %v611 = vpop.f32.mrb[0].mxu0
      %v612 = vpop.f32.mrb[0].mxu0
      %v613 = vadd.f32 %v368, %v612
      %v614 = vpop.f32.mrb[0].mxu0
      %615 = vmatprep.mubr.bf16.mxu0 0
      %616 = vmatmul.mubr.bf16.gmra.mrb[0].mxu0 %v491
      %v617 = vpop.f32.mrb[0].mxu0
      %v618 = vadd.f32 %v368, %v617
      %v619 = vpop.f32.mrb[0].mxu0
      %v620 = vpop.f32.mrb[0].mxu0
      %v621 = vadd.f32 %v368, %v620
      %v622 = vpop.f32.mrb[0].mxu0
      %623 = vmatprep.mubr.bf16.mxu0 0
      %624 = vmatmul.mubr.bf16.gmra.mrb[0].mxu0 %v494
      %v625 = vpop.f32.mrb[0].mxu0
      %v626 = vadd.f32 %v368, %v625
      %v627 = vpop.f32.mrb[0].mxu0
      %v628 = vpop.f32.mrb[0].mxu0
      %v629 = vadd.f32 %v368, %v628
      %v630 = vpop.f32.mrb[0].mxu0
      %631 = vmatprep.mubr.bf16.mxu0 0
      %632 = vmatmul.mubr.bf16.gmra.mrb[0].mxu0 %v497
      %v633 = vpop.f32.mrb[0].mxu0
      %v634 = vadd.f32 %v368, %v633
      %v635 = vpop.f32.mrb[0].mxu0
      %v636 = vpop.f32.mrb[0].mxu0
      %v637 = vadd.f32 %v368, %v636
      %v638 = vpop.f32.mrb[0].mxu0
      %639 = vmatprep.mubr.bf16.mxu0 0
      %640 = vmatmul.mubr.bf16.gmra.mrb[0].mxu0 %v500
      %v641 = vpop.f32.mrb[0].mxu0
      %v642 = vadd.f32 %v368, %v641
      %v643 = vpop.f32.mrb[0].mxu0
      %v644 = vpop.f32.mrb[0].mxu0
      %v645 = vadd.f32 %v368, %v644
      %v646 = vpop.f32.mrb[0].mxu0
      %647 = vmatprep.mubr.bf16.mxu0 0
      %648 = vmatmul.mubr.bf16.gmra.mrb[0].mxu0 %v503
      %v649 = vpop.f32.mrb[0].mxu0
      %v650 = vadd.f32 %v368, %v649
      %v651 = vpop.f32.mrb[0].mxu0
      %v652 = vpop.f32.mrb[0].mxu0
      %v653 = vadd.f32 %v368, %v652
      %v654 = vpop.f32.mrb[0].mxu0
      %655 = vmatprep.mubr.bf16.mxu0 0
      %656 = vmatmul.mubr.bf16.gmra.mrb[0].mxu0 %v506
      %v657 = vpop.f32.mrb[0].mxu0
      %v658 = vadd.f32 %v368, %v657
      %v659 = vpop.f32.mrb[0].mxu0
      %v660 = vpop.f32.mrb[0].mxu0
      %v661 = vadd.f32 %v368, %v660
      %v662 = vpop.f32.mrb[0].mxu0
      %663 = vmatprep.mubr.bf16.mxu0 0
      %664 = vmatmul.mubr.bf16.gmra.mrb[0].mxu0 %v509
      %v665 = vpop.f32.mrb[0].mxu0
      %v666 = vadd.f32 %v368, %v665
      %v667 = vpop.f32.mrb[0].mxu0
      %v668 = vpop.f32.mrb[0].mxu0
      %v669 = vadd.f32 %v368, %v668
      %v670 = vpop.f32.mrb[0].mxu0
      %671 = vdwg.mxu0
      %v672 = vmax.f32 %v546, 0.0
      %v673 = vmax.f32 %v549, 0.0
      %v674 = vmax.f32 %v554, 0.0
      %v675 = vmax.f32 %v557, 0.0
      %v676 = vmax.f32 %v562, 0.0
      %v677 = vmax.f32 %v565, 0.0
      %v678 = vmax.f32 %v570, 0.0
      %v679 = vmax.f32 %v573, 0.0
      %v680 = vmax.f32 %v578, 0.0
      %v681 = vmax.f32 %v581, 0.0
      %v682 = vmax.f32 %v586, 0.0
      %v683 = vmax.f32 %v589, 0.0
      %v684 = vmax.f32 %v594, 0.0
      %v685 = vmax.f32 %v597, 0.0
      %v686 = vmax.f32 %v602, 0.0
      %v687 = vmax.f32 %v605, 0.0
      %v688 = vmax.f32 %v610, 0.0
      %v689 = vmax.f32 %v613, 0.0
      %v690 = vmax.f32 %v618, 0.0
      %v691 = vmax.f32 %v621, 0.0
      %v692 = vmax.f32 %v626, 0.0
      %v693 = vmax.f32 %v629, 0.0
      %v694 = vmax.f32 %v634, 0.0
      %v695 = vmax.f32 %v637, 0.0
      %v696 = vmax.f32 %v642, 0.0
      %v697 = vmax.f32 %v645, 0.0
      %v698 = vmax.f32 %v650, 0.0
      %v699 = vmax.f32 %v653, 0.0
      %v700 = vmax.f32 %v658, 0.0
      %v701 = vmax.f32 %v661, 0.0
      %v702 = vmax.f32 %v666, 0.0
      %v703 = vmax.f32 %v669, 0.0
      %s704 = scalar_lea.vmem [#allocation2], 32
      %705 = vst.msk [vmem:[%s704 + $0x8] sm:$0xff] %vm280, %v672
      %706 = vst.msk [vmem:[%s704 + $0x10] sm:$0xff] %vm280, %v673
      %707 = vst.msk [vmem:[%s704 + $0x28] sm:$0xff] %vm280, %v674
      %708 = vst.msk [vmem:[%s704 + $0x30] sm:$0xff] %vm280, %v675
      %709 = vst.msk [vmem:[%s704 + $0x48] sm:$0xff] %vm280, %v676
      %710 = vst.msk [vmem:[%s704 + $0x50] sm:$0xff] %vm280, %v677
      %711 = vst.msk [vmem:[%s704 + $0x68] sm:$0xff] %vm280, %v678
      %712 = vst.msk [vmem:[%s704 + $0x70] sm:$0xff] %vm280, %v679
      %713 = vst.msk [vmem:[%s704 + $0x88] sm:$0xff] %vm280, %v680
      %714 = vst.msk [vmem:[%s704 + $0x90] sm:$0xff] %vm280, %v681
      %715 = vst.msk [vmem:[%s704 + $0xa8] sm:$0xff] %vm280, %v682
      %716 = vst.msk [vmem:[%s704 + $0xb0] sm:$0xff] %vm280, %v683
      %717 = vst.msk [vmem:[%s704 + $0xc8] sm:$0xff] %vm280, %v684
      %718 = vst.msk [vmem:[%s704 + $0xd0] sm:$0xff] %vm280, %v685
      %719 = vst.msk [vmem:[%s704 + $0xe8] sm:$0xff] %vm280, %v686
      %720 = vst.msk [vmem:[%s704 + $0xf0] sm:$0xff] %vm280, %v687
      %721 = vst.msk [vmem:[%s704 + $0x108] sm:$0xff] %vm280, %v688
      %722 = vst.msk [vmem:[%s704 + $0x110] sm:$0xff] %vm280, %v689
      %723 = vst.msk [vmem:[%s704 + $0x128] sm:$0xff] %vm280, %v690
      %724 = vst.msk [vmem:[%s704 + $0x130] sm:$0xff] %vm280, %v691
      %725 = vst.msk [vmem:[%s704 + $0x148] sm:$0xff] %vm280, %v692
      %726 = vst.msk [vmem:[%s704 + $0x150] sm:$0xff] %vm280, %v693
      %727 = vst.msk [vmem:[%s704 + $0x168] sm:$0xff] %vm280, %v694
      %728 = vst.msk [vmem:[%s704 + $0x170] sm:$0xff] %vm280, %v695
      %729 = vst.msk [vmem:[%s704 + $0x188] sm:$0xff] %vm280, %v696
      %730 = vst.msk [vmem:[%s704 + $0x190] sm:$0xff] %vm280, %v697
      %731 = vst.msk [vmem:[%s704 + $0x1a8] sm:$0xff] %vm280, %v698
      %732 = vst.msk [vmem:[%s704 + $0x1b0] sm:$0xff] %vm280, %v699
      %733 = vst.msk [vmem:[%s704 + $0x1c8] sm:$0xff] %vm280, %v700
      %734 = vst.msk [vmem:[%s704 + $0x1d0] sm:$0xff] %vm280, %v701
      %735 = vst.msk [vmem:[%s704 + $0x1e8] sm:$0xff] %vm280, %v702
      %736 = vst.msk [vmem:[%s704 + $0x1f0] sm:$0xff] %vm280, %v703
      %v737 = vld [vmem:[#allocation2 + $0x7] sm:$0xff]
      %v738 = vld [vmem:[#allocation2 + $0xf] sm:$0xff]
      %v739 = vld [vmem:[#allocation2 + $0x27] sm:$0xff]
      %v740 = vld [vmem:[#allocation2 + $0x2f] sm:$0xff]
      %v741 = vld [vmem:[#allocation2 + $0x47] sm:$0xff]
      %v742 = vld [vmem:[#allocation2 + $0x4f] sm:$0xff]
      %v743 = vld [vmem:[#allocation2 + $0x67] sm:$0xff]
      %v744 = vld [vmem:[#allocation2 + $0x6f] sm:$0xff]
      %v745 = vld [vmem:[#allocation2 + $0x87] sm:$0xff]
      %v746 = vld [vmem:[#allocation2 + $0x8f] sm:$0xff]
      %v747 = vld [vmem:[#allocation2 + $0xa7] sm:$0xff]
      %v748 = vld [vmem:[#allocation2 + $0xaf] sm:$0xff]
      %v749 = vld [vmem:[#allocation2 + $0xc7] sm:$0xff]
      %v750 = vld [vmem:[#allocation2 + $0xcf] sm:$0xff]
      %v751 = vld [vmem:[#allocation2 + $0xe7] sm:$0xff]
      %v752 = vld [vmem:[#allocation2 + $0xef] sm:$0xff]
      %v753 = vld [vmem:[#allocation2 + $0x107] sm:$0xff]
      %v754 = vld [vmem:[#allocation2 + $0x10f] sm:$0xff]
      %v755 = vld [vmem:[#allocation2 + $0x127] sm:$0xff]
      %v756 = vld [vmem:[#allocation2 + $0x12f] sm:$0xff]
      %v757 = vld [vmem:[#allocation2 + $0x147] sm:$0xff]
      %v758 = vld [vmem:[#allocation2 + $0x14f] sm:$0xff]
      %v759 = vld [vmem:[#allocation2 + $0x167] sm:$0xff]
      %v760 = vld [vmem:[#allocation2 + $0x16f] sm:$0xff]
      %v761 = vld [vmem:[#allocation2 + $0x187] sm:$0xff]
      %v762 = vld [vmem:[#allocation2 + $0x18f] sm:$0xff]
      %v763 = vld [vmem:[#allocation2 + $0x1a7] sm:$0xff]
      %v764 = vld [vmem:[#allocation2 + $0x1af] sm:$0xff]
      %v765 = vld [vmem:[#allocation2 + $0x1c7] sm:$0xff]
      %v766 = vld [vmem:[#allocation2 + $0x1cf] sm:$0xff]
      %v767 = vld [vmem:[#allocation2 + $0x1e7] sm:$0xff]
      %v768 = vld [vmem:[#allocation2 + $0x1ef] sm:$0xff]
      %v769 = vpack.c.bf16 %v738, %v737
      %v770 = vpack.c.bf16 %v740, %v739
      %v771 = vpack.c.bf16 %v742, %v741
      %v772 = vpack.c.bf16 %v744, %v743
      %v773 = vpack.c.bf16 %v746, %v745
      %v774 = vpack.c.bf16 %v748, %v747
      %v775 = vpack.c.bf16 %v750, %v749
      %v776 = vpack.c.bf16 %v752, %v751
      %v777 = vpack.c.bf16 %v754, %v753
      %v778 = vpack.c.bf16 %v756, %v755
      %v779 = vpack.c.bf16 %v758, %v757
      %v780 = vpack.c.bf16 %v760, %v759
      %v781 = vpack.c.bf16 %v762, %v761
      %v782 = vpack.c.bf16 %v764, %v763
      %v783 = vpack.c.bf16 %v766, %v765
      %v784 = vpack.c.bf16 %v768, %v767
      %785 = vst.msk [vmem:[#allocation3] sm:$0xff] %vm280, %v769
      %786 = vst.msk [vmem:[#allocation3 + $0x28] sm:$0xff] %vm280, %v770
      %787 = vst.msk [vmem:[#allocation3 + $0x50] sm:$0xff] %vm280, %v771
      %788 = vst.msk [vmem:[#allocation3 + $0x78] sm:$0xff] %vm280, %v772
      %789 = vst.msk [vmem:[#allocation3 + $0xa0] sm:$0xff] %vm280, %v773
      %790 = vst.msk [vmem:[#allocation3 + $0xc8] sm:$0xff] %vm280, %v774
      %791 = vst.msk [vmem:[#allocation3 + $0xf0] sm:$0xff] %vm280, %v775
      %792 = vst.msk [vmem:[#allocation3 + $0x118] sm:$0xff] %vm280, %v776
      %793 = vst.msk [vmem:[#allocation3 + $0x140] sm:$0xff] %vm280, %v777
      %794 = vst.msk [vmem:[#allocation3 + $0x168] sm:$0xff] %vm280, %v778
      %795 = vst.msk [vmem:[#allocation3 + $0x190] sm:$0xff] %vm280, %v779
      %796 = vst.msk [vmem:[#allocation3 + $0x1b8] sm:$0xff] %vm280, %v780
      %797 = vst.msk [vmem:[#allocation3 + $0x1e0] sm:$0xff] %vm280, %v781
      %798 = vst.msk [vmem:[#allocation3 + $0x208] sm:$0xff] %vm280, %v782
      %799 = vst.msk [vmem:[#allocation3 + $0x230] sm:$0xff] %vm280, %v783
      %800 = vst.msk [vmem:[#allocation3 + $0x258] sm:$0xff] %vm280, %v784
      %v801 = vld [vmem:[#allocation2 + $0x8] sm:$0xff]
      %v802 = vld [vmem:[#allocation2 + $0x10] sm:$0xff]
      %v803 = vld [vmem:[#allocation2 + $0x28] sm:$0xff]
      %v804 = vld [vmem:[#allocation2 + $0x30] sm:$0xff]
      %v805 = vld [vmem:[#allocation2 + $0x48] sm:$0xff]
      %v806 = vld [vmem:[#allocation2 + $0x50] sm:$0xff]
      %v807 = vld [vmem:[#allocation2 + $0x68] sm:$0xff]
      %v808 = vld [vmem:[#allocation2 + $0x70] sm:$0xff]
      %v809 = vld [vmem:[#allocation2 + $0x88] sm:$0xff]
      %v810 = vld [vmem:[#allocation2 + $0x90] sm:$0xff]
      %v811 = vld [vmem:[#allocation2 + $0xa8] sm:$0xff]
      %v812 = vld [vmem:[#allocation2 + $0xb0] sm:$0xff]
      %v813 = vld [vmem:[#allocation2 + $0xc8] sm:$0xff]
      %v814 = vld [vmem:[#allocation2 + $0xd0] sm:$0xff]
      %v815 = vld [vmem:[#allocation2 + $0xe8] sm:$0xff]
      %v816 = vld [vmem:[#allocation2 + $0xf0] sm:$0xff]
      %v817 = vld [vmem:[#allocation2 + $0x108] sm:$0xff]
      %v818 = vld [vmem:[#allocation2 + $0x110] sm:$0xff]
      %v819 = vld [vmem:[#allocation2 + $0x128] sm:$0xff]
      %v820 = vld [vmem:[#allocation2 + $0x130] sm:$0xff]
      %v821 = vld [vmem:[#allocation2 + $0x148] sm:$0xff]
      %v822 = vld [vmem:[#allocation2 + $0x150] sm:$0xff]
      %v823 = vld [vmem:[#allocation2 + $0x168] sm:$0xff]
      %v824 = vld [vmem:[#allocation2 + $0x170] sm:$0xff]
      %v825 = vld [vmem:[#allocation2 + $0x188] sm:$0xff]
      %v826 = vld [vmem:[#allocation2 + $0x190] sm:$0xff]
      %v827 = vld [vmem:[#allocation2 + $0x1a8] sm:$0xff]
      %v828 = vld [vmem:[#allocation2 + $0x1b0] sm:$0xff]
      %v829 = vld [vmem:[#allocation2 + $0x1c8] sm:$0xff]
      %v830 = vld [vmem:[#allocation2 + $0x1d0] sm:$0xff]
      %v831 = vld [vmem:[#allocation2 + $0x1e8] sm:$0xff]
      %v832 = vld [vmem:[#allocation2 + $0x1f0] sm:$0xff]
      %v833 = vpack.c.bf16 %v802, %v801
      %v834 = vpack.c.bf16 %v804, %v803
      %v835 = vpack.c.bf16 %v806, %v805
      %v836 = vpack.c.bf16 %v808, %v807
      %v837 = vpack.c.bf16 %v810, %v809
      %v838 = vpack.c.bf16 %v812, %v811
      %v839 = vpack.c.bf16 %v814, %v813
      %v840 = vpack.c.bf16 %v816, %v815
      %v841 = vpack.c.bf16 %v818, %v817
      %v842 = vpack.c.bf16 %v820, %v819
      %v843 = vpack.c.bf16 %v822, %v821
      %v844 = vpack.c.bf16 %v824, %v823
      %v845 = vpack.c.bf16 %v826, %v825
      %v846 = vpack.c.bf16 %v828, %v827
      %v847 = vpack.c.bf16 %v830, %v829
      %v848 = vpack.c.bf16 %v832, %v831
      %865 = vrot.lane.b32.xlu0 %v833, 64
      %v866 = vpop.permute.xlu0 %865
      %867 = vrot.lane.b32.xlu0 %v834, 64
      %v868 = vpop.permute.xlu0 %867
      %869 = vrot.lane.b32.xlu0 %v835, 64
      %v870 = vpop.permute.xlu0 %869
      %871 = vrot.lane.b32.xlu0 %v836, 64
      %v872 = vpop.permute.xlu0 %871
      %873 = vrot.lane.b32.xlu0 %v837, 64
      %v874 = vpop.permute.xlu0 %873
      %875 = vrot.lane.b32.xlu0 %v838, 64
      %v876 = vpop.permute.xlu0 %875
      %877 = vrot.lane.b32.xlu0 %v839, 64
      %v878 = vpop.permute.xlu0 %877
      %879 = vrot.lane.b32.xlu0 %v840, 64
      %v880 = vpop.permute.xlu0 %879
      %881 = vrot.lane.b32.xlu0 %v841, 64
      %v882 = vpop.permute.xlu0 %881
      %883 = vrot.lane.b32.xlu0 %v842, 64
      %v884 = vpop.permute.xlu0 %883
      %885 = vrot.lane.b32.xlu0 %v843, 64
      %v886 = vpop.permute.xlu0 %885
      %887 = vrot.lane.b32.xlu0 %v844, 64
      %v888 = vpop.permute.xlu0 %887
      %889 = vrot.lane.b32.xlu0 %v845, 64
      %v890 = vpop.permute.xlu0 %889
      %891 = vrot.lane.b32.xlu0 %v846, 64
      %v892 = vpop.permute.xlu0 %891
      %893 = vrot.lane.b32.xlu0 %v847, 64
      %v894 = vpop.permute.xlu0 %893
      %895 = vrot.lane.b32.xlu0 %v848, 64
      %v896 = vpop.permute.xlu0 %895
      %vm913 = vcmask 1048064
      %914 = vst.msk [vmem:[#allocation3] sm:$0xff] %vm913, %v866
      %915 = vst.msk [vmem:[#allocation3 + $0x28] sm:$0xff] %vm913, %v868
      %916 = vst.msk [vmem:[#allocation3 + $0x50] sm:$0xff] %vm913, %v870
      %917 = vst.msk [vmem:[#allocation3 + $0x78] sm:$0xff] %vm913, %v872
      %918 = vst.msk [vmem:[#allocation3 + $0xa0] sm:$0xff] %vm913, %v874
      %919 = vst.msk [vmem:[#allocation3 + $0xc8] sm:$0xff] %vm913, %v876
      %920 = vst.msk [vmem:[#allocation3 + $0xf0] sm:$0xff] %vm913, %v878
      %921 = vst.msk [vmem:[#allocation3 + $0x118] sm:$0xff] %vm913, %v880
      %922 = vst.msk [vmem:[#allocation3 + $0x140] sm:$0xff] %vm913, %v882
      %923 = vst.msk [vmem:[#allocation3 + $0x168] sm:$0xff] %vm913, %v884
      %924 = vst.msk [vmem:[#allocation3 + $0x190] sm:$0xff] %vm913, %v886
      %925 = vst.msk [vmem:[#allocation3 + $0x1b8] sm:$0xff] %vm913, %v888
      %926 = vst.msk [vmem:[#allocation3 + $0x1e0] sm:$0xff] %vm913, %v890
      %927 = vst.msk [vmem:[#allocation3 + $0x208] sm:$0xff] %vm913, %v892
      %928 = vst.msk [vmem:[#allocation3 + $0x230] sm:$0xff] %vm913, %v894
      %929 = vst.msk [vmem:[#allocation3 + $0x258] sm:$0xff] %vm913, %v896
      %v930 = vld [vmem:[#allocation2 + $0x9] sm:$0xff]
      %v931 = vld [vmem:[#allocation2 + $0x11] sm:$0xff]
      %v932 = vld [vmem:[#allocation2 + $0x29] sm:$0xff]
      %v933 = vld [vmem:[#allocation2 + $0x31] sm:$0xff]
      %v934 = vld [vmem:[#allocation2 + $0x49] sm:$0xff]
      %v935 = vld [vmem:[#allocation2 + $0x51] sm:$0xff]
      %v936 = vld [vmem:[#allocation2 + $0x69] sm:$0xff]
      %v937 = vld [vmem:[#allocation2 + $0x71] sm:$0xff]
      %v938 = vld [vmem:[#allocation2 + $0x89] sm:$0xff]
      %v939 = vld [vmem:[#allocation2 + $0x91] sm:$0xff]
      %v940 = vld [vmem:[#allocation2 + $0xa9] sm:$0xff]
      %v941 = vld [vmem:[#allocation2 + $0xb1] sm:$0xff]
      %v942 = vld [vmem:[#allocation2 + $0xc9] sm:$0xff]
      %v943 = vld [vmem:[#allocation2 + $0xd1] sm:$0xff]
      %v944 = vld [vmem:[#allocation2 + $0xe9] sm:$0xff]
      %v945 = vld [vmem:[#allocation2 + $0xf1] sm:$0xff]
      %v946 = vld [vmem:[#allocation2 + $0x109] sm:$0xff]
      %v947 = vld [vmem:[#allocation2 + $0x111] sm:$0xff]
      %v948 = vld [vmem:[#allocation2 + $0x129] sm:$0xff]
      %v949 = vld [vmem:[#allocation2 + $0x131] sm:$0xff]
      %v950 = vld [vmem:[#allocation2 + $0x149] sm:$0xff]
      %v951 = vld [vmem:[#allocation2 + $0x151] sm:$0xff]
      %v952 = vld [vmem:[#allocation2 + $0x169] sm:$0xff]
      %v953 = vld [vmem:[#allocation2 + $0x171] sm:$0xff]
      %v954 = vld [vmem:[#allocation2 + $0x189] sm:$0xff]
      %v955 = vld [vmem:[#allocation2 + $0x191] sm:$0xff]
      %v956 = vld [vmem:[#allocation2 + $0x1a9] sm:$0xff]
      %v957 = vld [vmem:[#allocation2 + $0x1b1] sm:$0xff]
      %v958 = vld [vmem:[#allocation2 + $0x1c9] sm:$0xff]
      %v959 = vld [vmem:[#allocation2 + $0x1d1] sm:$0xff]
      %v960 = vld [vmem:[#allocation2 + $0x1e9] sm:$0xff]
      %v961 = vld [vmem:[#allocation2 + $0x1f1] sm:$0xff]
      %v962 = vpack.c.bf16 %v931, %v930
      %v963 = vpack.c.bf16 %v933, %v932
      %v964 = vpack.c.bf16 %v935, %v934
      %v965 = vpack.c.bf16 %v937, %v936
      %v966 = vpack.c.bf16 %v939, %v938
      %v967 = vpack.c.bf16 %v941, %v940
      %v968 = vpack.c.bf16 %v943, %v942
      %v969 = vpack.c.bf16 %v945, %v944
      %v970 = vpack.c.bf16 %v947, %v946
      %v971 = vpack.c.bf16 %v949, %v948
      %v972 = vpack.c.bf16 %v951, %v950
      %v973 = vpack.c.bf16 %v953, %v952
      %v974 = vpack.c.bf16 %v955, %v954
      %v975 = vpack.c.bf16 %v957, %v956
      %v976 = vpack.c.bf16 %v959, %v958
      %v977 = vpack.c.bf16 %v961, %v960
      %978 = vst.msk [vmem:[#allocation3 + $0x8] sm:$0xff] %vm280, %v962
      %979 = vst.msk [vmem:[#allocation3 + $0x30] sm:$0xff] %vm280, %v963
      %980 = vst.msk [vmem:[#allocation3 + $0x58] sm:$0xff] %vm280, %v964
      %981 = vst.msk [vmem:[#allocation3 + $0x80] sm:$0xff] %vm280, %v965
      %982 = vst.msk [vmem:[#allocation3 + $0xa8] sm:$0xff] %vm280, %v966
      %983 = vst.msk [vmem:[#allocation3 + $0xd0] sm:$0xff] %vm280, %v967
      %984 = vst.msk [vmem:[#allocation3 + $0xf8] sm:$0xff] %vm280, %v968
      %985 = vst.msk [vmem:[#allocation3 + $0x120] sm:$0xff] %vm280, %v969
      %986 = vst.msk [vmem:[#allocation3 + $0x148] sm:$0xff] %vm280, %v970
      %987 = vst.msk [vmem:[#allocation3 + $0x170] sm:$0xff] %vm280, %v971
      %988 = vst.msk [vmem:[#allocation3 + $0x198] sm:$0xff] %vm280, %v972
      %989 = vst.msk [vmem:[#allocation3 + $0x1c0] sm:$0xff] %vm280, %v973
      %990 = vst.msk [vmem:[#allocation3 + $0x1e8] sm:$0xff] %vm280, %v974
      %991 = vst.msk [vmem:[#allocation3 + $0x210] sm:$0xff] %vm280, %v975
      %992 = vst.msk [vmem:[#allocation3 + $0x238] sm:$0xff] %vm280, %v976
      %993 = vst.msk [vmem:[#allocation3 + $0x260] sm:$0xff] %vm280, %v977
      %v994 = vld [vmem:[%s704 + $0x7] sm:$0xff]
      %v995 = vld [vmem:[%s704 + $0xf] sm:$0xff]
      %v996 = vld [vmem:[%s704 + $0x27] sm:$0xff]
      %v997 = vld [vmem:[%s704 + $0x2f] sm:$0xff]
      %v998 = vld [vmem:[%s704 + $0x47] sm:$0xff]
      %v999 = vld [vmem:[%s704 + $0x4f] sm:$0xff]
      %v1000 = vld [vmem:[%s704 + $0x67] sm:$0xff]
      %v1001 = vld [vmem:[%s704 + $0x6f] sm:$0xff]
      %v1002 = vld [vmem:[%s704 + $0x87] sm:$0xff]
      %v1003 = vld [vmem:[%s704 + $0x8f] sm:$0xff]
      %v1004 = vld [vmem:[%s704 + $0xa7] sm:$0xff]
      %v1005 = vld [vmem:[%s704 + $0xaf] sm:$0xff]
      %v1006 = vld [vmem:[%s704 + $0xc7] sm:$0xff]
      %v1007 = vld [vmem:[%s704 + $0xcf] sm:$0xff]
      %v1008 = vld [vmem:[%s704 + $0xe7] sm:$0xff]
      %v1009 = vld [vmem:[%s704 + $0xef] sm:$0xff]
      %v1010 = vld [vmem:[%s704 + $0x107] sm:$0xff]
      %v1011 = vld [vmem:[%s704 + $0x10f] sm:$0xff]
      %v1012 = vld [vmem:[%s704 + $0x127] sm:$0xff]
      %v1013 = vld [vmem:[%s704 + $0x12f] sm:$0xff]
      %v1014 = vld [vmem:[%s704 + $0x147] sm:$0xff]
      %v1015 = vld [vmem:[%s704 + $0x14f] sm:$0xff]
      %v1016 = vld [vmem:[%s704 + $0x167] sm:$0xff]
      %v1017 = vld [vmem:[%s704 + $0x16f] sm:$0xff]
      %v1018 = vld [vmem:[%s704 + $0x187] sm:$0xff]
      %v1019 = vld [vmem:[%s704 + $0x18f] sm:$0xff]
      %v1020 = vld [vmem:[%s704 + $0x1a7] sm:$0xff]
      %v1021 = vld [vmem:[%s704 + $0x1af] sm:$0xff]
      %v1022 = vld [vmem:[%s704 + $0x1c7] sm:$0xff]
      %v1023 = vld [vmem:[%s704 + $0x1cf] sm:$0xff]
      %v1024 = vld [vmem:[%s704 + $0x1e7] sm:$0xff]
      %v1025 = vld [vmem:[%s704 + $0x1ef] sm:$0xff]
      %v1026 = vpack.c.bf16 %v995, %v994
      %v1027 = vpack.c.bf16 %v997, %v996
      %v1028 = vpack.c.bf16 %v999, %v998
      %v1029 = vpack.c.bf16 %v1001, %v1000
      %v1030 = vpack.c.bf16 %v1003, %v1002
      %v1031 = vpack.c.bf16 %v1005, %v1004
      %v1032 = vpack.c.bf16 %v1007, %v1006
      %v1033 = vpack.c.bf16 %v1009, %v1008
      %v1034 = vpack.c.bf16 %v1011, %v1010
      %v1035 = vpack.c.bf16 %v1013, %v1012
      %v1036 = vpack.c.bf16 %v1015, %v1014
      %v1037 = vpack.c.bf16 %v1017, %v1016
      %v1038 = vpack.c.bf16 %v1019, %v1018
      %v1039 = vpack.c.bf16 %v1021, %v1020
      %v1040 = vpack.c.bf16 %v1023, %v1022
      %v1041 = vpack.c.bf16 %v1025, %v1024
      %1058 = vrot.lane.b32.xlu0 %v1026, 64
      %v1059 = vpop.permute.xlu0 %1058
      %1060 = vrot.lane.b32.xlu0 %v1027, 64
      %v1061 = vpop.permute.xlu0 %1060
      %1062 = vrot.lane.b32.xlu0 %v1028, 64
      %v1063 = vpop.permute.xlu0 %1062
      %1064 = vrot.lane.b32.xlu0 %v1029, 64
      %v1065 = vpop.permute.xlu0 %1064
      %1066 = vrot.lane.b32.xlu0 %v1030, 64
      %v1067 = vpop.permute.xlu0 %1066
      %1068 = vrot.lane.b32.xlu0 %v1031, 64
      %v1069 = vpop.permute.xlu0 %1068
      %1070 = vrot.lane.b32.xlu0 %v1032, 64
      %v1071 = vpop.permute.xlu0 %1070
      %1072 = vrot.lane.b32.xlu0 %v1033, 64
      %v1073 = vpop.permute.xlu0 %1072
      %1074 = vrot.lane.b32.xlu0 %v1034, 64
      %v1075 = vpop.permute.xlu0 %1074
      %1076 = vrot.lane.b32.xlu0 %v1035, 64
      %v1077 = vpop.permute.xlu0 %1076
      %1078 = vrot.lane.b32.xlu0 %v1036, 64
      %v1079 = vpop.permute.xlu0 %1078
      %1080 = vrot.lane.b32.xlu0 %v1037, 64
      %v1081 = vpop.permute.xlu0 %1080
      %1082 = vrot.lane.b32.xlu0 %v1038, 64
      %v1083 = vpop.permute.xlu0 %1082
      %1084 = vrot.lane.b32.xlu0 %v1039, 64
      %v1085 = vpop.permute.xlu0 %1084
      %1086 = vrot.lane.b32.xlu0 %v1040, 64
      %v1087 = vpop.permute.xlu0 %1086
      %1088 = vrot.lane.b32.xlu0 %v1041, 64
      %v1089 = vpop.permute.xlu0 %1088
      %1106 = vst.msk [vmem:[#allocation3 + $0x8] sm:$0xff] %vm913, %v1059
      %1107 = vst.msk [vmem:[#allocation3 + $0x30] sm:$0xff] %vm913, %v1061
      %1108 = vst.msk [vmem:[#allocation3 + $0x58] sm:$0xff] %vm913, %v1063
      %1109 = vst.msk [vmem:[#allocation3 + $0x80] sm:$0xff] %vm913, %v1065
      %1110 = vst.msk [vmem:[#allocation3 + $0xa8] sm:$0xff] %vm913, %v1067
      %1111 = vst.msk [vmem:[#allocation3 + $0xd0] sm:$0xff] %vm913, %v1069
      %1112 = vst.msk [vmem:[#allocation3 + $0xf8] sm:$0xff] %vm913, %v1071
      %1113 = vst.msk [vmem:[#allocation3 + $0x120] sm:$0xff] %vm913, %v1073
      %1114 = vst.msk [vmem:[#allocation3 + $0x148] sm:$0xff] %vm913, %v1075
      %1115 = vst.msk [vmem:[#allocation3 + $0x170] sm:$0xff] %vm913, %v1077
      %1116 = vst.msk [vmem:[#allocation3 + $0x198] sm:$0xff] %vm913, %v1079
      %1117 = vst.msk [vmem:[#allocation3 + $0x1c0] sm:$0xff] %vm913, %v1081
      %1118 = vst.msk [vmem:[#allocation3 + $0x1e8] sm:$0xff] %vm913, %v1083
      %1119 = vst.msk [vmem:[#allocation3 + $0x210] sm:$0xff] %vm913, %v1085
      %1120 = vst.msk [vmem:[#allocation3 + $0x238] sm:$0xff] %vm913, %v1087
      %1121 = vst.msk [vmem:[#allocation3 + $0x260] sm:$0xff] %vm913, %v1089
      %v1122 = vld [vmem:[%s704 + $0x8] sm:$0xff]
      %v1123 = vld [vmem:[%s704 + $0x10] sm:$0xff]
      %v1124 = vld [vmem:[%s704 + $0x28] sm:$0xff]
      %v1125 = vld [vmem:[%s704 + $0x30] sm:$0xff]
      %v1126 = vld [vmem:[%s704 + $0x48] sm:$0xff]
      %v1127 = vld [vmem:[%s704 + $0x50] sm:$0xff]
      %v1128 = vld [vmem:[%s704 + $0x68] sm:$0xff]
      %v1129 = vld [vmem:[%s704 + $0x70] sm:$0xff]
      %v1130 = vld [vmem:[%s704 + $0x88] sm:$0xff]
      %v1131 = vld [vmem:[%s704 + $0x90] sm:$0xff]
      %v1132 = vld [vmem:[%s704 + $0xa8] sm:$0xff]
      %v1133 = vld [vmem:[%s704 + $0xb0] sm:$0xff]
      %v1134 = vld [vmem:[%s704 + $0xc8] sm:$0xff]
      %v1135 = vld [vmem:[%s704 + $0xd0] sm:$0xff]
      %v1136 = vld [vmem:[%s704 + $0xe8] sm:$0xff]
      %v1137 = vld [vmem:[%s704 + $0xf0] sm:$0xff]
      %v1138 = vld [vmem:[%s704 + $0x108] sm:$0xff]
      %v1139 = vld [vmem:[%s704 + $0x110] sm:$0xff]
      %v1140 = vld [vmem:[%s704 + $0x128] sm:$0xff]
      %v1141 = vld [vmem:[%s704 + $0x130] sm:$0xff]
      %v1142 = vld [vmem:[%s704 + $0x148] sm:$0xff]
      %v1143 = vld [vmem:[%s704 + $0x150] sm:$0xff]
      %v1144 = vld [vmem:[%s704 + $0x168] sm:$0xff]
      %v1145 = vld [vmem:[%s704 + $0x170] sm:$0xff]
      %v1146 = vld [vmem:[%s704 + $0x188] sm:$0xff]
      %v1147 = vld [vmem:[%s704 + $0x190] sm:$0xff]
      %v1148 = vld [vmem:[%s704 + $0x1a8] sm:$0xff]
      %v1149 = vld [vmem:[%s704 + $0x1b0] sm:$0xff]
      %v1150 = vld [vmem:[%s704 + $0x1c8] sm:$0xff]
      %v1151 = vld [vmem:[%s704 + $0x1d0] sm:$0xff]
      %v1152 = vld [vmem:[%s704 + $0x1e8] sm:$0xff]
      %v1153 = vld [vmem:[%s704 + $0x1f0] sm:$0xff]
      %v1154 = vpack.c.bf16 %v1123, %v1122
      %v1155 = vpack.c.bf16 %v1125, %v1124
      %v1156 = vpack.c.bf16 %v1127, %v1126
      %v1157 = vpack.c.bf16 %v1129, %v1128
      %v1158 = vpack.c.bf16 %v1131, %v1130
      %v1159 = vpack.c.bf16 %v1133, %v1132
      %v1160 = vpack.c.bf16 %v1135, %v1134
      %v1161 = vpack.c.bf16 %v1137, %v1136
      %v1162 = vpack.c.bf16 %v1139, %v1138
      %v1163 = vpack.c.bf16 %v1141, %v1140
      %v1164 = vpack.c.bf16 %v1143, %v1142
      %v1165 = vpack.c.bf16 %v1145, %v1144
      %v1166 = vpack.c.bf16 %v1147, %v1146
      %v1167 = vpack.c.bf16 %v1149, %v1148
      %v1168 = vpack.c.bf16 %v1151, %v1150
      %v1169 = vpack.c.bf16 %v1153, %v1152
      %1170 = vst.msk [vmem:[#allocation3 + $0x10] sm:$0xff] %vm280, %v1154
      %1171 = vst.msk [vmem:[#allocation3 + $0x38] sm:$0xff] %vm280, %v1155
      %1172 = vst.msk [vmem:[#allocation3 + $0x60] sm:$0xff] %vm280, %v1156
      %1173 = vst.msk [vmem:[#allocation3 + $0x88] sm:$0xff] %vm280, %v1157
      %1174 = vst.msk [vmem:[#allocation3 + $0xb0] sm:$0xff] %vm280, %v1158
      %1175 = vst.msk [vmem:[#allocation3 + $0xd8] sm:$0xff] %vm280, %v1159
      %1176 = vst.msk [vmem:[#allocation3 + $0x100] sm:$0xff] %vm280, %v1160
      %1177 = vst.msk [vmem:[#allocation3 + $0x128] sm:$0xff] %vm280, %v1161
      %1178 = vst.msk [vmem:[#allocation3 + $0x150] sm:$0xff] %vm280, %v1162
      %1179 = vst.msk [vmem:[#allocation3 + $0x178] sm:$0xff] %vm280, %v1163
      %1180 = vst.msk [vmem:[#allocation3 + $0x1a0] sm:$0xff] %vm280, %v1164
      %1181 = vst.msk [vmem:[#allocation3 + $0x1c8] sm:$0xff] %vm280, %v1165
      %1182 = vst.msk [vmem:[#allocation3 + $0x1f0] sm:$0xff] %vm280, %v1166
      %1183 = vst.msk [vmem:[#allocation3 + $0x218] sm:$0xff] %vm280, %v1167
      %1184 = vst.msk [vmem:[#allocation3 + $0x240] sm:$0xff] %vm280, %v1168
      %1185 = vst.msk [vmem:[#allocation3 + $0x268] sm:$0xff] %vm280, %v1169
      %v1186 = vld [vmem:[%s704 + $0x9] sm:$0xff]
      %v1187 = vld [vmem:[%s704 + $0x11] sm:$0xff]
      %v1188 = vld [vmem:[%s704 + $0x29] sm:$0xff]
      %v1189 = vld [vmem:[%s704 + $0x31] sm:$0xff]
      %v1190 = vld [vmem:[%s704 + $0x49] sm:$0xff]
      %v1191 = vld [vmem:[%s704 + $0x51] sm:$0xff]
      %v1192 = vld [vmem:[%s704 + $0x69] sm:$0xff]
      %v1193 = vld [vmem:[%s704 + $0x71] sm:$0xff]
      %v1194 = vld [vmem:[%s704 + $0x89] sm:$0xff]
      %v1195 = vld [vmem:[%s704 + $0x91] sm:$0xff]
      %v1196 = vld [vmem:[%s704 + $0xa9] sm:$0xff]
      %v1197 = vld [vmem:[%s704 + $0xb1] sm:$0xff]
      %v1198 = vld [vmem:[%s704 + $0xc9] sm:$0xff]
      %v1199 = vld [vmem:[%s704 + $0xd1] sm:$0xff]
      %v1200 = vld [vmem:[%s704 + $0xe9] sm:$0xff]
      %v1201 = vld [vmem:[%s704 + $0xf1] sm:$0xff]
      %v1202 = vld [vmem:[%s704 + $0x109] sm:$0xff]
      %v1203 = vld [vmem:[%s704 + $0x111] sm:$0xff]
      %v1204 = vld [vmem:[%s704 + $0x129] sm:$0xff]
      %v1205 = vld [vmem:[%s704 + $0x131] sm:$0xff]
      %v1206 = vld [vmem:[%s704 + $0x149] sm:$0xff]
      %v1207 = vld [vmem:[%s704 + $0x151] sm:$0xff]
      %v1208 = vld [vmem:[%s704 + $0x169] sm:$0xff]
      %v1209 = vld [vmem:[%s704 + $0x171] sm:$0xff]
      %v1210 = vld [vmem:[%s704 + $0x189] sm:$0xff]
      %v1211 = vld [vmem:[%s704 + $0x191] sm:$0xff]
      %v1212 = vld [vmem:[%s704 + $0x1a9] sm:$0xff]
      %v1213 = vld [vmem:[%s704 + $0x1b1] sm:$0xff]
      %v1214 = vld [vmem:[%s704 + $0x1c9] sm:$0xff]
      %v1215 = vld [vmem:[%s704 + $0x1d1] sm:$0xff]
      %v1216 = vld [vmem:[%s704 + $0x1e9] sm:$0xff]
      %v1217 = vld [vmem:[%s704 + $0x1f1] sm:$0xff]
      %v1218 = vpack.c.bf16 %v1187, %v1186
      %v1219 = vpack.c.bf16 %v1189, %v1188
      %v1220 = vpack.c.bf16 %v1191, %v1190
      %v1221 = vpack.c.bf16 %v1193, %v1192
      %v1222 = vpack.c.bf16 %v1195, %v1194
      %v1223 = vpack.c.bf16 %v1197, %v1196
      %v1224 = vpack.c.bf16 %v1199, %v1198
      %v1225 = vpack.c.bf16 %v1201, %v1200
      %v1226 = vpack.c.bf16 %v1203, %v1202
      %v1227 = vpack.c.bf16 %v1205, %v1204
      %v1228 = vpack.c.bf16 %v1207, %v1206
      %v1229 = vpack.c.bf16 %v1209, %v1208
      %v1230 = vpack.c.bf16 %v1211, %v1210
      %v1231 = vpack.c.bf16 %v1213, %v1212
      %v1232 = vpack.c.bf16 %v1215, %v1214
      %v1233 = vpack.c.bf16 %v1217, %v1216
      %1250 = vrot.lane.b32.xlu0 %v1218, 64
      %v1251 = vpop.permute.xlu0 %1250
      %1252 = vrot.lane.b32.xlu0 %v1219, 64
      %v1253 = vpop.permute.xlu0 %1252
      %1254 = vrot.lane.b32.xlu0 %v1220, 64
      %v1255 = vpop.permute.xlu0 %1254
      %1256 = vrot.lane.b32.xlu0 %v1221, 64
      %v1257 = vpop.permute.xlu0 %1256
      %1258 = vrot.lane.b32.xlu0 %v1222, 64
      %v1259 = vpop.permute.xlu0 %1258
      %1260 = vrot.lane.b32.xlu0 %v1223, 64
      %v1261 = vpop.permute.xlu0 %1260
      %1262 = vrot.lane.b32.xlu0 %v1224, 64
      %v1263 = vpop.permute.xlu0 %1262
      %1264 = vrot.lane.b32.xlu0 %v1225, 64
      %v1265 = vpop.permute.xlu0 %1264
      %1266 = vrot.lane.b32.xlu0 %v1226, 64
      %v1267 = vpop.permute.xlu0 %1266
      %1268 = vrot.lane.b32.xlu0 %v1227, 64
      %v1269 = vpop.permute.xlu0 %1268
      %1270 = vrot.lane.b32.xlu0 %v1228, 64
      %v1271 = vpop.permute.xlu0 %1270
      %1272 = vrot.lane.b32.xlu0 %v1229, 64
      %v1273 = vpop.permute.xlu0 %1272
      %1274 = vrot.lane.b32.xlu0 %v1230, 64
      %v1275 = vpop.permute.xlu0 %1274
      %1276 = vrot.lane.b32.xlu0 %v1231, 64
      %v1277 = vpop.permute.xlu0 %1276
      %1278 = vrot.lane.b32.xlu0 %v1232, 64
      %v1279 = vpop.permute.xlu0 %1278
      %1280 = vrot.lane.b32.xlu0 %v1233, 64
      %v1281 = vpop.permute.xlu0 %1280
      %1298 = vst.msk [vmem:[#allocation3 + $0x10] sm:$0xff] %vm913, %v1251
      %1299 = vst.msk [vmem:[#allocation3 + $0x38] sm:$0xff] %vm913, %v1253
      %1300 = vst.msk [vmem:[#allocation3 + $0x60] sm:$0xff] %vm913, %v1255
      %1301 = vst.msk [vmem:[#allocation3 + $0x88] sm:$0xff] %vm913, %v1257
      %1302 = vst.msk [vmem:[#allocation3 + $0xb0] sm:$0xff] %vm913, %v1259
      %1303 = vst.msk [vmem:[#allocation3 + $0xd8] sm:$0xff] %vm913, %v1261
      %1304 = vst.msk [vmem:[#allocation3 + $0x100] sm:$0xff] %vm913, %v1263
      %1305 = vst.msk [vmem:[#allocation3 + $0x128] sm:$0xff] %vm913, %v1265
      %1306 = vst.msk [vmem:[#allocation3 + $0x150] sm:$0xff] %vm913, %v1267
      %1307 = vst.msk [vmem:[#allocation3 + $0x178] sm:$0xff] %vm913, %v1269
      %1308 = vst.msk [vmem:[#allocation3 + $0x1a0] sm:$0xff] %vm913, %v1271
      %1309 = vst.msk [vmem:[#allocation3 + $0x1c8] sm:$0xff] %vm913, %v1273
      %1310 = vst.msk [vmem:[#allocation3 + $0x1f0] sm:$0xff] %vm913, %v1275
      %1311 = vst.msk [vmem:[#allocation3 + $0x218] sm:$0xff] %vm913, %v1277
      %1312 = vst.msk [vmem:[#allocation3 + $0x240] sm:$0xff] %vm913, %v1279
      %1313 = vst.msk [vmem:[#allocation3 + $0x268] sm:$0xff] %vm913, %v1281
      %s1314 = scalar_lea.vmem [#allocation2], 64
      %v1315 = vld [vmem:[%s1314 + $0x7] sm:$0xff]
      %v1316 = vld [vmem:[%s1314 + $0xf] sm:$0xff]
      %v1317 = vld [vmem:[%s1314 + $0x27] sm:$0xff]
      %v1318 = vld [vmem:[%s1314 + $0x2f] sm:$0xff]
      %v1319 = vld [vmem:[%s1314 + $0x47] sm:$0xff]
      %v1320 = vld [vmem:[%s1314 + $0x4f] sm:$0xff]
      %v1321 = vld [vmem:[%s1314 + $0x67] sm:$0xff]
      %v1322 = vld [vmem:[%s1314 + $0x6f] sm:$0xff]
      %v1323 = vld [vmem:[%s1314 + $0x87] sm:$0xff]
      %v1324 = vld [vmem:[%s1314 + $0x8f] sm:$0xff]
      %v1325 = vld [vmem:[%s1314 + $0xa7] sm:$0xff]
      %v1326 = vld [vmem:[%s1314 + $0xaf] sm:$0xff]
      %v1327 = vld [vmem:[%s1314 + $0xc7] sm:$0xff]
      %v1328 = vld [vmem:[%s1314 + $0xcf] sm:$0xff]
      %v1329 = vld [vmem:[%s1314 + $0xe7] sm:$0xff]
      %v1330 = vld [vmem:[%s1314 + $0xef] sm:$0xff]
      %v1331 = vld [vmem:[%s1314 + $0x107] sm:$0xff]
      %v1332 = vld [vmem:[%s1314 + $0x10f] sm:$0xff]
      %v1333 = vld [vmem:[%s1314 + $0x127] sm:$0xff]
      %v1334 = vld [vmem:[%s1314 + $0x12f] sm:$0xff]
      %v1335 = vld [vmem:[%s1314 + $0x147] sm:$0xff]
      %v1336 = vld [vmem:[%s1314 + $0x14f] sm:$0xff]
      %v1337 = vld [vmem:[%s1314 + $0x167] sm:$0xff]
      %v1338 = vld [vmem:[%s1314 + $0x16f] sm:$0xff]
      %v1339 = vld [vmem:[%s1314 + $0x187] sm:$0xff]
      %v1340 = vld [vmem:[%s1314 + $0x18f] sm:$0xff]
      %v1341 = vld [vmem:[%s1314 + $0x1a7] sm:$0xff]
      %v1342 = vld [vmem:[%s1314 + $0x1af] sm:$0xff]
      %v1343 = vld [vmem:[%s1314 + $0x1c7] sm:$0xff]
      %v1344 = vld [vmem:[%s1314 + $0x1cf] sm:$0xff]
      %v1345 = vld [vmem:[%s1314 + $0x1e7] sm:$0xff]
      %v1346 = vld [vmem:[%s1314 + $0x1ef] sm:$0xff]
      %v1347 = vpack.c.bf16 %v1316, %v1315
      %v1348 = vpack.c.bf16 %v1318, %v1317
      %v1349 = vpack.c.bf16 %v1320, %v1319
      %v1350 = vpack.c.bf16 %v1322, %v1321
      %v1351 = vpack.c.bf16 %v1324, %v1323
      %v1352 = vpack.c.bf16 %v1326, %v1325
      %v1353 = vpack.c.bf16 %v1328, %v1327
      %v1354 = vpack.c.bf16 %v1330, %v1329
      %v1355 = vpack.c.bf16 %v1332, %v1331
      %v1356 = vpack.c.bf16 %v1334, %v1333
      %v1357 = vpack.c.bf16 %v1336, %v1335
      %v1358 = vpack.c.bf16 %v1338, %v1337
      %v1359 = vpack.c.bf16 %v1340, %v1339
      %v1360 = vpack.c.bf16 %v1342, %v1341
      %v1361 = vpack.c.bf16 %v1344, %v1343
      %v1362 = vpack.c.bf16 %v1346, %v1345
      %1363 = vst.msk [vmem:[#allocation3 + $0x18] sm:$0xff] %vm280, %v1347
      %1364 = vst.msk [vmem:[#allocation3 + $0x40] sm:$0xff] %vm280, %v1348
      %1365 = vst.msk [vmem:[#allocation3 + $0x68] sm:$0xff] %vm280, %v1349
      %1366 = vst.msk [vmem:[#allocation3 + $0x90] sm:$0xff] %vm280, %v1350
      %1367 = vst.msk [vmem:[#allocation3 + $0xb8] sm:$0xff] %vm280, %v1351
      %1368 = vst.msk [vmem:[#allocation3 + $0xe0] sm:$0xff] %vm280, %v1352
      %1369 = vst.msk [vmem:[#allocation3 + $0x108] sm:$0xff] %vm280, %v1353
      %1370 = vst.msk [vmem:[#allocation3 + $0x130] sm:$0xff] %vm280, %v1354
      %1371 = vst.msk [vmem:[#allocation3 + $0x158] sm:$0xff] %vm280, %v1355
      %1372 = vst.msk [vmem:[#allocation3 + $0x180] sm:$0xff] %vm280, %v1356
      %1373 = vst.msk [vmem:[#allocation3 + $0x1a8] sm:$0xff] %vm280, %v1357
      %1374 = vst.msk [vmem:[#allocation3 + $0x1d0] sm:$0xff] %vm280, %v1358
      %1375 = vst.msk [vmem:[#allocation3 + $0x1f8] sm:$0xff] %vm280, %v1359
      %1376 = vst.msk [vmem:[#allocation3 + $0x220] sm:$0xff] %vm280, %v1360
      %1377 = vst.msk [vmem:[#allocation3 + $0x248] sm:$0xff] %vm280, %v1361
      %1378 = vst.msk [vmem:[#allocation3 + $0x270] sm:$0xff] %vm280, %v1362
      %v1379 = vld [vmem:[%s1314 + $0x8] sm:$0xff]
      %v1380 = vld [vmem:[%s1314 + $0x10] sm:$0xff]
      %v1381 = vld [vmem:[%s1314 + $0x28] sm:$0xff]
      %v1382 = vld [vmem:[%s1314 + $0x30] sm:$0xff]
      %v1383 = vld [vmem:[%s1314 + $0x48] sm:$0xff]
      %v1384 = vld [vmem:[%s1314 + $0x50] sm:$0xff]
      %v1385 = vld [vmem:[%s1314 + $0x68] sm:$0xff]
      %v1386 = vld [vmem:[%s1314 + $0x70] sm:$0xff]
      %v1387 = vld [vmem:[%s1314 + $0x88] sm:$0xff]
      %v1388 = vld [vmem:[%s1314 + $0x90] sm:$0xff]
      %v1389 = vld [vmem:[%s1314 + $0xa8] sm:$0xff]
      %v1390 = vld [vmem:[%s1314 + $0xb0] sm:$0xff]
      %v1391 = vld [vmem:[%s1314 + $0xc8] sm:$0xff]
      %v1392 = vld [vmem:[%s1314 + $0xd0] sm:$0xff]
      %v1393 = vld [vmem:[%s1314 + $0xe8] sm:$0xff]
      %v1394 = vld [vmem:[%s1314 + $0xf0] sm:$0xff]
      %v1395 = vld [vmem:[%s1314 + $0x108] sm:$0xff]
      %v1396 = vld [vmem:[%s1314 + $0x110] sm:$0xff]
      %v1397 = vld [vmem:[%s1314 + $0x128] sm:$0xff]
      %v1398 = vld [vmem:[%s1314 + $0x130] sm:$0xff]
      %v1399 = vld [vmem:[%s1314 + $0x148] sm:$0xff]
      %v1400 = vld [vmem:[%s1314 + $0x150] sm:$0xff]
      %v1401 = vld [vmem:[%s1314 + $0x168] sm:$0xff]
      %v1402 = vld [vmem:[%s1314 + $0x170] sm:$0xff]
      %v1403 = vld [vmem:[%s1314 + $0x188] sm:$0xff]
      %v1404 = vld [vmem:[%s1314 + $0x190] sm:$0xff]
      %v1405 = vld [vmem:[%s1314 + $0x1a8] sm:$0xff]
      %v1406 = vld [vmem:[%s1314 + $0x1b0] sm:$0xff]
      %v1407 = vld [vmem:[%s1314 + $0x1c8] sm:$0xff]
      %v1408 = vld [vmem:[%s1314 + $0x1d0] sm:$0xff]
      %v1409 = vld [vmem:[%s1314 + $0x1e8] sm:$0xff]
      %v1410 = vld [vmem:[%s1314 + $0x1f0] sm:$0xff]
      %v1411 = vpack.c.bf16 %v1380, %v1379
      %v1412 = vpack.c.bf16 %v1382, %v1381
      %v1413 = vpack.c.bf16 %v1384, %v1383
      %v1414 = vpack.c.bf16 %v1386, %v1385
      %v1415 = vpack.c.bf16 %v1388, %v1387
      %v1416 = vpack.c.bf16 %v1390, %v1389
      %v1417 = vpack.c.bf16 %v1392, %v1391
      %v1418 = vpack.c.bf16 %v1394, %v1393
      %v1419 = vpack.c.bf16 %v1396, %v1395
      %v1420 = vpack.c.bf16 %v1398, %v1397
      %v1421 = vpack.c.bf16 %v1400, %v1399
      %v1422 = vpack.c.bf16 %v1402, %v1401
      %v1423 = vpack.c.bf16 %v1404, %v1403
      %v1424 = vpack.c.bf16 %v1406, %v1405
      %v1425 = vpack.c.bf16 %v1408, %v1407
      %v1426 = vpack.c.bf16 %v1410, %v1409
      %1443 = vrot.lane.b32.xlu0 %v1411, 64
      %v1444 = vpop.permute.xlu0 %1443
      %1445 = vrot.lane.b32.xlu0 %v1412, 64
      %v1446 = vpop.permute.xlu0 %1445
      %1447 = vrot.lane.b32.xlu0 %v1413, 64
      %v1448 = vpop.permute.xlu0 %1447
      %1449 = vrot.lane.b32.xlu0 %v1414, 64
      %v1450 = vpop.permute.xlu0 %1449
      %1451 = vrot.lane.b32.xlu0 %v1415, 64
      %v1452 = vpop.permute.xlu0 %1451
      %1453 = vrot.lane.b32.xlu0 %v1416, 64
      %v1454 = vpop.permute.xlu0 %1453
      %1455 = vrot.lane.b32.xlu0 %v1417, 64
      %v1456 = vpop.permute.xlu0 %1455
      %1457 = vrot.lane.b32.xlu0 %v1418, 64
      %v1458 = vpop.permute.xlu0 %1457
      %1459 = vrot.lane.b32.xlu0 %v1419, 64
      %v1460 = vpop.permute.xlu0 %1459
      %1461 = vrot.lane.b32.xlu0 %v1420, 64
      %v1462 = vpop.permute.xlu0 %1461
      %1463 = vrot.lane.b32.xlu0 %v1421, 64
      %v1464 = vpop.permute.xlu0 %1463
      %1465 = vrot.lane.b32.xlu0 %v1422, 64
      %v1466 = vpop.permute.xlu0 %1465
      %1467 = vrot.lane.b32.xlu0 %v1423, 64
      %v1468 = vpop.permute.xlu0 %1467
      %1469 = vrot.lane.b32.xlu0 %v1424, 64
      %v1470 = vpop.permute.xlu0 %1469
      %1471 = vrot.lane.b32.xlu0 %v1425, 64
      %v1472 = vpop.permute.xlu0 %1471
      %1473 = vrot.lane.b32.xlu0 %v1426, 64
      %v1474 = vpop.permute.xlu0 %1473
      %1491 = vst.msk [vmem:[#allocation3 + $0x18] sm:$0xff] %vm913, %v1444
      %1492 = vst.msk [vmem:[#allocation3 + $0x40] sm:$0xff] %vm913, %v1446
      %1493 = vst.msk [vmem:[#allocation3 + $0x68] sm:$0xff] %vm913, %v1448
      %1494 = vst.msk [vmem:[#allocation3 + $0x90] sm:$0xff] %vm913, %v1450
      %1495 = vst.msk [vmem:[#allocation3 + $0xb8] sm:$0xff] %vm913, %v1452
      %1496 = vst.msk [vmem:[#allocation3 + $0xe0] sm:$0xff] %vm913, %v1454
      %1497 = vst.msk [vmem:[#allocation3 + $0x108] sm:$0xff] %vm913, %v1456
      %1498 = vst.msk [vmem:[#allocation3 + $0x130] sm:$0xff] %vm913, %v1458
      %1499 = vst.msk [vmem:[#allocation3 + $0x158] sm:$0xff] %vm913, %v1460
      %1500 = vst.msk [vmem:[#allocation3 + $0x180] sm:$0xff] %vm913, %v1462
      %1501 = vst.msk [vmem:[#allocation3 + $0x1a8] sm:$0xff] %vm913, %v1464
      %1502 = vst.msk [vmem:[#allocation3 + $0x1d0] sm:$0xff] %vm913, %v1466
      %1503 = vst.msk [vmem:[#allocation3 + $0x1f8] sm:$0xff] %vm913, %v1468
      %1504 = vst.msk [vmem:[#allocation3 + $0x220] sm:$0xff] %vm913, %v1470
      %1505 = vst.msk [vmem:[#allocation3 + $0x248] sm:$0xff] %vm913, %v1472
      %1506 = vst.msk [vmem:[#allocation3 + $0x270] sm:$0xff] %vm913, %v1474
      %v1507 = vld [vmem:[%s1314 + $0x9] sm:$0xff]
      %v1508 = vld [vmem:[%s1314 + $0x11] sm:$0xff]
      %v1509 = vld [vmem:[%s1314 + $0x29] sm:$0xff]
      %v1510 = vld [vmem:[%s1314 + $0x31] sm:$0xff]
      %v1511 = vld [vmem:[%s1314 + $0x49] sm:$0xff]
      %v1512 = vld [vmem:[%s1314 + $0x51] sm:$0xff]
      %v1513 = vld [vmem:[%s1314 + $0x69] sm:$0xff]
      %v1514 = vld [vmem:[%s1314 + $0x71] sm:$0xff]
      %v1515 = vld [vmem:[%s1314 + $0x89] sm:$0xff]
      %v1516 = vld [vmem:[%s1314 + $0x91] sm:$0xff]
      %v1517 = vld [vmem:[%s1314 + $0xa9] sm:$0xff]
      %v1518 = vld [vmem:[%s1314 + $0xb1] sm:$0xff]
      %v1519 = vld [vmem:[%s1314 + $0xc9] sm:$0xff]
      %v1520 = vld [vmem:[%s1314 + $0xd1] sm:$0xff]
      %v1521 = vld [vmem:[%s1314 + $0xe9] sm:$0xff]
      %v1522 = vld [vmem:[%s1314 + $0xf1] sm:$0xff]
      %v1523 = vld [vmem:[%s1314 + $0x109] sm:$0xff]
      %v1524 = vld [vmem:[%s1314 + $0x111] sm:$0xff]
      %v1525 = vld [vmem:[%s1314 + $0x129] sm:$0xff]
      %v1526 = vld [vmem:[%s1314 + $0x131] sm:$0xff]
      %v1527 = vld [vmem:[%s1314 + $0x149] sm:$0xff]
      %v1528 = vld [vmem:[%s1314 + $0x151] sm:$0xff]
      %v1529 = vld [vmem:[%s1314 + $0x169] sm:$0xff]
      %v1530 = vld [vmem:[%s1314 + $0x171] sm:$0xff]
      %v1531 = vld [vmem:[%s1314 + $0x189] sm:$0xff]
      %v1532 = vld [vmem:[%s1314 + $0x191] sm:$0xff]
      %v1533 = vld [vmem:[%s1314 + $0x1a9] sm:$0xff]
      %v1534 = vld [vmem:[%s1314 + $0x1b1] sm:$0xff]
      %v1535 = vld [vmem:[%s1314 + $0x1c9] sm:$0xff]
      %v1536 = vld [vmem:[%s1314 + $0x1d1] sm:$0xff]
      %v1537 = vld [vmem:[%s1314 + $0x1e9] sm:$0xff]
      %v1538 = vld [vmem:[%s1314 + $0x1f1] sm:$0xff]
      %v1539 = vpack.c.bf16 %v1508, %v1507
      %v1540 = vpack.c.bf16 %v1510, %v1509
      %v1541 = vpack.c.bf16 %v1512, %v1511
      %v1542 = vpack.c.bf16 %v1514, %v1513
      %v1543 = vpack.c.bf16 %v1516, %v1515
      %v1544 = vpack.c.bf16 %v1518, %v1517
      %v1545 = vpack.c.bf16 %v1520, %v1519
      %v1546 = vpack.c.bf16 %v1522, %v1521
      %v1547 = vpack.c.bf16 %v1524, %v1523
      %v1548 = vpack.c.bf16 %v1526, %v1525
      %v1549 = vpack.c.bf16 %v1528, %v1527
      %v1550 = vpack.c.bf16 %v1530, %v1529
      %v1551 = vpack.c.bf16 %v1532, %v1531
      %v1552 = vpack.c.bf16 %v1534, %v1533
      %v1553 = vpack.c.bf16 %v1536, %v1535
      %v1554 = vpack.c.bf16 %v1538, %v1537
      %1555 = vst.msk [vmem:[#allocation3 + $0x20] sm:$0xff] %vm280, %v1539
      %1556 = vst.msk [vmem:[#allocation3 + $0x48] sm:$0xff] %vm280, %v1540
      %1557 = vst.msk [vmem:[#allocation3 + $0x70] sm:$0xff] %vm280, %v1541
      %1558 = vst.msk [vmem:[#allocation3 + $0x98] sm:$0xff] %vm280, %v1542
      %1559 = vst.msk [vmem:[#allocation3 + $0xc0] sm:$0xff] %vm280, %v1543
      %1560 = vst.msk [vmem:[#allocation3 + $0xe8] sm:$0xff] %vm280, %v1544
      %1561 = vst.msk [vmem:[#allocation3 + $0x110] sm:$0xff] %vm280, %v1545
      %1562 = vst.msk [vmem:[#allocation3 + $0x138] sm:$0xff] %vm280, %v1546
      %1563 = vst.msk [vmem:[#allocation3 + $0x160] sm:$0xff] %vm280, %v1547
      %1564 = vst.msk [vmem:[#allocation3 + $0x188] sm:$0xff] %vm280, %v1548
      %1565 = vst.msk [vmem:[#allocation3 + $0x1b0] sm:$0xff] %vm280, %v1549
      %1566 = vst.msk [vmem:[#allocation3 + $0x1d8] sm:$0xff] %vm280, %v1550
      %1567 = vst.msk [vmem:[#allocation3 + $0x200] sm:$0xff] %vm280, %v1551
      %1568 = vst.msk [vmem:[#allocation3 + $0x228] sm:$0xff] %vm280, %v1552
      %1569 = vst.msk [vmem:[#allocation3 + $0x250] sm:$0xff] %vm280, %v1553
      %1570 = vst.msk [vmem:[#allocation3 + $0x278] sm:$0xff] %vm280, %v1554
      %v1571 = vld [vmem:[#allocation3] sm:$0xff]
      %v1572 = vld [vmem:[#allocation3 + $0x8] sm:$0xff]
      %v1573 = vld [vmem:[#allocation3 + $0x10] sm:$0xff]
      %v1574 = vld [vmem:[#allocation3 + $0x18] sm:$0xff]
      %v1575 = vld [vmem:[#allocation3 + $0x20] sm:$0xff]
      %v1576 = vld [vmem:[#allocation3 + $0x28] sm:$0xff]
      %v1577 = vld [vmem:[#allocation3 + $0x30] sm:$0xff]
      %v1578 = vld [vmem:[#allocation3 + $0x38] sm:$0xff]
      %v1579 = vld [vmem:[#allocation3 + $0x40] sm:$0xff]
      %v1580 = vld [vmem:[#allocation3 + $0x48] sm:$0xff]
      %v1581 = vld [vmem:[#allocation3 + $0x50] sm:$0xff]
      %v1582 = vld [vmem:[#allocation3 + $0x58] sm:$0xff]
      %v1583 = vld [vmem:[#allocation3 + $0x60] sm:$0xff]
      %v1584 = vld [vmem:[#allocation3 + $0x68] sm:$0xff]
      %v1585 = vld [vmem:[#allocation3 + $0x70] sm:$0xff]
      %v1586 = vld [vmem:[#allocation3 + $0x78] sm:$0xff]
      %v1587 = vld [vmem:[#allocation3 + $0x80] sm:$0xff]
      %v1588 = vld [vmem:[#allocation3 + $0x88] sm:$0xff]
      %v1589 = vld [vmem:[#allocation3 + $0x90] sm:$0xff]
      %v1590 = vld [vmem:[#allocation3 + $0x98] sm:$0xff]
      %v1591 = vld [vmem:[#allocation3 + $0xa0] sm:$0xff]
      %v1592 = vld [vmem:[#allocation3 + $0xa8] sm:$0xff]
      %v1593 = vld [vmem:[#allocation3 + $0xb0] sm:$0xff]
      %v1594 = vld [vmem:[#allocation3 + $0xb8] sm:$0xff]
      %v1595 = vld [vmem:[#allocation3 + $0xc0] sm:$0xff]
      %v1596 = vld [vmem:[#allocation3 + $0xc8] sm:$0xff]
      %v1597 = vld [vmem:[#allocation3 + $0xd0] sm:$0xff]
      %v1598 = vld [vmem:[#allocation3 + $0xd8] sm:$0xff]
      %v1599 = vld [vmem:[#allocation3 + $0xe0] sm:$0xff]
      %v1600 = vld [vmem:[#allocation3 + $0xe8] sm:$0xff]
      %v1601 = vld [vmem:[#allocation3 + $0xf0] sm:$0xff]
      %v1602 = vld [vmem:[#allocation3 + $0xf8] sm:$0xff]
      %v1603 = vld [vmem:[#allocation3 + $0x100] sm:$0xff]
      %v1604 = vld [vmem:[#allocation3 + $0x108] sm:$0xff]
      %v1605 = vld [vmem:[#allocation3 + $0x110] sm:$0xff]
      %v1606 = vld [vmem:[#allocation3 + $0x118] sm:$0xff]
      %v1607 = vld [vmem:[#allocation3 + $0x120] sm:$0xff]
      %v1608 = vld [vmem:[#allocation3 + $0x128] sm:$0xff]
      %v1609 = vld [vmem:[#allocation3 + $0x130] sm:$0xff]
      %v1610 = vld [vmem:[#allocation3 + $0x138] sm:$0xff]
      %v1611 = vld [vmem:[#allocation3 + $0x140] sm:$0xff]
      %v1612 = vld [vmem:[#allocation3 + $0x148] sm:$0xff]
      %v1613 = vld [vmem:[#allocation3 + $0x150] sm:$0xff]
      %v1614 = vld [vmem:[#allocation3 + $0x158] sm:$0xff]
      %v1615 = vld [vmem:[#allocation3 + $0x160] sm:$0xff]
      %v1616 = vld [vmem:[#allocation3 + $0x168] sm:$0xff]
      %v1617 = vld [vmem:[#allocation3 + $0x170] sm:$0xff]
      %v1618 = vld [vmem:[#allocation3 + $0x178] sm:$0xff]
      %v1619 = vld [vmem:[#allocation3 + $0x180] sm:$0xff]
      %v1620 = vld [vmem:[#allocation3 + $0x188] sm:$0xff]
      %v1621 = vld [vmem:[#allocation3 + $0x190] sm:$0xff]
      %v1622 = vld [vmem:[#allocation3 + $0x198] sm:$0xff]
      %v1623 = vld [vmem:[#allocation3 + $0x1a0] sm:$0xff]
      %v1624 = vld [vmem:[#allocation3 + $0x1a8] sm:$0xff]
      %v1625 = vld [vmem:[#allocation3 + $0x1b0] sm:$0xff]
      %v1626 = vld [vmem:[#allocation3 + $0x1b8] sm:$0xff]
      %v1627 = vld [vmem:[#allocation3 + $0x1c0] sm:$0xff]
      %v1628 = vld [vmem:[#allocation3 + $0x1c8] sm:$0xff]
      %v1629 = vld [vmem:[#allocation3 + $0x1d0] sm:$0xff]
      %v1630 = vld [vmem:[#allocation3 + $0x1d8] sm:$0xff]
      %v1631 = vld [vmem:[#allocation3 + $0x1e0] sm:$0xff]
      %v1632 = vld [vmem:[#allocation3 + $0x1e8] sm:$0xff]
      %v1633 = vld [vmem:[#allocation3 + $0x1f0] sm:$0xff]
      %v1634 = vld [vmem:[#allocation3 + $0x1f8] sm:$0xff]
      %v1635 = vld [vmem:[#allocation3 + $0x200] sm:$0xff]
      %v1636 = vld [vmem:[#allocation3 + $0x208] sm:$0xff]
      %v1637 = vld [vmem:[#allocation3 + $0x210] sm:$0xff]
      %v1638 = vld [vmem:[#allocation3 + $0x218] sm:$0xff]
      %v1639 = vld [vmem:[#allocation3 + $0x220] sm:$0xff]
      %v1640 = vld [vmem:[#allocation3 + $0x228] sm:$0xff]
      %v1641 = vld [vmem:[#allocation3 + $0x230] sm:$0xff]
      %v1642 = vld [vmem:[#allocation3 + $0x238] sm:$0xff]
      %v1643 = vld [vmem:[#allocation3 + $0x240] sm:$0xff]
      %v1644 = vld [vmem:[#allocation3 + $0x248] sm:$0xff]
      %v1645 = vld [vmem:[#allocation3 + $0x250] sm:$0xff]
      %v1646 = vld [vmem:[#allocation3 + $0x258] sm:$0xff]
      %v1647 = vld [vmem:[#allocation3 + $0x260] sm:$0xff]
      %v1648 = vld [vmem:[#allocation3 + $0x268] sm:$0xff]
      %v1649 = vld [vmem:[#allocation3 + $0x270] sm:$0xff]
      %v1650 = vld [vmem:[#allocation3 + $0x278] sm:$0xff]
      %v1651 = vld [vmem:[%s3] sm:$0xf]
      %v1652 = vld [vmem:[%s3 + $0x4] sm:$0xf]
      %v1653 = vld [vmem:[%s3 + $0x8] sm:$0xf]
      %v1654 = vld [vmem:[%s3 + $0xc] sm:$0xf]
      %v1655 = vld [vmem:[%s3 + $0x10] sm:$0xf]
      %v1656 = vld [vmem:[%s3 + $0x14] sm:$0xf]
      %v1657 = vld [vmem:[%s3 + $0x18] sm:$0xf]
      %v1658 = vld [vmem:[%s3 + $0x1c] sm:$0xf]
      %v1659 = vld [vmem:[%s3 + $0x20] sm:$0xf]
      %v1660 = vld [vmem:[%s3 + $0x24] sm:$0xf]
      %v1661 = vld [vmem:[%s3 + $0x28] sm:$0xf]
      %v1662 = vld [vmem:[%s3 + $0x2c] sm:$0xf]
      %v1663 = vld [vmem:[%s3 + $0x30] sm:$0xf]
      %v1664 = vld [vmem:[%s3 + $0x34] sm:$0xf]
      %v1665 = vld [vmem:[%s3 + $0x38] sm:$0xf]
      %v1666 = vld [vmem:[%s3 + $0x3c] sm:$0xf]
      %v1667 = vld [vmem:[%s3 + $0x40] sm:$0xf]
      %v1668 = vld [vmem:[%s3 + $0x44] sm:$0xf]
      %v1669 = vld [vmem:[%s3 + $0x48] sm:$0xf]
      %v1670 = vld [vmem:[%s3 + $0x4c] sm:$0xf]
      %v1671 = vld [vmem:[%s3 + $0x50] sm:$0xf]
      %v1672 = vld [vmem:[%s3 + $0x54] sm:$0xf]
      %v1673 = vld [vmem:[%s3 + $0x58] sm:$0xf]
      %v1674 = vld [vmem:[%s3 + $0x5c] sm:$0xf]
      %v1675 = vld [vmem:[%s3 + $0x60] sm:$0xf]
      %v1676 = vld [vmem:[%s3 + $0x64] sm:$0xf]
      %v1677 = vld [vmem:[%s3 + $0x68] sm:$0xf]
      %v1678 = vld [vmem:[%s3 + $0x6c] sm:$0xf]
      %v1679 = vld [vmem:[%s3 + $0x70] sm:$0xf]
      %v1680 = vld [vmem:[%s3 + $0x74] sm:$0xf]
      %v1681 = vld [vmem:[%s3 + $0x78] sm:$0xf]
      %v1682 = vld [vmem:[%s3 + $0x7c] sm:$0xf]
      %v1683 = vld [vmem:[%s3 + $0x80] sm:$0xf]
      %v1684 = vld [vmem:[%s3 + $0x84] sm:$0xf]
      %v1685 = vld [vmem:[%s3 + $0x88] sm:$0xf]
      %v1686 = vld [vmem:[%s3 + $0x8c] sm:$0xf]
      %v1687 = vld [vmem:[%s3 + $0x90] sm:$0xf]
      %v1688 = vld [vmem:[%s3 + $0x94] sm:$0xf]
      %v1689 = vld [vmem:[%s3 + $0x98] sm:$0xf]
      %v1690 = vld [vmem:[%s3 + $0x9c] sm:$0xf]
      %v1691 = vld [vmem:[%s3 + $0xa0] sm:$0xf]
      %v1692 = vld [vmem:[%s3 + $0xa4] sm:$0xf]
      %v1693 = vld [vmem:[%s3 + $0xa8] sm:$0xf]
      %v1694 = vld [vmem:[%s3 + $0xac] sm:$0xf]
      %v1695 = vld [vmem:[%s3 + $0xb0] sm:$0xf]
      %v1696 = vld [vmem:[%s3 + $0xb4] sm:$0xf]
      %v1697 = vld [vmem:[%s3 + $0xb8] sm:$0xf]
      %v1698 = vld [vmem:[%s3 + $0xbc] sm:$0xf]
      %v1699 = vld [vmem:[%s3 + $0xc0] sm:$0xf]
      %v1700 = vld [vmem:[%s3 + $0xc4] sm:$0xf]
      %v1701 = vld [vmem:[%s3 + $0xc8] sm:$0xf]
      %v1702 = vld [vmem:[%s3 + $0xcc] sm:$0xf]
      %v1703 = vld [vmem:[%s3 + $0xd0] sm:$0xf]
      %v1704 = vld [vmem:[%s3 + $0xd4] sm:$0xf]
      %v1705 = vld [vmem:[%s3 + $0xd8] sm:$0xf]
      %v1706 = vld [vmem:[%s3 + $0xdc] sm:$0xf]
      %v1707 = vld [vmem:[%s3 + $0xe0] sm:$0xf]
      %v1708 = vld [vmem:[%s3 + $0xe4] sm:$0xf]
      %v1709 = vld [vmem:[%s3 + $0xe8] sm:$0xf]
      %v1710 = vld [vmem:[%s3 + $0xec] sm:$0xf]
      %v1711 = vld [vmem:[%s3 + $0xf0] sm:$0xf]
      %v1712 = vld [vmem:[%s3 + $0xf4] sm:$0xf]
      %v1713 = vld [vmem:[%s3 + $0xf8] sm:$0xf]
      %v1714 = vld [vmem:[%s3 + $0xfc] sm:$0xf]
      %v1715 = vld [vmem:[%s3 + $0x100] sm:$0xf]
      %v1716 = vld [vmem:[%s3 + $0x104] sm:$0xf]
      %v1717 = vld [vmem:[%s3 + $0x108] sm:$0xf]
      %v1718 = vld [vmem:[%s3 + $0x10c] sm:$0xf]
      %v1719 = vld [vmem:[%s3 + $0x110] sm:$0xf]
      %v1720 = vld [vmem:[%s3 + $0x114] sm:$0xf]
      %v1721 = vld [vmem:[%s3 + $0x118] sm:$0xf]
      %v1722 = vld [vmem:[%s3 + $0x11c] sm:$0xf]
      %v1723 = vld [vmem:[%s4] sm:$0x1]
      %v1725 = vlaneseq
      %v1726 = vshrl.u32 %v1725, 7
      %v1727 = vsub.s32 0, %v1726
      %v1728 = vrot.slane %v1723, %v1727
      %v1802 = vunpack.c.l.b16 %v1651
      %v1803 = vunpack.c.l.b16 %v1652
      %v1804 = vunpack.c.l.b16 %v1653
      %v1805 = vunpack.c.l.b16 %v1654
      %v1806 = vunpack.c.l.b16 %v1655
      %v1807 = vunpack.c.l.b16 %v1656
      %v1808 = vunpack.c.l.b16 %v1657
      %v1809 = vunpack.c.l.b16 %v1658
      %v1810 = vunpack.c.l.b16 %v1659
      %v1811 = vunpack.c.l.b16 %v1660
      %v1812 = vunpack.c.l.b16 %v1661
      %v1813 = vunpack.c.l.b16 %v1662
      %v1814 = vunpack.c.l.b16 %v1663
      %v1815 = vunpack.c.l.b16 %v1664
      %v1816 = vunpack.c.l.b16 %v1665
      %v1817 = vunpack.c.l.b16 %v1666
      %v1818 = vunpack.c.l.b16 %v1667
      %v1819 = vunpack.c.l.b16 %v1668
      %v1820 = vunpack.c.l.b16 %v1669
      %v1821 = vunpack.c.l.b16 %v1670
      %v1822 = vunpack.c.l.b16 %v1671
      %v1823 = vunpack.c.l.b16 %v1672
      %v1824 = vunpack.c.l.b16 %v1673
      %v1825 = vunpack.c.l.b16 %v1674
      %v1826 = vunpack.c.l.b16 %v1675
      %v1827 = vunpack.c.l.b16 %v1676
      %v1828 = vunpack.c.l.b16 %v1677
      %v1829 = vunpack.c.l.b16 %v1678
      %v1830 = vunpack.c.l.b16 %v1679
      %v1831 = vunpack.c.l.b16 %v1680
      %v1832 = vunpack.c.l.b16 %v1681
      %v1833 = vunpack.c.l.b16 %v1682
      %v1834 = vunpack.c.l.b16 %v1683
      %v1835 = vunpack.c.l.b16 %v1684
      %v1836 = vunpack.c.l.b16 %v1685
      %v1837 = vunpack.c.l.b16 %v1686
      %v1838 = vunpack.c.l.b16 %v1687
      %v1839 = vunpack.c.l.b16 %v1688
      %v1840 = vunpack.c.l.b16 %v1689
      %v1841 = vunpack.c.l.b16 %v1690
      %v1842 = vunpack.c.l.b16 %v1691
      %v1843 = vunpack.c.l.b16 %v1692
      %v1844 = vunpack.c.l.b16 %v1693
      %v1845 = vunpack.c.l.b16 %v1694
      %v1846 = vunpack.c.l.b16 %v1695
      %v1847 = vunpack.c.l.b16 %v1696
      %v1848 = vunpack.c.l.b16 %v1697
      %v1849 = vunpack.c.l.b16 %v1698
      %v1850 = vunpack.c.l.b16 %v1699
      %v1851 = vunpack.c.l.b16 %v1700
      %v1852 = vunpack.c.l.b16 %v1701
      %v1853 = vunpack.c.l.b16 %v1702
      %v1854 = vunpack.c.l.b16 %v1703
      %v1855 = vunpack.c.l.b16 %v1704
      %v1856 = vunpack.c.l.b16 %v1705
      %v1857 = vunpack.c.l.b16 %v1706
      %v1858 = vunpack.c.l.b16 %v1707
      %v1859 = vunpack.c.l.b16 %v1708
      %v1860 = vunpack.c.l.b16 %v1709
      %v1861 = vunpack.c.l.b16 %v1710
      %v1862 = vunpack.c.l.b16 %v1711
      %v1863 = vunpack.c.l.b16 %v1712
      %v1864 = vunpack.c.l.b16 %v1713
      %v1865 = vunpack.c.l.b16 %v1714
      %v1866 = vunpack.c.l.b16 %v1715
      %v1867 = vunpack.c.l.b16 %v1716
      %v1868 = vunpack.c.l.b16 %v1717
      %v1869 = vunpack.c.l.b16 %v1718
      %v1870 = vunpack.c.l.b16 %v1719
      %v1871 = vunpack.c.l.b16 %v1720
      %v1872 = vunpack.c.l.b16 %v1721
      %v1873 = vunpack.c.l.b16 %v1722
      %v1874 = vpack.c.b16 %v1803, %v1802
      %v1875 = vpack.c.b16 %v1805, %v1804
      %v1876 = vpack.c.b16 %v1807, %v1806
      %v1877 = vpack.c.b16 %v1809, %v1808
      %v1878 = vpack.c.b16 %v1811, %v1810
      %v1879 = vpack.c.b16 %v1813, %v1812
      %v1880 = vpack.c.b16 %v1815, %v1814
      %v1881 = vpack.c.b16 %v1817, %v1816
      %v1882 = vpack.c.b16 %v1819, %v1818
      %v1883 = vpack.c.b16 %v1821, %v1820
      %v1884 = vpack.c.b16 %v1823, %v1822
      %v1885 = vpack.c.b16 %v1825, %v1824
      %v1886 = vpack.c.b16 %v1827, %v1826
      %v1887 = vpack.c.b16 %v1829, %v1828
      %v1888 = vpack.c.b16 %v1831, %v1830
      %v1889 = vpack.c.b16 %v1833, %v1832
      %v1890 = vpack.c.b16 %v1835, %v1834
      %v1891 = vpack.c.b16 %v1837, %v1836
      %v1892 = vpack.c.b16 %v1839, %v1838
      %v1893 = vpack.c.b16 %v1841, %v1840
      %v1894 = vpack.c.b16 %v1843, %v1842
      %v1895 = vpack.c.b16 %v1845, %v1844
      %v1896 = vpack.c.b16 %v1847, %v1846
      %v1897 = vpack.c.b16 %v1849, %v1848
      %v1898 = vpack.c.b16 %v1851, %v1850
      %v1899 = vpack.c.b16 %v1853, %v1852
      %v1900 = vpack.c.b16 %v1855, %v1854
      %v1901 = vpack.c.b16 %v1857, %v1856
      %v1902 = vpack.c.b16 %v1859, %v1858
      %v1903 = vpack.c.b16 %v1861, %v1860
      %v1904 = vpack.c.b16 %v1863, %v1862
      %v1905 = vpack.c.b16 %v1865, %v1864
      %v1906 = vpack.c.b16 %v1867, %v1866
      %v1907 = vpack.c.b16 %v1869, %v1868
      %v1908 = vpack.c.b16 %v1871, %v1870
      %v1909 = vpack.c.b16 %v1873, %v1872
      %v1947 = vsel %vm280, %v1575, 0
      %v1950 = vsel %vm280, %v1580, 0
      %v1953 = vsel %vm280, %v1585, 0
      %v1956 = vsel %vm280, %v1590, 0
      %v1959 = vsel %vm280, %v1595, 0
      %v1962 = vsel %vm280, %v1600, 0
      %v1965 = vsel %vm280, %v1605, 0
      %v1968 = vsel %vm280, %v1610, 0
      %v1971 = vsel %vm280, %v1615, 0
      %v1974 = vsel %vm280, %v1620, 0
      %v1977 = vsel %vm280, %v1625, 0
      %v1980 = vsel %vm280, %v1630, 0
      %v1983 = vsel %vm280, %v1635, 0
      %v1986 = vsel %vm280, %v1640, 0
      %v1989 = vsel %vm280, %v1645, 0
      %v1992 = vsel %vm280, %v1650, 0
      %1994 = vmatprep.subr.bf16.mxu0 0
      %1995 = vmatpush1.bf16.msra.mxu0 %v1874
      %1996 = vmatprep.subr.bf16.mxu0 0
      %1997 = vmatpush1.bf16.msra.mxu0 %v1875
      %1998 = vmatprep.subr.bf16.mxu0 0
      %1999 = vmatpush1.bf16.msra.mxu0 %v1876
      %2000 = vmatprep.subr.bf16.mxu0 0
      %2001 = vmatpush1.bf16.msra.mxu0 %v1877
      %2002 = vmatprep.subr.bf16.mxu0 0
      %2003 = vmatpush1.bf16.msra.mxu0 %v1878
      %2004 = vmatprep.subr.bf16.mxu0 0
      %2005 = vmatpush1.bf16.msra.mxu0 %v1879
      %2006 = vmatprep.subr.bf16.mxu0 0
      %2007 = vmatpush1.bf16.msra.mxu0 %v1880
      %2008 = vmatprep.subr.bf16.mxu0 0
      %2009 = vmatpush1.bf16.msra.mxu0 %v1881
      %2010 = vmatprep.subr.bf16.mxu0 0
      %2011 = vmatpush1.bf16.msra.mxu0 %v1882
      %2012 = vmatprep.subr.bf16.mxu0 0
      %2013 = vmatpush1.bf16.msra.mxu0 %v1883
      %2014 = vmatprep.subr.bf16.mxu0 0
      %2015 = vmatpush1.bf16.msra.mxu0 %v1884
      %2016 = vmatprep.subr.bf16.mxu0 0
      %2017 = vmatpush1.bf16.msra.mxu0 %v1885
      %2018 = vmatprep.subr.bf16.mxu0 0
      %2019 = vmatpush1.bf16.msra.mxu0 %v1886
      %2020 = vmatprep.subr.bf16.mxu0 0
      %2021 = vmatpush1.bf16.msra.mxu0 %v1887
      %2022 = vmatprep.subr.bf16.mxu0 0
      %2023 = vmatpush1.bf16.msra.mxu0 %v1888
      %2024 = vmatprep.subr.bf16.mxu0 0
      %2025 = vmatpush1.bf16.msra.mxu0 %v1889
      %2026 = vmatprep.mubr.bf16.mxu0 %v1572
      %2027 = vmatmul.mubr.bf16.gmra.mrb[0].mxu0 %v1571
      %v2028 = vpop.f32.mrb[0].mxu0
      %v2029 = vadd.f32 %v1728, %v2028
      %v2030 = vpop.f32.mrb[0].mxu0
      %v2031 = vpop.f32.mrb[0].mxu0
      %v2032 = vadd.f32 %v1728, %v2031
      %v2033 = vpop.f32.mrb[0].mxu0
      %2034 = vmatprep.mubr.bf16.mxu0 %v1577
      %2035 = vmatmul.mubr.bf16.gmra.mrb[0].mxu0 %v1576
      %v2036 = vpop.f32.mrb[0].mxu0
      %v2037 = vadd.f32 %v1728, %v2036
      %v2038 = vpop.f32.mrb[0].mxu0
      %v2039 = vpop.f32.mrb[0].mxu0
      %v2040 = vadd.f32 %v1728, %v2039
      %v2041 = vpop.f32.mrb[0].mxu0
      %2042 = vmatprep.mubr.bf16.mxu0 %v1582
      %2043 = vmatmul.mubr.bf16.gmra.mrb[0].mxu0 %v1581
      %v2044 = vpop.f32.mrb[0].mxu0
      %v2045 = vadd.f32 %v1728, %v2044
      %v2046 = vpop.f32.mrb[0].mxu0
      %v2047 = vpop.f32.mrb[0].mxu0
      %v2048 = vadd.f32 %v1728, %v2047
      %v2049 = vpop.f32.mrb[0].mxu0
      %2050 = vmatprep.mubr.bf16.mxu0 %v1587
      %2051 = vmatmul.mubr.bf16.gmra.mrb[0].mxu0 %v1586
      %v2052 = vpop.f32.mrb[0].mxu0
      %v2053 = vadd.f32 %v1728, %v2052
      %v2054 = vpop.f32.mrb[0].mxu0
      %v2055 = vpop.f32.mrb[0].mxu0
      %v2056 = vadd.f32 %v1728, %v2055
      %v2057 = vpop.f32.mrb[0].mxu0
      %2058 = vmatprep.mubr.bf16.mxu0 %v1592
      %2059 = vmatmul.mubr.bf16.gmra.mrb[0].mxu0 %v1591
      %v2060 = vpop.f32.mrb[0].mxu0
      %v2061 = vadd.f32 %v1728, %v2060
      %v2062 = vpop.f32.mrb[0].mxu0
      %v2063 = vpop.f32.mrb[0].mxu0
      %v2064 = vadd.f32 %v1728, %v2063
      %v2065 = vpop.f32.mrb[0].mxu0
      %2066 = vmatprep.mubr.bf16.mxu0 %v1597
      %2067 = vmatmul.mubr.bf16.gmra.mrb[0].mxu0 %v1596
      %v2068 = vpop.f32.mrb[0].mxu0
      %v2069 = vadd.f32 %v1728, %v2068
      %v2070 = vpop.f32.mrb[0].mxu0
      %v2071 = vpop.f32.mrb[0].mxu0
      %v2072 = vadd.f32 %v1728, %v2071
      %v2073 = vpop.f32.mrb[0].mxu0
      %2074 = vmatprep.mubr.bf16.mxu0 %v1602
      %2075 = vmatmul.mubr.bf16.gmra.mrb[0].mxu0 %v1601
      %v2076 = vpop.f32.mrb[0].mxu0
      %v2077 = vadd.f32 %v1728, %v2076
      %v2078 = vpop.f32.mrb[0].mxu0
      %v2079 = vpop.f32.mrb[0].mxu0
      %v2080 = vadd.f32 %v1728, %v2079
      %v2081 = vpop.f32.mrb[0].mxu0
      %2082 = vmatprep.mubr.bf16.mxu0 %v1607
      %2083 = vmatmul.mubr.bf16.gmra.mrb[0].mxu0 %v1606
      %v2084 = vpop.f32.mrb[0].mxu0
      %v2085 = vadd.f32 %v1728, %v2084
      %v2086 = vpop.f32.mrb[0].mxu0
      %v2087 = vpop.f32.mrb[0].mxu0
      %v2088 = vadd.f32 %v1728, %v2087
      %v2089 = vpop.f32.mrb[0].mxu0
      %2090 = vmatprep.mubr.bf16.mxu0 %v1612
      %2091 = vmatmul.mubr.bf16.gmra.mrb[0].mxu0 %v1611
      %v2092 = vpop.f32.mrb[0].mxu0
      %v2093 = vadd.f32 %v1728, %v2092
      %v2094 = vpop.f32.mrb[0].mxu0
      %v2095 = vpop.f32.mrb[0].mxu0
      %v2096 = vadd.f32 %v1728, %v2095
      %v2097 = vpop.f32.mrb[0].mxu0
      %2098 = vmatprep.mubr.bf16.mxu0 %v1617
      %2099 = vmatmul.mubr.bf16.gmra.mrb[0].mxu0 %v1616
      %v2100 = vpop.f32.mrb[0].mxu0
      %v2101 = vadd.f32 %v1728, %v2100
      %v2102 = vpop.f32.mrb[0].mxu0
      %v2103 = vpop.f32.mrb[0].mxu0
      %v2104 = vadd.f32 %v1728, %v2103
      %v2105 = vpop.f32.mrb[0].mxu0
      %2106 = vmatprep.mubr.bf16.mxu0 %v1622
      %2107 = vmatmul.mubr.bf16.gmra.mrb[0].mxu0 %v1621
      %v2108 = vpop.f32.mrb[0].mxu0
      %v2109 = vadd.f32 %v1728, %v2108
      %v2110 = vpop.f32.mrb[0].mxu0
      %v2111 = vpop.f32.mrb[0].mxu0
      %v2112 = vadd.f32 %v1728, %v2111
      %v2113 = vpop.f32.mrb[0].mxu0
      %2114 = vmatprep.mubr.bf16.mxu0 %v1627
      %2115 = vmatmul.mubr.bf16.gmra.mrb[0].mxu0 %v1626
      %v2116 = vpop.f32.mrb[0].mxu0
      %v2117 = vadd.f32 %v1728, %v2116
      %v2118 = vpop.f32.mrb[0].mxu0
      %v2119 = vpop.f32.mrb[0].mxu0
      %v2120 = vadd.f32 %v1728, %v2119
      %v2121 = vpop.f32.mrb[0].mxu0
      %2122 = vmatprep.mubr.bf16.mxu0 %v1632
      %2123 = vmatmul.mubr.bf16.gmra.mrb[0].mxu0 %v1631
      %v2124 = vpop.f32.mrb[0].mxu0
      %v2125 = vadd.f32 %v1728, %v2124
      %v2126 = vpop.f32.mrb[0].mxu0
      %v2127 = vpop.f32.mrb[0].mxu0
      %v2128 = vadd.f32 %v1728, %v2127
      %v2129 = vpop.f32.mrb[0].mxu0
      %2130 = vmatprep.mubr.bf16.mxu0 %v1637
      %2131 = vmatmul.mubr.bf16.gmra.mrb[0].mxu0 %v1636
      %v2132 = vpop.f32.mrb[0].mxu0
      %v2133 = vadd.f32 %v1728, %v2132
      %v2134 = vpop.f32.mrb[0].mxu0
      %v2135 = vpop.f32.mrb[0].mxu0
      %v2136 = vadd.f32 %v1728, %v2135
      %v2137 = vpop.f32.mrb[0].mxu0
      %2138 = vmatprep.mubr.bf16.mxu0 %v1642
      %2139 = vmatmul.mubr.bf16.gmra.mrb[0].mxu0 %v1641
      %v2140 = vpop.f32.mrb[0].mxu0
      %v2141 = vadd.f32 %v1728, %v2140
      %v2142 = vpop.f32.mrb[0].mxu0
      %v2143 = vpop.f32.mrb[0].mxu0
      %v2144 = vadd.f32 %v1728, %v2143
      %v2145 = vpop.f32.mrb[0].mxu0
      %2146 = vmatprep.mubr.bf16.mxu0 %v1647
      %2147 = vmatmul.mubr.bf16.gmra.mrb[0].mxu0 %v1646
      %v2148 = vpop.f32.mrb[0].mxu0
      %v2149 = vadd.f32 %v1728, %v2148
      %v2150 = vpop.f32.mrb[0].mxu0
      %v2151 = vpop.f32.mrb[0].mxu0
      %v2152 = vadd.f32 %v1728, %v2151
      %v2153 = vpop.f32.mrb[0].mxu0
      %2154 = vdwg.mxu0
      %2155 = vmatprep.subr.bf16.mxu0 0
      %2156 = vmatpush1.bf16.msra.mxu0 %v1890
      %2157 = vmatprep.subr.bf16.mxu0 0
      %2158 = vmatpush1.bf16.msra.mxu0 %v1891
      %2159 = vmatprep.subr.bf16.mxu0 0
      %2160 = vmatpush1.bf16.msra.mxu0 %v1892
      %2161 = vmatprep.subr.bf16.mxu0 0
      %2162 = vmatpush1.bf16.msra.mxu0 %v1893
      %2163 = vmatprep.subr.bf16.mxu0 0
      %2164 = vmatpush1.bf16.msra.mxu0 %v1894
      %2165 = vmatprep.subr.bf16.mxu0 0
      %2166 = vmatpush1.bf16.msra.mxu0 %v1895
      %2167 = vmatprep.subr.bf16.mxu0 0
      %2168 = vmatpush1.bf16.msra.mxu0 %v1896
      %2169 = vmatprep.subr.bf16.mxu0 0
      %2170 = vmatpush1.bf16.msra.mxu0 %v1897
      %2171 = vmatprep.subr.bf16.mxu0 0
      %2172 = vmatpush1.bf16.msra.mxu0 %v1898
      %2173 = vmatprep.subr.bf16.mxu0 0
      %2174 = vmatpush1.bf16.msra.mxu0 %v1899
      %2175 = vmatprep.subr.bf16.mxu0 0
      %2176 = vmatpush1.bf16.msra.mxu0 %v1900
      %2177 = vmatprep.subr.bf16.mxu0 0
      %2178 = vmatpush1.bf16.msra.mxu0 %v1901
      %2179 = vmatprep.subr.bf16.mxu0 0
      %2180 = vmatpush1.bf16.msra.mxu0 %v1902
      %2181 = vmatprep.subr.bf16.mxu0 0
      %2182 = vmatpush1.bf16.msra.mxu0 %v1903
      %2183 = vmatprep.subr.bf16.mxu0 0
      %2184 = vmatpush1.bf16.msra.mxu0 %v1904
      %2185 = vmatprep.subr.bf16.mxu0 0
      %2186 = vmatpush1.bf16.msra.mxu0 %v1905
      %2187 = vmatprep.mubr.bf16.mxu0 %v1574
      %2188 = vmatmul.mubr.bf16.gmra.mrb[0].mxu0 %v1573
      %v2189 = vpop.f32.mrb[0].mxu0
      %v2190 = vadd.f32 %v2029, %v2189
      %v2191 = vpop.f32.mrb[0].mxu0
      %v2192 = vpop.f32.mrb[0].mxu0
      %v2193 = vadd.f32 %v2032, %v2192
      %v2194 = vpop.f32.mrb[0].mxu0
      %2195 = vmatprep.mubr.bf16.mxu0 %v1579
      %2196 = vmatmul.mubr.bf16.gmra.mrb[0].mxu0 %v1578
      %v2197 = vpop.f32.mrb[0].mxu0
      %v2198 = vadd.f32 %v2037, %v2197
      %v2199 = vpop.f32.mrb[0].mxu0
      %v2200 = vpop.f32.mrb[0].mxu0
      %v2201 = vadd.f32 %v2040, %v2200
      %v2202 = vpop.f32.mrb[0].mxu0
      %2203 = vmatprep.mubr.bf16.mxu0 %v1584
      %2204 = vmatmul.mubr.bf16.gmra.mrb[0].mxu0 %v1583
      %v2205 = vpop.f32.mrb[0].mxu0
      %v2206 = vadd.f32 %v2045, %v2205
      %v2207 = vpop.f32.mrb[0].mxu0
      %v2208 = vpop.f32.mrb[0].mxu0
      %v2209 = vadd.f32 %v2048, %v2208
      %v2210 = vpop.f32.mrb[0].mxu0
      %2211 = vmatprep.mubr.bf16.mxu0 %v1589
      %2212 = vmatmul.mubr.bf16.gmra.mrb[0].mxu0 %v1588
      %v2213 = vpop.f32.mrb[0].mxu0
      %v2214 = vadd.f32 %v2053, %v2213
      %v2215 = vpop.f32.mrb[0].mxu0
      %v2216 = vpop.f32.mrb[0].mxu0
      %v2217 = vadd.f32 %v2056, %v2216
      %v2218 = vpop.f32.mrb[0].mxu0
      %2219 = vmatprep.mubr.bf16.mxu0 %v1594
      %2220 = vmatmul.mubr.bf16.gmra.mrb[0].mxu0 %v1593
      %v2221 = vpop.f32.mrb[0].mxu0
      %v2222 = vadd.f32 %v2061, %v2221
      %v2223 = vpop.f32.mrb[0].mxu0
      %v2224 = vpop.f32.mrb[0].mxu0
      %v2225 = vadd.f32 %v2064, %v2224
      %v2226 = vpop.f32.mrb[0].mxu0
      %2227 = vmatprep.mubr.bf16.mxu0 %v1599
      %2228 = vmatmul.mubr.bf16.gmra.mrb[0].mxu0 %v1598
      %v2229 = vpop.f32.mrb[0].mxu0
      %v2230 = vadd.f32 %v2069, %v2229
      %v2231 = vpop.f32.mrb[0].mxu0
      %v2232 = vpop.f32.mrb[0].mxu0
      %v2233 = vadd.f32 %v2072, %v2232
      %v2234 = vpop.f32.mrb[0].mxu0
      %2235 = vmatprep.mubr.bf16.mxu0 %v1604
      %2236 = vmatmul.mubr.bf16.gmra.mrb[0].mxu0 %v1603
      %v2237 = vpop.f32.mrb[0].mxu0
      %v2238 = vadd.f32 %v2077, %v2237
      %v2239 = vpop.f32.mrb[0].mxu0
      %v2240 = vpop.f32.mrb[0].mxu0
      %v2241 = vadd.f32 %v2080, %v2240
      %v2242 = vpop.f32.mrb[0].mxu0
      %2243 = vmatprep.mubr.bf16.mxu0 %v1609
      %2244 = vmatmul.mubr.bf16.gmra.mrb[0].mxu0 %v1608
      %v2245 = vpop.f32.mrb[0].mxu0
      %v2246 = vadd.f32 %v2085, %v2245
      %v2247 = vpop.f32.mrb[0].mxu0
      %v2248 = vpop.f32.mrb[0].mxu0
      %v2249 = vadd.f32 %v2088, %v2248
      %v2250 = vpop.f32.mrb[0].mxu0
      %2251 = vmatprep.mubr.bf16.mxu0 %v1614
      %2252 = vmatmul.mubr.bf16.gmra.mrb[0].mxu0 %v1613
      %v2253 = vpop.f32.mrb[0].mxu0
      %v2254 = vadd.f32 %v2093, %v2253
      %v2255 = vpop.f32.mrb[0].mxu0
      %v2256 = vpop.f32.mrb[0].mxu0
      %v2257 = vadd.f32 %v2096, %v2256
      %v2258 = vpop.f32.mrb[0].mxu0
      %2259 = vmatprep.mubr.bf16.mxu0 %v1619
      %2260 = vmatmul.mubr.bf16.gmra.mrb[0].mxu0 %v1618
      %v2261 = vpop.f32.mrb[0].mxu0
      %v2262 = vadd.f32 %v2101, %v2261
      %v2263 = vpop.f32.mrb[0].mxu0
      %v2264 = vpop.f32.mrb[0].mxu0
      %v2265 = vadd.f32 %v2104, %v2264
      %v2266 = vpop.f32.mrb[0].mxu0
      %2267 = vmatprep.mubr.bf16.mxu0 %v1624
      %2268 = vmatmul.mubr.bf16.gmra.mrb[0].mxu0 %v1623
      %v2269 = vpop.f32.mrb[0].mxu0
      %v2270 = vadd.f32 %v2109, %v2269
      %v2271 = vpop.f32.mrb[0].mxu0
      %v2272 = vpop.f32.mrb[0].mxu0
      %v2273 = vadd.f32 %v2112, %v2272
      %v2274 = vpop.f32.mrb[0].mxu0
      %2275 = vmatprep.mubr.bf16.mxu0 %v1629
      %2276 = vmatmul.mubr.bf16.gmra.mrb[0].mxu0 %v1628
      %v2277 = vpop.f32.mrb[0].mxu0
      %v2278 = vadd.f32 %v2117, %v2277
      %v2279 = vpop.f32.mrb[0].mxu0
      %v2280 = vpop.f32.mrb[0].mxu0
      %v2281 = vadd.f32 %v2120, %v2280
      %v2282 = vpop.f32.mrb[0].mxu0
      %2283 = vmatprep.mubr.bf16.mxu0 %v1634
      %2284 = vmatmul.mubr.bf16.gmra.mrb[0].mxu0 %v1633
      %v2285 = vpop.f32.mrb[0].mxu0
      %v2286 = vadd.f32 %v2125, %v2285
      %v2287 = vpop.f32.mrb[0].mxu0
      %v2288 = vpop.f32.mrb[0].mxu0
      %v2289 = vadd.f32 %v2128, %v2288
      %v2290 = vpop.f32.mrb[0].mxu0
      %2291 = vmatprep.mubr.bf16.mxu0 %v1639
      %2292 = vmatmul.mubr.bf16.gmra.mrb[0].mxu0 %v1638
      %v2293 = vpop.f32.mrb[0].mxu0
      %v2294 = vadd.f32 %v2133, %v2293
      %v2295 = vpop.f32.mrb[0].mxu0
      %v2296 = vpop.f32.mrb[0].mxu0
      %v2297 = vadd.f32 %v2136, %v2296
      %v2298 = vpop.f32.mrb[0].mxu0
      %2299 = vmatprep.mubr.bf16.mxu0 %v1644
      %2300 = vmatmul.mubr.bf16.gmra.mrb[0].mxu0 %v1643
      %v2301 = vpop.f32.mrb[0].mxu0
      %v2302 = vadd.f32 %v2141, %v2301
      %v2303 = vpop.f32.mrb[0].mxu0
      %v2304 = vpop.f32.mrb[0].mxu0
      %v2305 = vadd.f32 %v2144, %v2304
      %v2306 = vpop.f32.mrb[0].mxu0
      %2307 = vmatprep.mubr.bf16.mxu0 %v1649
      %2308 = vmatmul.mubr.bf16.gmra.mrb[0].mxu0 %v1648
      %v2309 = vpop.f32.mrb[0].mxu0
      %v2310 = vadd.f32 %v2149, %v2309
      %v2311 = vpop.f32.mrb[0].mxu0
      %v2312 = vpop.f32.mrb[0].mxu0
      %v2313 = vadd.f32 %v2152, %v2312
      %v2314 = vpop.f32.mrb[0].mxu0
      %2315 = vdwg.mxu0
      %2316 = vmatprep.subr.bf16.mxu0 0
      %2317 = vmatpush1.bf16.msra.mxu0 %v1906
      %2318 = vmatprep.subr.bf16.mxu0 0
      %2319 = vmatpush1.bf16.msra.mxu0 %v1907
      %2320 = vmatprep.subr.bf16.mxu0 0
      %2321 = vmatpush1.bf16.msra.mxu0 %v1908
      %2322 = vmatprep.subr.bf16.mxu0 0
      %2323 = vmatpush1.bf16.msra.mxu0 %v1909
      %2324 = vmatprep.subr.bf16.mxu0 0
      %2325 = vmatpush1.bf16.msra.mxu0 0
      %2326 = vmatprep.subr.bf16.mxu0 0
      %2327 = vmatpush1.bf16.msra.mxu0 0
      %2328 = vmatprep.subr.bf16.mxu0 0
      %2329 = vmatpush1.bf16.msra.mxu0 0
      %2330 = vmatprep.subr.bf16.mxu0 0
      %2331 = vmatpush1.bf16.msra.mxu0 0
      %2332 = vmatprep.subr.bf16.mxu0 0
      %2333 = vmatpush1.bf16.msra.mxu0 0
      %2334 = vmatprep.subr.bf16.mxu0 0
      %2335 = vmatpush1.bf16.msra.mxu0 0
      %2336 = vmatprep.subr.bf16.mxu0 0
      %2337 = vmatpush1.bf16.msra.mxu0 0
      %2338 = vmatprep.subr.bf16.mxu0 0
      %2339 = vmatpush1.bf16.msra.mxu0 0
      %2340 = vmatprep.subr.bf16.mxu0 0
      %2341 = vmatpush1.bf16.msra.mxu0 0
      %2342 = vmatprep.subr.bf16.mxu0 0
      %2343 = vmatpush1.bf16.msra.mxu0 0
      %2344 = vmatprep.subr.bf16.mxu0 0
      %2345 = vmatpush1.bf16.msra.mxu0 0
      %2346 = vmatprep.subr.bf16.mxu0 0
      %2347 = vmatpush1.bf16.msra.mxu0 0
      %2348 = vmatprep.mubr.bf16.mxu0 0
      %2349 = vmatmul.mubr.bf16.gmra.mrb[0].mxu0 %v1947
      %v2350 = vpop.f32.mrb[0].mxu0
      %v2351 = vadd.f32 %v2190, %v2350
      %v2352 = vpop.f32.mrb[0].mxu0
      %v2353 = vpop.f32.mrb[0].mxu0
      %v2354 = vadd.f32 %v2193, %v2353
      %v2355 = vpop.f32.mrb[0].mxu0
      %2356 = vmatprep.mubr.bf16.mxu0 0
      %2357 = vmatmul.mubr.bf16.gmra.mrb[0].mxu0 %v1950
      %v2358 = vpop.f32.mrb[0].mxu0
      %v2359 = vadd.f32 %v2198, %v2358
      %v2360 = vpop.f32.mrb[0].mxu0
      %v2361 = vpop.f32.mrb[0].mxu0
      %v2362 = vadd.f32 %v2201, %v2361
      %v2363 = vpop.f32.mrb[0].mxu0
      %2364 = vmatprep.mubr.bf16.mxu0 0
      %2365 = vmatmul.mubr.bf16.gmra.mrb[0].mxu0 %v1953
      %v2366 = vpop.f32.mrb[0].mxu0
      %v2367 = vadd.f32 %v2206, %v2366
      %v2368 = vpop.f32.mrb[0].mxu0
      %v2369 = vpop.f32.mrb[0].mxu0
      %v2370 = vadd.f32 %v2209, %v2369
      %v2371 = vpop.f32.mrb[0].mxu0
      %2372 = vmatprep.mubr.bf16.mxu0 0
      %2373 = vmatmul.mubr.bf16.gmra.mrb[0].mxu0 %v1956
      %v2374 = vpop.f32.mrb[0].mxu0
      %v2375 = vadd.f32 %v2214, %v2374
      %v2376 = vpop.f32.mrb[0].mxu0
      %v2377 = vpop.f32.mrb[0].mxu0
      %v2378 = vadd.f32 %v2217, %v2377
      %v2379 = vpop.f32.mrb[0].mxu0
      %2380 = vmatprep.mubr.bf16.mxu0 0
      %2381 = vmatmul.mubr.bf16.gmra.mrb[0].mxu0 %v1959
      %v2382 = vpop.f32.mrb[0].mxu0
      %v2383 = vadd.f32 %v2222, %v2382
      %v2384 = vpop.f32.mrb[0].mxu0
      %v2385 = vpop.f32.mrb[0].mxu0
      %v2386 = vadd.f32 %v2225, %v2385
      %v2387 = vpop.f32.mrb[0].mxu0
      %2388 = vmatprep.mubr.bf16.mxu0 0
      %2389 = vmatmul.mubr.bf16.gmra.mrb[0].mxu0 %v1962
      %v2390 = vpop.f32.mrb[0].mxu0
      %v2391 = vadd.f32 %v2230, %v2390
      %v2392 = vpop.f32.mrb[0].mxu0
      %v2393 = vpop.f32.mrb[0].mxu0
      %v2394 = vadd.f32 %v2233, %v2393
      %v2395 = vpop.f32.mrb[0].mxu0
      %2396 = vmatprep.mubr.bf16.mxu0 0
      %2397 = vmatmul.mubr.bf16.gmra.mrb[0].mxu0 %v1965
      %v2398 = vpop.f32.mrb[0].mxu0
      %v2399 = vadd.f32 %v2238, %v2398
      %v2400 = vpop.f32.mrb[0].mxu0
      %v2401 = vpop.f32.mrb[0].mxu0
      %v2402 = vadd.f32 %v2241, %v2401
      %v2403 = vpop.f32.mrb[0].mxu0
      %2404 = vmatprep.mubr.bf16.mxu0 0
      %2405 = vmatmul.mubr.bf16.gmra.mrb[0].mxu0 %v1968
      %v2406 = vpop.f32.mrb[0].mxu0
      %v2407 = vadd.f32 %v2246, %v2406
      %v2408 = vpop.f32.mrb[0].mxu0
      %v2409 = vpop.f32.mrb[0].mxu0
      %v2410 = vadd.f32 %v2249, %v2409
      %v2411 = vpop.f32.mrb[0].mxu0
      %2412 = vmatprep.mubr.bf16.mxu0 0
      %2413 = vmatmul.mubr.bf16.gmra.mrb[0].mxu0 %v1971
      %v2414 = vpop.f32.mrb[0].mxu0
      %v2415 = vadd.f32 %v2254, %v2414
      %v2416 = vpop.f32.mrb[0].mxu0
      %v2417 = vpop.f32.mrb[0].mxu0
      %v2418 = vadd.f32 %v2257, %v2417
      %v2419 = vpop.f32.mrb[0].mxu0
      %2420 = vmatprep.mubr.bf16.mxu0 0
      %2421 = vmatmul.mubr.bf16.gmra.mrb[0].mxu0 %v1974
      %v2422 = vpop.f32.mrb[0].mxu0
      %v2423 = vadd.f32 %v2262, %v2422
      %v2424 = vpop.f32.mrb[0].mxu0
      %v2425 = vpop.f32.mrb[0].mxu0
      %v2426 = vadd.f32 %v2265, %v2425
      %v2427 = vpop.f32.mrb[0].mxu0
      %2428 = vmatprep.mubr.bf16.mxu0 0
      %2429 = vmatmul.mubr.bf16.gmra.mrb[0].mxu0 %v1977
      %v2430 = vpop.f32.mrb[0].mxu0
      %v2431 = vadd.f32 %v2270, %v2430
      %v2432 = vpop.f32.mrb[0].mxu0
      %v2433 = vpop.f32.mrb[0].mxu0
      %v2434 = vadd.f32 %v2273, %v2433
      %v2435 = vpop.f32.mrb[0].mxu0
      %2436 = vmatprep.mubr.bf16.mxu0 0
      %2437 = vmatmul.mubr.bf16.gmra.mrb[0].mxu0 %v1980
      %v2438 = vpop.f32.mrb[0].mxu0
      %v2439 = vadd.f32 %v2278, %v2438
      %v2440 = vpop.f32.mrb[0].mxu0
      %v2441 = vpop.f32.mrb[0].mxu0
      %v2442 = vadd.f32 %v2281, %v2441
      %v2443 = vpop.f32.mrb[0].mxu0
      %2444 = vmatprep.mubr.bf16.mxu0 0
      %2445 = vmatmul.mubr.bf16.gmra.mrb[0].mxu0 %v1983
      %v2446 = vpop.f32.mrb[0].mxu0
      %v2447 = vadd.f32 %v2286, %v2446
      %v2448 = vpop.f32.mrb[0].mxu0
      %v2449 = vpop.f32.mrb[0].mxu0
      %v2450 = vadd.f32 %v2289, %v2449
      %v2451 = vpop.f32.mrb[0].mxu0
      %2452 = vmatprep.mubr.bf16.mxu0 0
      %2453 = vmatmul.mubr.bf16.gmra.mrb[0].mxu0 %v1986
      %v2454 = vpop.f32.mrb[0].mxu0
      %v2455 = vadd.f32 %v2294, %v2454
      %v2456 = vpop.f32.mrb[0].mxu0
      %v2457 = vpop.f32.mrb[0].mxu0
      %v2458 = vadd.f32 %v2297, %v2457
      %v2459 = vpop.f32.mrb[0].mxu0
      %2460 = vmatprep.mubr.bf16.mxu0 0
      %2461 = vmatmul.mubr.bf16.gmra.mrb[0].mxu0 %v1989
      %v2462 = vpop.f32.mrb[0].mxu0
      %v2463 = vadd.f32 %v2302, %v2462
      %v2464 = vpop.f32.mrb[0].mxu0
      %v2465 = vpop.f32.mrb[0].mxu0
      %v2466 = vadd.f32 %v2305, %v2465
      %v2467 = vpop.f32.mrb[0].mxu0
      %2468 = vmatprep.mubr.bf16.mxu0 0
      %2469 = vmatmul.mubr.bf16.gmra.mrb[0].mxu0 %v1992
      %v2470 = vpop.f32.mrb[0].mxu0
      %v2471 = vadd.f32 %v2310, %v2470
      %v2472 = vpop.f32.mrb[0].mxu0
      %v2473 = vpop.f32.mrb[0].mxu0
      %v2474 = vadd.f32 %v2313, %v2473
      %v2475 = vpop.f32.mrb[0].mxu0
      %2476 = vdwg.mxu0
      %v2477 = vmax.f32 %v2351, 0.0
      %v2478 = vmax.f32 %v2354, 0.0
      %v2479 = vmax.f32 %v2359, 0.0
      %v2480 = vmax.f32 %v2362, 0.0
      %v2481 = vmax.f32 %v2367, 0.0
      %v2482 = vmax.f32 %v2370, 0.0
      %v2483 = vmax.f32 %v2375, 0.0
      %v2484 = vmax.f32 %v2378, 0.0
      %v2485 = vmax.f32 %v2383, 0.0
      %v2486 = vmax.f32 %v2386, 0.0
      %v2487 = vmax.f32 %v2391, 0.0
      %v2488 = vmax.f32 %v2394, 0.0
      %v2489 = vmax.f32 %v2399, 0.0
      %v2490 = vmax.f32 %v2402, 0.0
      %v2491 = vmax.f32 %v2407, 0.0
      %v2492 = vmax.f32 %v2410, 0.0
      %v2493 = vmax.f32 %v2415, 0.0
      %v2494 = vmax.f32 %v2418, 0.0
      %v2495 = vmax.f32 %v2423, 0.0
      %v2496 = vmax.f32 %v2426, 0.0
      %v2497 = vmax.f32 %v2431, 0.0
      %v2498 = vmax.f32 %v2434, 0.0
      %v2499 = vmax.f32 %v2439, 0.0
      %v2500 = vmax.f32 %v2442, 0.0
      %v2501 = vmax.f32 %v2447, 0.0
      %v2502 = vmax.f32 %v2450, 0.0
      %v2503 = vmax.f32 %v2455, 0.0
      %v2504 = vmax.f32 %v2458, 0.0
      %v2505 = vmax.f32 %v2463, 0.0
      %v2506 = vmax.f32 %v2466, 0.0
      %v2507 = vmax.f32 %v2471, 0.0
      %v2508 = vmax.f32 %v2474, 0.0
      %2509 = vst.msk [vmem:[%s704 + $0x8] sm:$0xff] %vm280, %v2477
      %2510 = vst.msk [vmem:[%s704 + $0x10] sm:$0xff] %vm280, %v2478
      %2511 = vst.msk [vmem:[%s704 + $0x28] sm:$0xff] %vm280, %v2479
      %2512 = vst.msk [vmem:[%s704 + $0x30] sm:$0xff] %vm280, %v2480
      %2513 = vst.msk [vmem:[%s704 + $0x48] sm:$0xff] %vm280, %v2481
      %2514 = vst.msk [vmem:[%s704 + $0x50] sm:$0xff] %vm280, %v2482
      %2515 = vst.msk [vmem:[%s704 + $0x68] sm:$0xff] %vm280, %v2483
      %2516 = vst.msk [vmem:[%s704 + $0x70] sm:$0xff] %vm280, %v2484
      %2517 = vst.msk [vmem:[%s704 + $0x88] sm:$0xff] %vm280, %v2485
      %2518 = vst.msk [vmem:[%s704 + $0x90] sm:$0xff] %vm280, %v2486
      %2519 = vst.msk [vmem:[%s704 + $0xa8] sm:$0xff] %vm280, %v2487
      %2520 = vst.msk [vmem:[%s704 + $0xb0] sm:$0xff] %vm280, %v2488
      %2521 = vst.msk [vmem:[%s704 + $0xc8] sm:$0xff] %vm280, %v2489
      %2522 = vst.msk [vmem:[%s704 + $0xd0] sm:$0xff] %vm280, %v2490
      %2523 = vst.msk [vmem:[%s704 + $0xe8] sm:$0xff] %vm280, %v2491
      %2524 = vst.msk [vmem:[%s704 + $0xf0] sm:$0xff] %vm280, %v2492
      %2525 = vst.msk [vmem:[%s704 + $0x108] sm:$0xff] %vm280, %v2493
      %2526 = vst.msk [vmem:[%s704 + $0x110] sm:$0xff] %vm280, %v2494
      %2527 = vst.msk [vmem:[%s704 + $0x128] sm:$0xff] %vm280, %v2495
      %2528 = vst.msk [vmem:[%s704 + $0x130] sm:$0xff] %vm280, %v2496
      %2529 = vst.msk [vmem:[%s704 + $0x148] sm:$0xff] %vm280, %v2497
      %2530 = vst.msk [vmem:[%s704 + $0x150] sm:$0xff] %vm280, %v2498
      %2531 = vst.msk [vmem:[%s704 + $0x168] sm:$0xff] %vm280, %v2499
      %2532 = vst.msk [vmem:[%s704 + $0x170] sm:$0xff] %vm280, %v2500
      %2533 = vst.msk [vmem:[%s704 + $0x188] sm:$0xff] %vm280, %v2501
      %2534 = vst.msk [vmem:[%s704 + $0x190] sm:$0xff] %vm280, %v2502
      %2535 = vst.msk [vmem:[%s704 + $0x1a8] sm:$0xff] %vm280, %v2503
      %2536 = vst.msk [vmem:[%s704 + $0x1b0] sm:$0xff] %vm280, %v2504
      %2537 = vst.msk [vmem:[%s704 + $0x1c8] sm:$0xff] %vm280, %v2505
      %2538 = vst.msk [vmem:[%s704 + $0x1d0] sm:$0xff] %vm280, %v2506
      %2539 = vst.msk [vmem:[%s704 + $0x1e8] sm:$0xff] %vm280, %v2507
      %2540 = vst.msk [vmem:[%s704 + $0x1f0] sm:$0xff] %vm280, %v2508
      %v2541 = vld [vmem:[#allocation2 + $0x7] sm:$0xff]
      %v2542 = vld [vmem:[#allocation2 + $0xf] sm:$0xff]
      %v2543 = vld [vmem:[#allocation2 + $0x27] sm:$0xff]
      %v2544 = vld [vmem:[#allocation2 + $0x2f] sm:$0xff]
      %v2545 = vld [vmem:[#allocation2 + $0x47] sm:$0xff]
      %v2546 = vld [vmem:[#allocation2 + $0x4f] sm:$0xff]
      %v2547 = vld [vmem:[#allocation2 + $0x67] sm:$0xff]
      %v2548 = vld [vmem:[#allocation2 + $0x6f] sm:$0xff]
      %v2549 = vld [vmem:[#allocation2 + $0x87] sm:$0xff]
      %v2550 = vld [vmem:[#allocation2 + $0x8f] sm:$0xff]
      %v2551 = vld [vmem:[#allocation2 + $0xa7] sm:$0xff]
      %v2552 = vld [vmem:[#allocation2 + $0xaf] sm:$0xff]
      %v2553 = vld [vmem:[#allocation2 + $0xc7] sm:$0xff]
      %v2554 = vld [vmem:[#allocation2 + $0xcf] sm:$0xff]
      %v2555 = vld [vmem:[#allocation2 + $0xe7] sm:$0xff]
      %v2556 = vld [vmem:[#allocation2 + $0xef] sm:$0xff]
      %v2557 = vld [vmem:[#allocation2 + $0x107] sm:$0xff]
      %v2558 = vld [vmem:[#allocation2 + $0x10f] sm:$0xff]
      %v2559 = vld [vmem:[#allocation2 + $0x127] sm:$0xff]
      %v2560 = vld [vmem:[#allocation2 + $0x12f] sm:$0xff]
      %v2561 = vld [vmem:[#allocation2 + $0x147] sm:$0xff]
      %v2562 = vld [vmem:[#allocation2 + $0x14f] sm:$0xff]
      %v2563 = vld [vmem:[#allocation2 + $0x167] sm:$0xff]
      %v2564 = vld [vmem:[#allocation2 + $0x16f] sm:$0xff]
      %v2565 = vld [vmem:[#allocation2 + $0x187] sm:$0xff]
      %v2566 = vld [vmem:[#allocation2 + $0x18f] sm:$0xff]
      %v2567 = vld [vmem:[#allocation2 + $0x1a7] sm:$0xff]
      %v2568 = vld [vmem:[#allocation2 + $0x1af] sm:$0xff]
      %v2569 = vld [vmem:[#allocation2 + $0x1c7] sm:$0xff]
      %v2570 = vld [vmem:[#allocation2 + $0x1cf] sm:$0xff]
      %v2571 = vld [vmem:[#allocation2 + $0x1e7] sm:$0xff]
      %v2572 = vld [vmem:[#allocation2 + $0x1ef] sm:$0xff]
      %v2573 = vpack.c.bf16 %v2542, %v2541
      %v2574 = vpack.c.bf16 %v2544, %v2543
      %v2575 = vpack.c.bf16 %v2546, %v2545
      %v2576 = vpack.c.bf16 %v2548, %v2547
      %v2577 = vpack.c.bf16 %v2550, %v2549
      %v2578 = vpack.c.bf16 %v2552, %v2551
      %v2579 = vpack.c.bf16 %v2554, %v2553
      %v2580 = vpack.c.bf16 %v2556, %v2555
      %v2581 = vpack.c.bf16 %v2558, %v2557
      %v2582 = vpack.c.bf16 %v2560, %v2559
      %v2583 = vpack.c.bf16 %v2562, %v2561
      %v2584 = vpack.c.bf16 %v2564, %v2563
      %v2585 = vpack.c.bf16 %v2566, %v2565
      %v2586 = vpack.c.bf16 %v2568, %v2567
      %v2587 = vpack.c.bf16 %v2570, %v2569
      %v2588 = vpack.c.bf16 %v2572, %v2571
      %2589 = vst.msk [vmem:[#allocation3] sm:$0xff] %vm280, %v2573
      %2590 = vst.msk [vmem:[#allocation3 + $0x28] sm:$0xff] %vm280, %v2574
      %2591 = vst.msk [vmem:[#allocation3 + $0x50] sm:$0xff] %vm280, %v2575
      %2592 = vst.msk [vmem:[#allocation3 + $0x78] sm:$0xff] %vm280, %v2576
      %2593 = vst.msk [vmem:[#allocation3 + $0xa0] sm:$0xff] %vm280, %v2577
      %2594 = vst.msk [vmem:[#allocation3 + $0xc8] sm:$0xff] %vm280, %v2578
      %2595 = vst.msk [vmem:[#allocation3 + $0xf0] sm:$0xff] %vm280, %v2579
      %2596 = vst.msk [vmem:[#allocation3 + $0x118] sm:$0xff] %vm280, %v2580
      %2597 = vst.msk [vmem:[#allocation3 + $0x140] sm:$0xff] %vm280, %v2581
      %2598 = vst.msk [vmem:[#allocation3 + $0x168] sm:$0xff] %vm280, %v2582
      %2599 = vst.msk [vmem:[#allocation3 + $0x190] sm:$0xff] %vm280, %v2583
      %2600 = vst.msk [vmem:[#allocation3 + $0x1b8] sm:$0xff] %vm280, %v2584
      %2601 = vst.msk [vmem:[#allocation3 + $0x1e0] sm:$0xff] %vm280, %v2585
      %2602 = vst.msk [vmem:[#allocation3 + $0x208] sm:$0xff] %vm280, %v2586
      %2603 = vst.msk [vmem:[#allocation3 + $0x230] sm:$0xff] %vm280, %v2587
      %2604 = vst.msk [vmem:[#allocation3 + $0x258] sm:$0xff] %vm280, %v2588
      %v2605 = vld [vmem:[#allocation2 + $0x8] sm:$0xff]
      %v2606 = vld [vmem:[#allocation2 + $0x10] sm:$0xff]
      %v2607 = vld [vmem:[#allocation2 + $0x28] sm:$0xff]
      %v2608 = vld [vmem:[#allocation2 + $0x30] sm:$0xff]
      %v2609 = vld [vmem:[#allocation2 + $0x48] sm:$0xff]
      %v2610 = vld [vmem:[#allocation2 + $0x50] sm:$0xff]
      %v2611 = vld [vmem:[#allocation2 + $0x68] sm:$0xff]
      %v2612 = vld [vmem:[#allocation2 + $0x70] sm:$0xff]
      %v2613 = vld [vmem:[#allocation2 + $0x88] sm:$0xff]
      %v2614 = vld [vmem:[#allocation2 + $0x90] sm:$0xff]
      %v2615 = vld [vmem:[#allocation2 + $0xa8] sm:$0xff]
      %v2616 = vld [vmem:[#allocation2 + $0xb0] sm:$0xff]
      %v2617 = vld [vmem:[#allocation2 + $0xc8] sm:$0xff]
      %v2618 = vld [vmem:[#allocation2 + $0xd0] sm:$0xff]
      %v2619 = vld [vmem:[#allocation2 + $0xe8] sm:$0xff]
      %v2620 = vld [vmem:[#allocation2 + $0xf0] sm:$0xff]
      %v2621 = vld [vmem:[#allocation2 + $0x108] sm:$0xff]
      %v2622 = vld [vmem:[#allocation2 + $0x110] sm:$0xff]
      %v2623 = vld [vmem:[#allocation2 + $0x128] sm:$0xff]
      %v2624 = vld [vmem:[#allocation2 + $0x130] sm:$0xff]
      %v2625 = vld [vmem:[#allocation2 + $0x148] sm:$0xff]
      %v2626 = vld [vmem:[#allocation2 + $0x150] sm:$0xff]
      %v2627 = vld [vmem:[#allocation2 + $0x168] sm:$0xff]
      %v2628 = vld [vmem:[#allocation2 + $0x170] sm:$0xff]
      %v2629 = vld [vmem:[#allocation2 + $0x188] sm:$0xff]
      %v2630 = vld [vmem:[#allocation2 + $0x190] sm:$0xff]
      %v2631 = vld [vmem:[#allocation2 + $0x1a8] sm:$0xff]
      %v2632 = vld [vmem:[#allocation2 + $0x1b0] sm:$0xff]
      %v2633 = vld [vmem:[#allocation2 + $0x1c8] sm:$0xff]
      %v2634 = vld [vmem:[#allocation2 + $0x1d0] sm:$0xff]
      %v2635 = vld [vmem:[#allocation2 + $0x1e8] sm:$0xff]
      %v2636 = vld [vmem:[#allocation2 + $0x1f0] sm:$0xff]
      %v2637 = vpack.c.bf16 %v2606, %v2605
      %v2638 = vpack.c.bf16 %v2608, %v2607
      %v2639 = vpack.c.bf16 %v2610, %v2609
      %v2640 = vpack.c.bf16 %v2612, %v2611
      %v2641 = vpack.c.bf16 %v2614, %v2613
      %v2642 = vpack.c.bf16 %v2616, %v2615
      %v2643 = vpack.c.bf16 %v2618, %v2617
      %v2644 = vpack.c.bf16 %v2620, %v2619
      %v2645 = vpack.c.bf16 %v2622, %v2621
      %v2646 = vpack.c.bf16 %v2624, %v2623
      %v2647 = vpack.c.bf16 %v2626, %v2625
      %v2648 = vpack.c.bf16 %v2628, %v2627
      %v2649 = vpack.c.bf16 %v2630, %v2629
      %v2650 = vpack.c.bf16 %v2632, %v2631
      %v2651 = vpack.c.bf16 %v2634, %v2633
      %v2652 = vpack.c.bf16 %v2636, %v2635
      %2669 = vrot.lane.b32.xlu0 %v2637, 64
      %v2670 = vpop.permute.xlu0 %2669
      %2671 = vrot.lane.b32.xlu0 %v2638, 64
      %v2672 = vpop.permute.xlu0 %2671
      %2673 = vrot.lane.b32.xlu0 %v2639, 64
      %v2674 = vpop.permute.xlu0 %2673
      %2675 = vrot.lane.b32.xlu0 %v2640, 64
      %v2676 = vpop.permute.xlu0 %2675
      %2677 = vrot.lane.b32.xlu0 %v2641, 64
      %v2678 = vpop.permute.xlu0 %2677
      %2679 = vrot.lane.b32.xlu0 %v2642, 64
      %v2680 = vpop.permute.xlu0 %2679
      %2681 = vrot.lane.b32.xlu0 %v2643, 64
      %v2682 = vpop.permute.xlu0 %2681
      %2683 = vrot.lane.b32.xlu0 %v2644, 64
      %v2684 = vpop.permute.xlu0 %2683
      %2685 = vrot.lane.b32.xlu0 %v2645, 64
      %v2686 = vpop.permute.xlu0 %2685
      %2687 = vrot.lane.b32.xlu0 %v2646, 64
      %v2688 = vpop.permute.xlu0 %2687
      %2689 = vrot.lane.b32.xlu0 %v2647, 64
      %v2690 = vpop.permute.xlu0 %2689
      %2691 = vrot.lane.b32.xlu0 %v2648, 64
      %v2692 = vpop.permute.xlu0 %2691
      %2693 = vrot.lane.b32.xlu0 %v2649, 64
      %v2694 = vpop.permute.xlu0 %2693
      %2695 = vrot.lane.b32.xlu0 %v2650, 64
      %v2696 = vpop.permute.xlu0 %2695
      %2697 = vrot.lane.b32.xlu0 %v2651, 64
      %v2698 = vpop.permute.xlu0 %2697
      %2699 = vrot.lane.b32.xlu0 %v2652, 64
      %v2700 = vpop.permute.xlu0 %2699
      %2717 = vst.msk [vmem:[#allocation3] sm:$0xff] %vm913, %v2670
      %2718 = vst.msk [vmem:[#allocation3 + $0x28] sm:$0xff] %vm913, %v2672
      %2719 = vst.msk [vmem:[#allocation3 + $0x50] sm:$0xff] %vm913, %v2674
      %2720 = vst.msk [vmem:[#allocation3 + $0x78] sm:$0xff] %vm913, %v2676
      %2721 = vst.msk [vmem:[#allocation3 + $0xa0] sm:$0xff] %vm913, %v2678
      %2722 = vst.msk [vmem:[#allocation3 + $0xc8] sm:$0xff] %vm913, %v2680
      %2723 = vst.msk [vmem:[#allocation3 + $0xf0] sm:$0xff] %vm913, %v2682
      %2724 = vst.msk [vmem:[#allocation3 + $0x118] sm:$0xff] %vm913, %v2684
      %2725 = vst.msk [vmem:[#allocation3 + $0x140] sm:$0xff] %vm913, %v2686
      %2726 = vst.msk [vmem:[#allocation3 + $0x168] sm:$0xff] %vm913, %v2688
      %2727 = vst.msk [vmem:[#allocation3 + $0x190] sm:$0xff] %vm913, %v2690
      %2728 = vst.msk [vmem:[#allocation3 + $0x1b8] sm:$0xff] %vm913, %v2692
      %2729 = vst.msk [vmem:[#allocation3 + $0x1e0] sm:$0xff] %vm913, %v2694
      %2730 = vst.msk [vmem:[#allocation3 + $0x208] sm:$0xff] %vm913, %v2696
      %2731 = vst.msk [vmem:[#allocation3 + $0x230] sm:$0xff] %vm913, %v2698
      %2732 = vst.msk [vmem:[#allocation3 + $0x258] sm:$0xff] %vm913, %v2700
      %v2733 = vld [vmem:[#allocation2 + $0x9] sm:$0xff]
      %v2734 = vld [vmem:[#allocation2 + $0x11] sm:$0xff]
      %v2735 = vld [vmem:[#allocation2 + $0x29] sm:$0xff]
      %v2736 = vld [vmem:[#allocation2 + $0x31] sm:$0xff]
      %v2737 = vld [vmem:[#allocation2 + $0x49] sm:$0xff]
      %v2738 = vld [vmem:[#allocation2 + $0x51] sm:$0xff]
      %v2739 = vld [vmem:[#allocation2 + $0x69] sm:$0xff]
      %v2740 = vld [vmem:[#allocation2 + $0x71] sm:$0xff]
      %v2741 = vld [vmem:[#allocation2 + $0x89] sm:$0xff]
      %v2742 = vld [vmem:[#allocation2 + $0x91] sm:$0xff]
      %v2743 = vld [vmem:[#allocation2 + $0xa9] sm:$0xff]
      %v2744 = vld [vmem:[#allocation2 + $0xb1] sm:$0xff]
      %v2745 = vld [vmem:[#allocation2 + $0xc9] sm:$0xff]
      %v2746 = vld [vmem:[#allocation2 + $0xd1] sm:$0xff]
      %v2747 = vld [vmem:[#allocation2 + $0xe9] sm:$0xff]
      %v2748 = vld [vmem:[#allocation2 + $0xf1] sm:$0xff]
      %v2749 = vld [vmem:[#allocation2 + $0x109] sm:$0xff]
      %v2750 = vld [vmem:[#allocation2 + $0x111] sm:$0xff]
      %v2751 = vld [vmem:[#allocation2 + $0x129] sm:$0xff]
      %v2752 = vld [vmem:[#allocation2 + $0x131] sm:$0xff]
      %v2753 = vld [vmem:[#allocation2 + $0x149] sm:$0xff]
      %v2754 = vld [vmem:[#allocation2 + $0x151] sm:$0xff]
      %v2755 = vld [vmem:[#allocation2 + $0x169] sm:$0xff]
      %v2756 = vld [vmem:[#allocation2 + $0x171] sm:$0xff]
      %v2757 = vld [vmem:[#allocation2 + $0x189] sm:$0xff]
      %v2758 = vld [vmem:[#allocation2 + $0x191] sm:$0xff]
      %v2759 = vld [vmem:[#allocation2 + $0x1a9] sm:$0xff]
      %v2760 = vld [vmem:[#allocation2 + $0x1b1] sm:$0xff]
      %v2761 = vld [vmem:[#allocation2 + $0x1c9] sm:$0xff]
      %v2762 = vld [vmem:[#allocation2 + $0x1d1] sm:$0xff]
      %v2763 = vld [vmem:[#allocation2 + $0x1e9] sm:$0xff]
      %v2764 = vld [vmem:[#allocation2 + $0x1f1] sm:$0xff]
      %v2765 = vpack.c.bf16 %v2734, %v2733
      %v2766 = vpack.c.bf16 %v2736, %v2735
      %v2767 = vpack.c.bf16 %v2738, %v2737
      %v2768 = vpack.c.bf16 %v2740, %v2739
      %v2769 = vpack.c.bf16 %v2742, %v2741
      %v2770 = vpack.c.bf16 %v2744, %v2743
      %v2771 = vpack.c.bf16 %v2746, %v2745
      %v2772 = vpack.c.bf16 %v2748, %v2747
      %v2773 = vpack.c.bf16 %v2750, %v2749
      %v2774 = vpack.c.bf16 %v2752, %v2751
      %v2775 = vpack.c.bf16 %v2754, %v2753
      %v2776 = vpack.c.bf16 %v2756, %v2755
      %v2777 = vpack.c.bf16 %v2758, %v2757
      %v2778 = vpack.c.bf16 %v2760, %v2759
      %v2779 = vpack.c.bf16 %v2762, %v2761
      %v2780 = vpack.c.bf16 %v2764, %v2763
      %2781 = vst.msk [vmem:[#allocation3 + $0x8] sm:$0xff] %vm280, %v2765
      %2782 = vst.msk [vmem:[#allocation3 + $0x30] sm:$0xff] %vm280, %v2766
      %2783 = vst.msk [vmem:[#allocation3 + $0x58] sm:$0xff] %vm280, %v2767
      %2784 = vst.msk [vmem:[#allocation3 + $0x80] sm:$0xff] %vm280, %v2768
      %2785 = vst.msk [vmem:[#allocation3 + $0xa8] sm:$0xff] %vm280, %v2769
      %2786 = vst.msk [vmem:[#allocation3 + $0xd0] sm:$0xff] %vm280, %v2770
      %2787 = vst.msk [vmem:[#allocation3 + $0xf8] sm:$0xff] %vm280, %v2771
      %2788 = vst.msk [vmem:[#allocation3 + $0x120] sm:$0xff] %vm280, %v2772
      %2789 = vst.msk [vmem:[#allocation3 + $0x148] sm:$0xff] %vm280, %v2773
      %2790 = vst.msk [vmem:[#allocation3 + $0x170] sm:$0xff] %vm280, %v2774
      %2791 = vst.msk [vmem:[#allocation3 + $0x198] sm:$0xff] %vm280, %v2775
      %2792 = vst.msk [vmem:[#allocation3 + $0x1c0] sm:$0xff] %vm280, %v2776
      %2793 = vst.msk [vmem:[#allocation3 + $0x1e8] sm:$0xff] %vm280, %v2777
      %2794 = vst.msk [vmem:[#allocation3 + $0x210] sm:$0xff] %vm280, %v2778
      %2795 = vst.msk [vmem:[#allocation3 + $0x238] sm:$0xff] %vm280, %v2779
      %2796 = vst.msk [vmem:[#allocation3 + $0x260] sm:$0xff] %vm280, %v2780
      %v2797 = vld [vmem:[%s704 + $0x7] sm:$0xff]
      %v2798 = vld [vmem:[%s704 + $0xf] sm:$0xff]
      %v2799 = vld [vmem:[%s704 + $0x27] sm:$0xff]
      %v2800 = vld [vmem:[%s704 + $0x2f] sm:$0xff]
      %v2801 = vld [vmem:[%s704 + $0x47] sm:$0xff]
      %v2802 = vld [vmem:[%s704 + $0x4f] sm:$0xff]
      %v2803 = vld [vmem:[%s704 + $0x67] sm:$0xff]
      %v2804 = vld [vmem:[%s704 + $0x6f] sm:$0xff]
      %v2805 = vld [vmem:[%s704 + $0x87] sm:$0xff]
      %v2806 = vld [vmem:[%s704 + $0x8f] sm:$0xff]
      %v2807 = vld [vmem:[%s704 + $0xa7] sm:$0xff]
      %v2808 = vld [vmem:[%s704 + $0xaf] sm:$0xff]
      %v2809 = vld [vmem:[%s704 + $0xc7] sm:$0xff]
      %v2810 = vld [vmem:[%s704 + $0xcf] sm:$0xff]
      %v2811 = vld [vmem:[%s704 + $0xe7] sm:$0xff]
      %v2812 = vld [vmem:[%s704 + $0xef] sm:$0xff]
      %v2813 = vld [vmem:[%s704 + $0x107] sm:$0xff]
      %v2814 = vld [vmem:[%s704 + $0x10f] sm:$0xff]
      %v2815 = vld [vmem:[%s704 + $0x127] sm:$0xff]
      %v2816 = vld [vmem:[%s704 + $0x12f] sm:$0xff]
      %v2817 = vld [vmem:[%s704 + $0x147] sm:$0xff]
      %v2818 = vld [vmem:[%s704 + $0x14f] sm:$0xff]
      %v2819 = vld [vmem:[%s704 + $0x167] sm:$0xff]
      %v2820 = vld [vmem:[%s704 + $0x16f] sm:$0xff]
      %v2821 = vld [vmem:[%s704 + $0x187] sm:$0xff]
      %v2822 = vld [vmem:[%s704 + $0x18f] sm:$0xff]
      %v2823 = vld [vmem:[%s704 + $0x1a7] sm:$0xff]
      %v2824 = vld [vmem:[%s704 + $0x1af] sm:$0xff]
      %v2825 = vld [vmem:[%s704 + $0x1c7] sm:$0xff]
      %v2826 = vld [vmem:[%s704 + $0x1cf] sm:$0xff]
      %v2827 = vld [vmem:[%s704 + $0x1e7] sm:$0xff]
      %v2828 = vld [vmem:[%s704 + $0x1ef] sm:$0xff]
      %v2829 = vpack.c.bf16 %v2798, %v2797
      %v2830 = vpack.c.bf16 %v2800, %v2799
      %v2831 = vpack.c.bf16 %v2802, %v2801
      %v2832 = vpack.c.bf16 %v2804, %v2803
      %v2833 = vpack.c.bf16 %v2806, %v2805
      %v2834 = vpack.c.bf16 %v2808, %v2807
      %v2835 = vpack.c.bf16 %v2810, %v2809
      %v2836 = vpack.c.bf16 %v2812, %v2811
      %v2837 = vpack.c.bf16 %v2814, %v2813
      %v2838 = vpack.c.bf16 %v2816, %v2815
      %v2839 = vpack.c.bf16 %v2818, %v2817
      %v2840 = vpack.c.bf16 %v2820, %v2819
      %v2841 = vpack.c.bf16 %v2822, %v2821
      %v2842 = vpack.c.bf16 %v2824, %v2823
      %v2843 = vpack.c.bf16 %v2826, %v2825
      %v2844 = vpack.c.bf16 %v2828, %v2827
      %2861 = vrot.lane.b32.xlu0 %v2829, 64
      %v2862 = vpop.permute.xlu0 %2861
      %2863 = vrot.lane.b32.xlu0 %v2830, 64
      %v2864 = vpop.permute.xlu0 %2863
      %2865 = vrot.lane.b32.xlu0 %v2831, 64
      %v2866 = vpop.permute.xlu0 %2865
      %2867 = vrot.lane.b32.xlu0 %v2832, 64
      %v2868 = vpop.permute.xlu0 %2867
      %2869 = vrot.lane.b32.xlu0 %v2833, 64
      %v2870 = vpop.permute.xlu0 %2869
      %2871 = vrot.lane.b32.xlu0 %v2834, 64
      %v2872 = vpop.permute.xlu0 %2871
      %2873 = vrot.lane.b32.xlu0 %v2835, 64
      %v2874 = vpop.permute.xlu0 %2873
      %2875 = vrot.lane.b32.xlu0 %v2836, 64
      %v2876 = vpop.permute.xlu0 %2875
      %2877 = vrot.lane.b32.xlu0 %v2837, 64
      %v2878 = vpop.permute.xlu0 %2877
      %2879 = vrot.lane.b32.xlu0 %v2838, 64
      %v2880 = vpop.permute.xlu0 %2879
      %2881 = vrot.lane.b32.xlu0 %v2839, 64
      %v2882 = vpop.permute.xlu0 %2881
      %2883 = vrot.lane.b32.xlu0 %v2840, 64
      %v2884 = vpop.permute.xlu0 %2883
      %2885 = vrot.lane.b32.xlu0 %v2841, 64
      %v2886 = vpop.permute.xlu0 %2885
      %2887 = vrot.lane.b32.xlu0 %v2842, 64
      %v2888 = vpop.permute.xlu0 %2887
      %2889 = vrot.lane.b32.xlu0 %v2843, 64
      %v2890 = vpop.permute.xlu0 %2889
      %2891 = vrot.lane.b32.xlu0 %v2844, 64
      %v2892 = vpop.permute.xlu0 %2891
      %2909 = vst.msk [vmem:[#allocation3 + $0x8] sm:$0xff] %vm913, %v2862
      %2910 = vst.msk [vmem:[#allocation3 + $0x30] sm:$0xff] %vm913, %v2864
      %2911 = vst.msk [vmem:[#allocation3 + $0x58] sm:$0xff] %vm913, %v2866
      %2912 = vst.msk [vmem:[#allocation3 + $0x80] sm:$0xff] %vm913, %v2868
      %2913 = vst.msk [vmem:[#allocation3 + $0xa8] sm:$0xff] %vm913, %v2870
      %2914 = vst.msk [vmem:[#allocation3 + $0xd0] sm:$0xff] %vm913, %v2872
      %2915 = vst.msk [vmem:[#allocation3 + $0xf8] sm:$0xff] %vm913, %v2874
      %2916 = vst.msk [vmem:[#allocation3 + $0x120] sm:$0xff] %vm913, %v2876
      %2917 = vst.msk [vmem:[#allocation3 + $0x148] sm:$0xff] %vm913, %v2878
      %2918 = vst.msk [vmem:[#allocation3 + $0x170] sm:$0xff] %vm913, %v2880
      %2919 = vst.msk [vmem:[#allocation3 + $0x198] sm:$0xff] %vm913, %v2882
      %2920 = vst.msk [vmem:[#allocation3 + $0x1c0] sm:$0xff] %vm913, %v2884
      %2921 = vst.msk [vmem:[#allocation3 + $0x1e8] sm:$0xff] %vm913, %v2886
      %2922 = vst.msk [vmem:[#allocation3 + $0x210] sm:$0xff] %vm913, %v2888
      %2923 = vst.msk [vmem:[#allocation3 + $0x238] sm:$0xff] %vm913, %v2890
      %2924 = vst.msk [vmem:[#allocation3 + $0x260] sm:$0xff] %vm913, %v2892
      %v2925 = vld [vmem:[%s704 + $0x8] sm:$0xff]
      %v2926 = vld [vmem:[%s704 + $0x10] sm:$0xff]
      %v2927 = vld [vmem:[%s704 + $0x28] sm:$0xff]
      %v2928 = vld [vmem:[%s704 + $0x30] sm:$0xff]
      %v2929 = vld [vmem:[%s704 + $0x48] sm:$0xff]
      %v2930 = vld [vmem:[%s704 + $0x50] sm:$0xff]
      %v2931 = vld [vmem:[%s704 + $0x68] sm:$0xff]
      %v2932 = vld [vmem:[%s704 + $0x70] sm:$0xff]
      %v2933 = vld [vmem:[%s704 + $0x88] sm:$0xff]
      %v2934 = vld [vmem:[%s704 + $0x90] sm:$0xff]
      %v2935 = vld [vmem:[%s704 + $0xa8] sm:$0xff]
      %v2936 = vld [vmem:[%s704 + $0xb0] sm:$0xff]
      %v2937 = vld [vmem:[%s704 + $0xc8] sm:$0xff]
      %v2938 = vld [vmem:[%s704 + $0xd0] sm:$0xff]
      %v2939 = vld [vmem:[%s704 + $0xe8] sm:$0xff]
      %v2940 = vld [vmem:[%s704 + $0xf0] sm:$0xff]
      %v2941 = vld [vmem:[%s704 + $0x108] sm:$0xff]
      %v2942 = vld [vmem:[%s704 + $0x110] sm:$0xff]
      %v2943 = vld [vmem:[%s704 + $0x128] sm:$0xff]
      %v2944 = vld [vmem:[%s704 + $0x130] sm:$0xff]
      %v2945 = vld [vmem:[%s704 + $0x148] sm:$0xff]
      %v2946 = vld [vmem:[%s704 + $0x150] sm:$0xff]
      %v2947 = vld [vmem:[%s704 + $0x168] sm:$0xff]
      %v2948 = vld [vmem:[%s704 + $0x170] sm:$0xff]
      %v2949 = vld [vmem:[%s704 + $0x188] sm:$0xff]
      %v2950 = vld [vmem:[%s704 + $0x190] sm:$0xff]
      %v2951 = vld [vmem:[%s704 + $0x1a8] sm:$0xff]
      %v2952 = vld [vmem:[%s704 + $0x1b0] sm:$0xff]
      %v2953 = vld [vmem:[%s704 + $0x1c8] sm:$0xff]
      %v2954 = vld [vmem:[%s704 + $0x1d0] sm:$0xff]
      %v2955 = vld [vmem:[%s704 + $0x1e8] sm:$0xff]
      %v2956 = vld [vmem:[%s704 + $0x1f0] sm:$0xff]
      %v2957 = vpack.c.bf16 %v2926, %v2925
      %v2958 = vpack.c.bf16 %v2928, %v2927
      %v2959 = vpack.c.bf16 %v2930, %v2929
      %v2960 = vpack.c.bf16 %v2932, %v2931
      %v2961 = vpack.c.bf16 %v2934, %v2933
      %v2962 = vpack.c.bf16 %v2936, %v2935
      %v2963 = vpack.c.bf16 %v2938, %v2937
      %v2964 = vpack.c.bf16 %v2940, %v2939
      %v2965 = vpack.c.bf16 %v2942, %v2941
      %v2966 = vpack.c.bf16 %v2944, %v2943
      %v2967 = vpack.c.bf16 %v2946, %v2945
      %v2968 = vpack.c.bf16 %v2948, %v2947
      %v2969 = vpack.c.bf16 %v2950, %v2949
      %v2970 = vpack.c.bf16 %v2952, %v2951
      %v2971 = vpack.c.bf16 %v2954, %v2953
      %v2972 = vpack.c.bf16 %v2956, %v2955
      %2973 = vst.msk [vmem:[#allocation3 + $0x10] sm:$0xff] %vm280, %v2957
      %2974 = vst.msk [vmem:[#allocation3 + $0x38] sm:$0xff] %vm280, %v2958
      %2975 = vst.msk [vmem:[#allocation3 + $0x60] sm:$0xff] %vm280, %v2959
      %2976 = vst.msk [vmem:[#allocation3 + $0x88] sm:$0xff] %vm280, %v2960
      %2977 = vst.msk [vmem:[#allocation3 + $0xb0] sm:$0xff] %vm280, %v2961
      %2978 = vst.msk [vmem:[#allocation3 + $0xd8] sm:$0xff] %vm280, %v2962
      %2979 = vst.msk [vmem:[#allocation3 + $0x100] sm:$0xff] %vm280, %v2963
      %2980 = vst.msk [vmem:[#allocation3 + $0x128] sm:$0xff] %vm280, %v2964
      %2981 = vst.msk [vmem:[#allocation3 + $0x150] sm:$0xff] %vm280, %v2965
      %2982 = vst.msk [vmem:[#allocation3 + $0x178] sm:$0xff] %vm280, %v2966
      %2983 = vst.msk [vmem:[#allocation3 + $0x1a0] sm:$0xff] %vm280, %v2967
      %2984 = vst.msk [vmem:[#allocation3 + $0x1c8] sm:$0xff] %vm280, %v2968
      %2985 = vst.msk [vmem:[#allocation3 + $0x1f0] sm:$0xff] %vm280, %v2969
      %2986 = vst.msk [vmem:[#allocation3 + $0x218] sm:$0xff] %vm280, %v2970
      %2987 = vst.msk [vmem:[#allocation3 + $0x240] sm:$0xff] %vm280, %v2971
      %2988 = vst.msk [vmem:[#allocation3 + $0x268] sm:$0xff] %vm280, %v2972
      %v2989 = vld [vmem:[%s704 + $0x9] sm:$0xff]
      %v2990 = vld [vmem:[%s704 + $0x11] sm:$0xff]
      %v2991 = vld [vmem:[%s704 + $0x29] sm:$0xff]
      %v2992 = vld [vmem:[%s704 + $0x31] sm:$0xff]
      %v2993 = vld [vmem:[%s704 + $0x49] sm:$0xff]
      %v2994 = vld [vmem:[%s704 + $0x51] sm:$0xff]
      %v2995 = vld [vmem:[%s704 + $0x69] sm:$0xff]
      %v2996 = vld [vmem:[%s704 + $0x71] sm:$0xff]
      %v2997 = vld [vmem:[%s704 + $0x89] sm:$0xff]
      %v2998 = vld [vmem:[%s704 + $0x91] sm:$0xff]
      %v2999 = vld [vmem:[%s704 + $0xa9] sm:$0xff]
      %v3000 = vld [vmem:[%s704 + $0xb1] sm:$0xff]
      %v3001 = vld [vmem:[%s704 + $0xc9] sm:$0xff]
      %v3002 = vld [vmem:[%s704 + $0xd1] sm:$0xff]
      %v3003 = vld [vmem:[%s704 + $0xe9] sm:$0xff]
      %v3004 = vld [vmem:[%s704 + $0xf1] sm:$0xff]
      %v3005 = vld [vmem:[%s704 + $0x109] sm:$0xff]
      %v3006 = vld [vmem:[%s704 + $0x111] sm:$0xff]
      %v3007 = vld [vmem:[%s704 + $0x129] sm:$0xff]
      %v3008 = vld [vmem:[%s704 + $0x131] sm:$0xff]
      %v3009 = vld [vmem:[%s704 + $0x149] sm:$0xff]
      %v3010 = vld [vmem:[%s704 + $0x151] sm:$0xff]
      %v3011 = vld [vmem:[%s704 + $0x169] sm:$0xff]
      %v3012 = vld [vmem:[%s704 + $0x171] sm:$0xff]
      %v3013 = vld [vmem:[%s704 + $0x189] sm:$0xff]
      %v3014 = vld [vmem:[%s704 + $0x191] sm:$0xff]
      %v3015 = vld [vmem:[%s704 + $0x1a9] sm:$0xff]
      %v3016 = vld [vmem:[%s704 + $0x1b1] sm:$0xff]
      %v3017 = vld [vmem:[%s704 + $0x1c9] sm:$0xff]
      %v3018 = vld [vmem:[%s704 + $0x1d1] sm:$0xff]
      %v3019 = vld [vmem:[%s704 + $0x1e9] sm:$0xff]
      %v3020 = vld [vmem:[%s704 + $0x1f1] sm:$0xff]
      %v3021 = vpack.c.bf16 %v2990, %v2989
      %v3022 = vpack.c.bf16 %v2992, %v2991
      %v3023 = vpack.c.bf16 %v2994, %v2993
      %v3024 = vpack.c.bf16 %v2996, %v2995
      %v3025 = vpack.c.bf16 %v2998, %v2997
      %v3026 = vpack.c.bf16 %v3000, %v2999
      %v3027 = vpack.c.bf16 %v3002, %v3001
      %v3028 = vpack.c.bf16 %v3004, %v3003
      %v3029 = vpack.c.bf16 %v3006, %v3005
      %v3030 = vpack.c.bf16 %v3008, %v3007
      %v3031 = vpack.c.bf16 %v3010, %v3009
      %v3032 = vpack.c.bf16 %v3012, %v3011
      %v3033 = vpack.c.bf16 %v3014, %v3013
      %v3034 = vpack.c.bf16 %v3016, %v3015
      %v3035 = vpack.c.bf16 %v3018, %v3017
      %v3036 = vpack.c.bf16 %v3020, %v3019
      %3053 = vrot.lane.b32.xlu0 %v3021, 64
      %v3054 = vpop.permute.xlu0 %3053
      %3055 = vrot.lane.b32.xlu0 %v3022, 64
      %v3056 = vpop.permute.xlu0 %3055
      %3057 = vrot.lane.b32.xlu0 %v3023, 64
      %v3058 = vpop.permute.xlu0 %3057
      %3059 = vrot.lane.b32.xlu0 %v3024, 64
      %v3060 = vpop.permute.xlu0 %3059
      %3061 = vrot.lane.b32.xlu0 %v3025, 64
      %v3062 = vpop.permute.xlu0 %3061
      %3063 = vrot.lane.b32.xlu0 %v3026, 64
      %v3064 = vpop.permute.xlu0 %3063
      %3065 = vrot.lane.b32.xlu0 %v3027, 64
      %v3066 = vpop.permute.xlu0 %3065
      %3067 = vrot.lane.b32.xlu0 %v3028, 64
      %v3068 = vpop.permute.xlu0 %3067
      %3069 = vrot.lane.b32.xlu0 %v3029, 64
      %v3070 = vpop.permute.xlu0 %3069
      %3071 = vrot.lane.b32.xlu0 %v3030, 64
      %v3072 = vpop.permute.xlu0 %3071
      %3073 = vrot.lane.b32.xlu0 %v3031, 64
      %v3074 = vpop.permute.xlu0 %3073
      %3075 = vrot.lane.b32.xlu0 %v3032, 64
      %v3076 = vpop.permute.xlu0 %3075
      %3077 = vrot.lane.b32.xlu0 %v3033, 64
      %v3078 = vpop.permute.xlu0 %3077
      %3079 = vrot.lane.b32.xlu0 %v3034, 64
      %v3080 = vpop.permute.xlu0 %3079
      %3081 = vrot.lane.b32.xlu0 %v3035, 64
      %v3082 = vpop.permute.xlu0 %3081
      %3083 = vrot.lane.b32.xlu0 %v3036, 64
      %v3084 = vpop.permute.xlu0 %3083
      %3101 = vst.msk [vmem:[#allocation3 + $0x10] sm:$0xff] %vm913, %v3054
      %3102 = vst.msk [vmem:[#allocation3 + $0x38] sm:$0xff] %vm913, %v3056
      %3103 = vst.msk [vmem:[#allocation3 + $0x60] sm:$0xff] %vm913, %v3058
      %3104 = vst.msk [vmem:[#allocation3 + $0x88] sm:$0xff] %vm913, %v3060
      %3105 = vst.msk [vmem:[#allocation3 + $0xb0] sm:$0xff] %vm913, %v3062
      %3106 = vst.msk [vmem:[#allocation3 + $0xd8] sm:$0xff] %vm913, %v3064
      %3107 = vst.msk [vmem:[#allocation3 + $0x100] sm:$0xff] %vm913, %v3066
      %3108 = vst.msk [vmem:[#allocation3 + $0x128] sm:$0xff] %vm913, %v3068
      %3109 = vst.msk [vmem:[#allocation3 + $0x150] sm:$0xff] %vm913, %v3070
      %3110 = vst.msk [vmem:[#allocation3 + $0x178] sm:$0xff] %vm913, %v3072
      %3111 = vst.msk [vmem:[#allocation3 + $0x1a0] sm:$0xff] %vm913, %v3074
      %3112 = vst.msk [vmem:[#allocation3 + $0x1c8] sm:$0xff] %vm913, %v3076
      %3113 = vst.msk [vmem:[#allocation3 + $0x1f0] sm:$0xff] %vm913, %v3078
      %3114 = vst.msk [vmem:[#allocation3 + $0x218] sm:$0xff] %vm913, %v3080
      %3115 = vst.msk [vmem:[#allocation3 + $0x240] sm:$0xff] %vm913, %v3082
      %3116 = vst.msk [vmem:[#allocation3 + $0x268] sm:$0xff] %vm913, %v3084
      %v3117 = vld [vmem:[%s1314 + $0x7] sm:$0xff]
      %v3118 = vld [vmem:[%s1314 + $0xf] sm:$0xff]
      %v3119 = vld [vmem:[%s1314 + $0x27] sm:$0xff]
      %v3120 = vld [vmem:[%s1314 + $0x2f] sm:$0xff]
      %v3121 = vld [vmem:[%s1314 + $0x47] sm:$0xff]
      %v3122 = vld [vmem:[%s1314 + $0x4f] sm:$0xff]
      %v3123 = vld [vmem:[%s1314 + $0x67] sm:$0xff]
      %v3124 = vld [vmem:[%s1314 + $0x6f] sm:$0xff]
      %v3125 = vld [vmem:[%s1314 + $0x87] sm:$0xff]
      %v3126 = vld [vmem:[%s1314 + $0x8f] sm:$0xff]
      %v3127 = vld [vmem:[%s1314 + $0xa7] sm:$0xff]
      %v3128 = vld [vmem:[%s1314 + $0xaf] sm:$0xff]
      %v3129 = vld [vmem:[%s1314 + $0xc7] sm:$0xff]
      %v3130 = vld [vmem:[%s1314 + $0xcf] sm:$0xff]
      %v3131 = vld [vmem:[%s1314 + $0xe7] sm:$0xff]
      %v3132 = vld [vmem:[%s1314 + $0xef] sm:$0xff]
      %v3133 = vld [vmem:[%s1314 + $0x107] sm:$0xff]
      %v3134 = vld [vmem:[%s1314 + $0x10f] sm:$0xff]
      %v3135 = vld [vmem:[%s1314 + $0x127] sm:$0xff]
      %v3136 = vld [vmem:[%s1314 + $0x12f] sm:$0xff]
      %v3137 = vld [vmem:[%s1314 + $0x147] sm:$0xff]
      %v3138 = vld [vmem:[%s1314 + $0x14f] sm:$0xff]
      %v3139 = vld [vmem:[%s1314 + $0x167] sm:$0xff]
      %v3140 = vld [vmem:[%s1314 + $0x16f] sm:$0xff]
      %v3141 = vld [vmem:[%s1314 + $0x187] sm:$0xff]
      %v3142 = vld [vmem:[%s1314 + $0x18f] sm:$0xff]
      %v3143 = vld [vmem:[%s1314 + $0x1a7] sm:$0xff]
      %v3144 = vld [vmem:[%s1314 + $0x1af] sm:$0xff]
      %v3145 = vld [vmem:[%s1314 + $0x1c7] sm:$0xff]
      %v3146 = vld [vmem:[%s1314 + $0x1cf] sm:$0xff]
      %v3147 = vld [vmem:[%s1314 + $0x1e7] sm:$0xff]
      %v3148 = vld [vmem:[%s1314 + $0x1ef] sm:$0xff]
      %v3149 = vpack.c.bf16 %v3118, %v3117
      %v3150 = vpack.c.bf16 %v3120, %v3119
      %v3151 = vpack.c.bf16 %v3122, %v3121
      %v3152 = vpack.c.bf16 %v3124, %v3123
      %v3153 = vpack.c.bf16 %v3126, %v3125
      %v3154 = vpack.c.bf16 %v3128, %v3127
      %v3155 = vpack.c.bf16 %v3130, %v3129
      %v3156 = vpack.c.bf16 %v3132, %v3131
      %v3157 = vpack.c.bf16 %v3134, %v3133
      %v3158 = vpack.c.bf16 %v3136, %v3135
      %v3159 = vpack.c.bf16 %v3138, %v3137
      %v3160 = vpack.c.bf16 %v3140, %v3139
      %v3161 = vpack.c.bf16 %v3142, %v3141
      %v3162 = vpack.c.bf16 %v3144, %v3143
      %v3163 = vpack.c.bf16 %v3146, %v3145
      %v3164 = vpack.c.bf16 %v3148, %v3147
      %3165 = vst.msk [vmem:[#allocation3 + $0x18] sm:$0xff] %vm280, %v3149
      %3166 = vst.msk [vmem:[#allocation3 + $0x40] sm:$0xff] %vm280, %v3150
      %3167 = vst.msk [vmem:[#allocation3 + $0x68] sm:$0xff] %vm280, %v3151
      %3168 = vst.msk [vmem:[#allocation3 + $0x90] sm:$0xff] %vm280, %v3152
      %3169 = vst.msk [vmem:[#allocation3 + $0xb8] sm:$0xff] %vm280, %v3153
      %3170 = vst.msk [vmem:[#allocation3 + $0xe0] sm:$0xff] %vm280, %v3154
      %3171 = vst.msk [vmem:[#allocation3 + $0x108] sm:$0xff] %vm280, %v3155
      %3172 = vst.msk [vmem:[#allocation3 + $0x130] sm:$0xff] %vm280, %v3156
      %3173 = vst.msk [vmem:[#allocation3 + $0x158] sm:$0xff] %vm280, %v3157
      %3174 = vst.msk [vmem:[#allocation3 + $0x180] sm:$0xff] %vm280, %v3158
      %3175 = vst.msk [vmem:[#allocation3 + $0x1a8] sm:$0xff] %vm280, %v3159
      %3176 = vst.msk [vmem:[#allocation3 + $0x1d0] sm:$0xff] %vm280, %v3160
      %3177 = vst.msk [vmem:[#allocation3 + $0x1f8] sm:$0xff] %vm280, %v3161
      %3178 = vst.msk [vmem:[#allocation3 + $0x220] sm:$0xff] %vm280, %v3162
      %3179 = vst.msk [vmem:[#allocation3 + $0x248] sm:$0xff] %vm280, %v3163
      %3180 = vst.msk [vmem:[#allocation3 + $0x270] sm:$0xff] %vm280, %v3164
      %v3181 = vld [vmem:[%s1314 + $0x8] sm:$0xff]
      %v3182 = vld [vmem:[%s1314 + $0x10] sm:$0xff]
      %v3183 = vld [vmem:[%s1314 + $0x28] sm:$0xff]
      %v3184 = vld [vmem:[%s1314 + $0x30] sm:$0xff]
      %v3185 = vld [vmem:[%s1314 + $0x48] sm:$0xff]
      %v3186 = vld [vmem:[%s1314 + $0x50] sm:$0xff]
      %v3187 = vld [vmem:[%s1314 + $0x68] sm:$0xff]
      %v3188 = vld [vmem:[%s1314 + $0x70] sm:$0xff]
      %v3189 = vld [vmem:[%s1314 + $0x88] sm:$0xff]
      %v3190 = vld [vmem:[%s1314 + $0x90] sm:$0xff]
      %v3191 = vld [vmem:[%s1314 + $0xa8] sm:$0xff]
      %v3192 = vld [vmem:[%s1314 + $0xb0] sm:$0xff]
      %v3193 = vld [vmem:[%s1314 + $0xc8] sm:$0xff]
      %v3194 = vld [vmem:[%s1314 + $0xd0] sm:$0xff]
      %v3195 = vld [vmem:[%s1314 + $0xe8] sm:$0xff]
      %v3196 = vld [vmem:[%s1314 + $0xf0] sm:$0xff]
      %v3197 = vld [vmem:[%s1314 + $0x108] sm:$0xff]
      %v3198 = vld [vmem:[%s1314 + $0x110] sm:$0xff]
      %v3199 = vld [vmem:[%s1314 + $0x128] sm:$0xff]
      %v3200 = vld [vmem:[%s1314 + $0x130] sm:$0xff]
      %v3201 = vld [vmem:[%s1314 + $0x148] sm:$0xff]
      %v3202 = vld [vmem:[%s1314 + $0x150] sm:$0xff]
      %v3203 = vld [vmem:[%s1314 + $0x168] sm:$0xff]
      %v3204 = vld [vmem:[%s1314 + $0x170] sm:$0xff]
      %v3205 = vld [vmem:[%s1314 + $0x188] sm:$0xff]
      %v3206 = vld [vmem:[%s1314 + $0x190] sm:$0xff]
      %v3207 = vld [vmem:[%s1314 + $0x1a8] sm:$0xff]
      %v3208 = vld [vmem:[%s1314 + $0x1b0] sm:$0xff]
      %v3209 = vld [vmem:[%s1314 + $0x1c8] sm:$0xff]
      %v3210 = vld [vmem:[%s1314 + $0x1d0] sm:$0xff]
      %v3211 = vld [vmem:[%s1314 + $0x1e8] sm:$0xff]
      %v3212 = vld [vmem:[%s1314 + $0x1f0] sm:$0xff]
      %v3213 = vpack.c.bf16 %v3182, %v3181
      %v3214 = vpack.c.bf16 %v3184, %v3183
      %v3215 = vpack.c.bf16 %v3186, %v3185
      %v3216 = vpack.c.bf16 %v3188, %v3187
      %v3217 = vpack.c.bf16 %v3190, %v3189
      %v3218 = vpack.c.bf16 %v3192, %v3191
      %v3219 = vpack.c.bf16 %v3194, %v3193
      %v3220 = vpack.c.bf16 %v3196, %v3195
      %v3221 = vpack.c.bf16 %v3198, %v3197
      %v3222 = vpack.c.bf16 %v3200, %v3199
      %v3223 = vpack.c.bf16 %v3202, %v3201
      %v3224 = vpack.c.bf16 %v3204, %v3203
      %v3225 = vpack.c.bf16 %v3206, %v3205
      %v3226 = vpack.c.bf16 %v3208, %v3207
      %v3227 = vpack.c.bf16 %v3210, %v3209
      %v3228 = vpack.c.bf16 %v3212, %v3211
      %3245 = vrot.lane.b32.xlu0 %v3213, 64
      %v3246 = vpop.permute.xlu0 %3245
      %3247 = vrot.lane.b32.xlu0 %v3214, 64
      %v3248 = vpop.permute.xlu0 %3247
      %3249 = vrot.lane.b32.xlu0 %v3215, 64
      %v3250 = vpop.permute.xlu0 %3249
      %3251 = vrot.lane.b32.xlu0 %v3216, 64
      %v3252 = vpop.permute.xlu0 %3251
      %3253 = vrot.lane.b32.xlu0 %v3217, 64
      %v3254 = vpop.permute.xlu0 %3253
      %3255 = vrot.lane.b32.xlu0 %v3218, 64
      %v3256 = vpop.permute.xlu0 %3255
      %3257 = vrot.lane.b32.xlu0 %v3219, 64
      %v3258 = vpop.permute.xlu0 %3257
      %3259 = vrot.lane.b32.xlu0 %v3220, 64
      %v3260 = vpop.permute.xlu0 %3259
      %3261 = vrot.lane.b32.xlu0 %v3221, 64
      %v3262 = vpop.permute.xlu0 %3261
      %3263 = vrot.lane.b32.xlu0 %v3222, 64
      %v3264 = vpop.permute.xlu0 %3263
      %3265 = vrot.lane.b32.xlu0 %v3223, 64
      %v3266 = vpop.permute.xlu0 %3265
      %3267 = vrot.lane.b32.xlu0 %v3224, 64
      %v3268 = vpop.permute.xlu0 %3267
      %3269 = vrot.lane.b32.xlu0 %v3225, 64
      %v3270 = vpop.permute.xlu0 %3269
      %3271 = vrot.lane.b32.xlu0 %v3226, 64
      %v3272 = vpop.permute.xlu0 %3271
      %3273 = vrot.lane.b32.xlu0 %v3227, 64
      %v3274 = vpop.permute.xlu0 %3273
      %3275 = vrot.lane.b32.xlu0 %v3228, 64
      %v3276 = vpop.permute.xlu0 %3275
      %3293 = vst.msk [vmem:[#allocation3 + $0x18] sm:$0xff] %vm913, %v3246
      %3294 = vst.msk [vmem:[#allocation3 + $0x40] sm:$0xff] %vm913, %v3248
      %3295 = vst.msk [vmem:[#allocation3 + $0x68] sm:$0xff] %vm913, %v3250
      %3296 = vst.msk [vmem:[#allocation3 + $0x90] sm:$0xff] %vm913, %v3252
      %3297 = vst.msk [vmem:[#allocation3 + $0xb8] sm:$0xff] %vm913, %v3254
      %3298 = vst.msk [vmem:[#allocation3 + $0xe0] sm:$0xff] %vm913, %v3256
      %3299 = vst.msk [vmem:[#allocation3 + $0x108] sm:$0xff] %vm913, %v3258
      %3300 = vst.msk [vmem:[#allocation3 + $0x130] sm:$0xff] %vm913, %v3260
      %3301 = vst.msk [vmem:[#allocation3 + $0x158] sm:$0xff] %vm913, %v3262
      %3302 = vst.msk [vmem:[#allocation3 + $0x180] sm:$0xff] %vm913, %v3264
      %3303 = vst.msk [vmem:[#allocation3 + $0x1a8] sm:$0xff] %vm913, %v3266
      %3304 = vst.msk [vmem:[#allocation3 + $0x1d0] sm:$0xff] %vm913, %v3268
      %3305 = vst.msk [vmem:[#allocation3 + $0x1f8] sm:$0xff] %vm913, %v3270
      %3306 = vst.msk [vmem:[#allocation3 + $0x220] sm:$0xff] %vm913, %v3272
      %3307 = vst.msk [vmem:[#allocation3 + $0x248] sm:$0xff] %vm913, %v3274
      %3308 = vst.msk [vmem:[#allocation3 + $0x270] sm:$0xff] %vm913, %v3276
      %v3309 = vld [vmem:[%s1314 + $0x9] sm:$0xff]
      %v3310 = vld [vmem:[%s1314 + $0x11] sm:$0xff]
      %v3311 = vld [vmem:[%s1314 + $0x29] sm:$0xff]
      %v3312 = vld [vmem:[%s1314 + $0x31] sm:$0xff]
      %v3313 = vld [vmem:[%s1314 + $0x49] sm:$0xff]
      %v3314 = vld [vmem:[%s1314 + $0x51] sm:$0xff]
      %v3315 = vld [vmem:[%s1314 + $0x69] sm:$0xff]
      %v3316 = vld [vmem:[%s1314 + $0x71] sm:$0xff]
      %v3317 = vld [vmem:[%s1314 + $0x89] sm:$0xff]
      %v3318 = vld [vmem:[%s1314 + $0x91] sm:$0xff]
      %v3319 = vld [vmem:[%s1314 + $0xa9] sm:$0xff]
      %v3320 = vld [vmem:[%s1314 + $0xb1] sm:$0xff]
      %v3321 = vld [vmem:[%s1314 + $0xc9] sm:$0xff]
      %v3322 = vld [vmem:[%s1314 + $0xd1] sm:$0xff]
      %v3323 = vld [vmem:[%s1314 + $0xe9] sm:$0xff]
      %v3324 = vld [vmem:[%s1314 + $0xf1] sm:$0xff]
      %v3325 = vld [vmem:[%s1314 + $0x109] sm:$0xff]
      %v3326 = vld [vmem:[%s1314 + $0x111] sm:$0xff]
      %v3327 = vld [vmem:[%s1314 + $0x129] sm:$0xff]
      %v3328 = vld [vmem:[%s1314 + $0x131] sm:$0xff]
      %v3329 = vld [vmem:[%s1314 + $0x149] sm:$0xff]
      %v3330 = vld [vmem:[%s1314 + $0x151] sm:$0xff]
      %v3331 = vld [vmem:[%s1314 + $0x169] sm:$0xff]
      %v3332 = vld [vmem:[%s1314 + $0x171] sm:$0xff]
      %v3333 = vld [vmem:[%s1314 + $0x189] sm:$0xff]
      %v3334 = vld [vmem:[%s1314 + $0x191] sm:$0xff]
      %v3335 = vld [vmem:[%s1314 + $0x1a9] sm:$0xff]
      %v3336 = vld [vmem:[%s1314 + $0x1b1] sm:$0xff]
      %v3337 = vld [vmem:[%s1314 + $0x1c9] sm:$0xff]
      %v3338 = vld [vmem:[%s1314 + $0x1d1] sm:$0xff]
      %v3339 = vld [vmem:[%s1314 + $0x1e9] sm:$0xff]
      %v3340 = vld [vmem:[%s1314 + $0x1f1] sm:$0xff]
      %v3341 = vpack.c.bf16 %v3310, %v3309
      %v3342 = vpack.c.bf16 %v3312, %v3311
      %v3343 = vpack.c.bf16 %v3314, %v3313
      %v3344 = vpack.c.bf16 %v3316, %v3315
      %v3345 = vpack.c.bf16 %v3318, %v3317
      %v3346 = vpack.c.bf16 %v3320, %v3319
      %v3347 = vpack.c.bf16 %v3322, %v3321
      %v3348 = vpack.c.bf16 %v3324, %v3323
      %v3349 = vpack.c.bf16 %v3326, %v3325
      %v3350 = vpack.c.bf16 %v3328, %v3327
      %v3351 = vpack.c.bf16 %v3330, %v3329
      %v3352 = vpack.c.bf16 %v3332, %v3331
      %v3353 = vpack.c.bf16 %v3334, %v3333
      %v3354 = vpack.c.bf16 %v3336, %v3335
      %v3355 = vpack.c.bf16 %v3338, %v3337
      %v3356 = vpack.c.bf16 %v3340, %v3339
      %3357 = vst.msk [vmem:[#allocation3 + $0x20] sm:$0xff] %vm280, %v3341
      %3358 = vst.msk [vmem:[#allocation3 + $0x48] sm:$0xff] %vm280, %v3342
      %3359 = vst.msk [vmem:[#allocation3 + $0x70] sm:$0xff] %vm280, %v3343
      %3360 = vst.msk [vmem:[#allocation3 + $0x98] sm:$0xff] %vm280, %v3344
      %3361 = vst.msk [vmem:[#allocation3 + $0xc0] sm:$0xff] %vm280, %v3345
      %3362 = vst.msk [vmem:[#allocation3 + $0xe8] sm:$0xff] %vm280, %v3346
      %3363 = vst.msk [vmem:[#allocation3 + $0x110] sm:$0xff] %vm280, %v3347
      %3364 = vst.msk [vmem:[#allocation3 + $0x138] sm:$0xff] %vm280, %v3348
      %3365 = vst.msk [vmem:[#allocation3 + $0x160] sm:$0xff] %vm280, %v3349
      %3366 = vst.msk [vmem:[#allocation3 + $0x188] sm:$0xff] %vm280, %v3350
      %3367 = vst.msk [vmem:[#allocation3 + $0x1b0] sm:$0xff] %vm280, %v3351
      %3368 = vst.msk [vmem:[#allocation3 + $0x1d8] sm:$0xff] %vm280, %v3352
      %3369 = vst.msk [vmem:[#allocation3 + $0x200] sm:$0xff] %vm280, %v3353
      %3370 = vst.msk [vmem:[#allocation3 + $0x228] sm:$0xff] %vm280, %v3354
      %3371 = vst.msk [vmem:[#allocation3 + $0x250] sm:$0xff] %vm280, %v3355
      %3372 = vst.msk [vmem:[#allocation3 + $0x278] sm:$0xff] %vm280, %v3356
      %v3373 = vld [vmem:[#allocation3] sm:$0xff]
      %v3374 = vld [vmem:[#allocation3 + $0x8] sm:$0xff]
      %v3375 = vld [vmem:[#allocation3 + $0x10] sm:$0xff]
      %v3376 = vld [vmem:[#allocation3 + $0x18] sm:$0xff]
      %v3377 = vld [vmem:[#allocation3 + $0x20] sm:$0xff]
      %v3378 = vld [vmem:[#allocation3 + $0x28] sm:$0xff]
      %v3379 = vld [vmem:[#allocation3 + $0x30] sm:$0xff]
      %v3380 = vld [vmem:[#allocation3 + $0x38] sm:$0xff]
      %v3381 = vld [vmem:[#allocation3 + $0x40] sm:$0xff]
      %v3382 = vld [vmem:[#allocation3 + $0x48] sm:$0xff]
      %v3383 = vld [vmem:[#allocation3 + $0x50] sm:$0xff]
      %v3384 = vld [vmem:[#allocation3 + $0x58] sm:$0xff]
      %v3385 = vld [vmem:[#allocation3 + $0x60] sm:$0xff]
      %v3386 = vld [vmem:[#allocation3 + $0x68] sm:$0xff]
      %v3387 = vld [vmem:[#allocation3 + $0x70] sm:$0xff]
      %v3388 = vld [vmem:[#allocation3 + $0x78] sm:$0xff]
      %v3389 = vld [vmem:[#allocation3 + $0x80] sm:$0xff]
      %v3390 = vld [vmem:[#allocation3 + $0x88] sm:$0xff]
      %v3391 = vld [vmem:[#allocation3 + $0x90] sm:$0xff]
      %v3392 = vld [vmem:[#allocation3 + $0x98] sm:$0xff]
      %v3393 = vld [vmem:[#allocation3 + $0xa0] sm:$0xff]
      %v3394 = vld [vmem:[#allocation3 + $0xa8] sm:$0xff]
      %v3395 = vld [vmem:[#allocation3 + $0xb0] sm:$0xff]
      %v3396 = vld [vmem:[#allocation3 + $0xb8] sm:$0xff]
      %v3397 = vld [vmem:[#allocation3 + $0xc0] sm:$0xff]
      %v3398 = vld [vmem:[#allocation3 + $0xc8] sm:$0xff]
      %v3399 = vld [vmem:[#allocation3 + $0xd0] sm:$0xff]
      %v3400 = vld [vmem:[#allocation3 + $0xd8] sm:$0xff]
      %v3401 = vld [vmem:[#allocation3 + $0xe0] sm:$0xff]
      %v3402 = vld [vmem:[#allocation3 + $0xe8] sm:$0xff]
      %v3403 = vld [vmem:[#allocation3 + $0xf0] sm:$0xff]
      %v3404 = vld [vmem:[#allocation3 + $0xf8] sm:$0xff]
      %v3405 = vld [vmem:[#allocation3 + $0x100] sm:$0xff]
      %v3406 = vld [vmem:[#allocation3 + $0x108] sm:$0xff]
      %v3407 = vld [vmem:[#allocation3 + $0x110] sm:$0xff]
      %v3408 = vld [vmem:[#allocation3 + $0x118] sm:$0xff]
      %v3409 = vld [vmem:[#allocation3 + $0x120] sm:$0xff]
      %v3410 = vld [vmem:[#allocation3 + $0x128] sm:$0xff]
      %v3411 = vld [vmem:[#allocation3 + $0x130] sm:$0xff]
      %v3412 = vld [vmem:[#allocation3 + $0x138] sm:$0xff]
      %v3413 = vld [vmem:[#allocation3 + $0x140] sm:$0xff]
      %v3414 = vld [vmem:[#allocation3 + $0x148] sm:$0xff]
      %v3415 = vld [vmem:[#allocation3 + $0x150] sm:$0xff]
      %v3416 = vld [vmem:[#allocation3 + $0x158] sm:$0xff]
      %v3417 = vld [vmem:[#allocation3 + $0x160] sm:$0xff]
      %v3418 = vld [vmem:[#allocation3 + $0x168] sm:$0xff]
      %v3419 = vld [vmem:[#allocation3 + $0x170] sm:$0xff]
      %v3420 = vld [vmem:[#allocation3 + $0x178] sm:$0xff]
      %v3421 = vld [vmem:[#allocation3 + $0x180] sm:$0xff]
      %v3422 = vld [vmem:[#allocation3 + $0x188] sm:$0xff]
      %v3423 = vld [vmem:[#allocation3 + $0x190] sm:$0xff]
      %v3424 = vld [vmem:[#allocation3 + $0x198] sm:$0xff]
      %v3425 = vld [vmem:[#allocation3 + $0x1a0] sm:$0xff]
      %v3426 = vld [vmem:[#allocation3 + $0x1a8] sm:$0xff]
      %v3427 = vld [vmem:[#allocation3 + $0x1b0] sm:$0xff]
      %v3428 = vld [vmem:[#allocation3 + $0x1b8] sm:$0xff]
      %v3429 = vld [vmem:[#allocation3 + $0x1c0] sm:$0xff]
      %v3430 = vld [vmem:[#allocation3 + $0x1c8] sm:$0xff]
      %v3431 = vld [vmem:[#allocation3 + $0x1d0] sm:$0xff]
      %v3432 = vld [vmem:[#allocation3 + $0x1d8] sm:$0xff]
      %v3433 = vld [vmem:[#allocation3 + $0x1e0] sm:$0xff]
      %v3434 = vld [vmem:[#allocation3 + $0x1e8] sm:$0xff]
      %v3435 = vld [vmem:[#allocation3 + $0x1f0] sm:$0xff]
      %v3436 = vld [vmem:[#allocation3 + $0x1f8] sm:$0xff]
      %v3437 = vld [vmem:[#allocation3 + $0x200] sm:$0xff]
      %v3438 = vld [vmem:[#allocation3 + $0x208] sm:$0xff]
      %v3439 = vld [vmem:[#allocation3 + $0x210] sm:$0xff]
      %v3440 = vld [vmem:[#allocation3 + $0x218] sm:$0xff]
      %v3441 = vld [vmem:[#allocation3 + $0x220] sm:$0xff]
      %v3442 = vld [vmem:[#allocation3 + $0x228] sm:$0xff]
      %v3443 = vld [vmem:[#allocation3 + $0x230] sm:$0xff]
      %v3444 = vld [vmem:[#allocation3 + $0x238] sm:$0xff]
      %v3445 = vld [vmem:[#allocation3 + $0x240] sm:$0xff]
      %v3446 = vld [vmem:[#allocation3 + $0x248] sm:$0xff]
      %v3447 = vld [vmem:[#allocation3 + $0x250] sm:$0xff]
      %v3448 = vld [vmem:[#allocation3 + $0x258] sm:$0xff]
      %v3449 = vld [vmem:[#allocation3 + $0x260] sm:$0xff]
      %v3450 = vld [vmem:[#allocation3 + $0x268] sm:$0xff]
      %v3451 = vld [vmem:[#allocation3 + $0x270] sm:$0xff]
      %v3452 = vld [vmem:[#allocation3 + $0x278] sm:$0xff]
      %v3453 = vld [vmem:[%s5] sm:$0xf]
      %v3454 = vld [vmem:[%s5 + $0x4] sm:$0xf]
      %v3455 = vld [vmem:[%s5 + $0x8] sm:$0xf]
      %v3456 = vld [vmem:[%s5 + $0xc] sm:$0xf]
      %v3457 = vld [vmem:[%s5 + $0x10] sm:$0xf]
      %v3458 = vld [vmem:[%s5 + $0x14] sm:$0xf]
      %v3459 = vld [vmem:[%s5 + $0x18] sm:$0xf]
      %v3460 = vld [vmem:[%s5 + $0x1c] sm:$0xf]
      %v3461 = vld [vmem:[%s5 + $0x20] sm:$0xf]
      %v3462 = vld [vmem:[%s5 + $0x24] sm:$0xf]
      %v3463 = vld [vmem:[%s5 + $0x28] sm:$0xf]
      %v3464 = vld [vmem:[%s5 + $0x2c] sm:$0xf]
      %v3465 = vld [vmem:[%s5 + $0x30] sm:$0xf]
      %v3466 = vld [vmem:[%s5 + $0x34] sm:$0xf]
      %v3467 = vld [vmem:[%s5 + $0x38] sm:$0xf]
      %v3468 = vld [vmem:[%s5 + $0x3c] sm:$0xf]
      %v3469 = vld [vmem:[%s5 + $0x40] sm:$0xf]
      %v3470 = vld [vmem:[%s5 + $0x44] sm:$0xf]
      %v3471 = vld [vmem:[%s5 + $0x48] sm:$0xf]
      %v3472 = vld [vmem:[%s5 + $0x4c] sm:$0xf]
      %v3473 = vld [vmem:[%s5 + $0x50] sm:$0xf]
      %v3474 = vld [vmem:[%s5 + $0x54] sm:$0xf]
      %v3475 = vld [vmem:[%s5 + $0x58] sm:$0xf]
      %v3476 = vld [vmem:[%s5 + $0x5c] sm:$0xf]
      %v3477 = vld [vmem:[%s5 + $0x60] sm:$0xf]
      %v3478 = vld [vmem:[%s5 + $0x64] sm:$0xf]
      %v3479 = vld [vmem:[%s5 + $0x68] sm:$0xf]
      %v3480 = vld [vmem:[%s5 + $0x6c] sm:$0xf]
      %v3481 = vld [vmem:[%s5 + $0x70] sm:$0xf]
      %v3482 = vld [vmem:[%s5 + $0x74] sm:$0xf]
      %v3483 = vld [vmem:[%s5 + $0x78] sm:$0xf]
      %v3484 = vld [vmem:[%s5 + $0x7c] sm:$0xf]
      %v3485 = vld [vmem:[%s5 + $0x80] sm:$0xf]
      %v3486 = vld [vmem:[%s5 + $0x84] sm:$0xf]
      %v3487 = vld [vmem:[%s5 + $0x88] sm:$0xf]
      %v3488 = vld [vmem:[%s5 + $0x8c] sm:$0xf]
      %v3489 = vld [vmem:[%s5 + $0x90] sm:$0xf]
      %v3490 = vld [vmem:[%s5 + $0x94] sm:$0xf]
      %v3491 = vld [vmem:[%s5 + $0x98] sm:$0xf]
      %v3492 = vld [vmem:[%s5 + $0x9c] sm:$0xf]
      %v3493 = vld [vmem:[%s5 + $0xa0] sm:$0xf]
      %v3494 = vld [vmem:[%s5 + $0xa4] sm:$0xf]
      %v3495 = vld [vmem:[%s5 + $0xa8] sm:$0xf]
      %v3496 = vld [vmem:[%s5 + $0xac] sm:$0xf]
      %v3497 = vld [vmem:[%s5 + $0xb0] sm:$0xf]
      %v3498 = vld [vmem:[%s5 + $0xb4] sm:$0xf]
      %v3499 = vld [vmem:[%s5 + $0xb8] sm:$0xf]
      %v3500 = vld [vmem:[%s5 + $0xbc] sm:$0xf]
      %v3501 = vld [vmem:[%s5 + $0xc0] sm:$0xf]
      %v3502 = vld [vmem:[%s5 + $0xc4] sm:$0xf]
      %v3503 = vld [vmem:[%s5 + $0xc8] sm:$0xf]
      %v3504 = vld [vmem:[%s5 + $0xcc] sm:$0xf]
      %v3505 = vld [vmem:[%s5 + $0xd0] sm:$0xf]
      %v3506 = vld [vmem:[%s5 + $0xd4] sm:$0xf]
      %v3507 = vld [vmem:[%s5 + $0xd8] sm:$0xf]
      %v3508 = vld [vmem:[%s5 + $0xdc] sm:$0xf]
      %v3509 = vld [vmem:[%s5 + $0xe0] sm:$0xf]
      %v3510 = vld [vmem:[%s5 + $0xe4] sm:$0xf]
      %v3511 = vld [vmem:[%s5 + $0xe8] sm:$0xf]
      %v3512 = vld [vmem:[%s5 + $0xec] sm:$0xf]
      %v3513 = vld [vmem:[%s5 + $0xf0] sm:$0xf]
      %v3514 = vld [vmem:[%s5 + $0xf4] sm:$0xf]
      %v3515 = vld [vmem:[%s5 + $0xf8] sm:$0xf]
      %v3516 = vld [vmem:[%s5 + $0xfc] sm:$0xf]
      %v3517 = vld [vmem:[%s5 + $0x100] sm:$0xf]
      %v3518 = vld [vmem:[%s5 + $0x104] sm:$0xf]
      %v3519 = vld [vmem:[%s5 + $0x108] sm:$0xf]
      %v3520 = vld [vmem:[%s5 + $0x10c] sm:$0xf]
      %v3521 = vld [vmem:[%s5 + $0x110] sm:$0xf]
      %v3522 = vld [vmem:[%s5 + $0x114] sm:$0xf]
      %v3523 = vld [vmem:[%s5 + $0x118] sm:$0xf]
      %v3524 = vld [vmem:[%s5 + $0x11c] sm:$0xf]
      %v3597 = vunpack.c.l.b16 %v3453
      %v3598 = vunpack.c.l.b16 %v3454
      %v3599 = vunpack.c.l.b16 %v3455
      %v3600 = vunpack.c.l.b16 %v3456
      %v3601 = vunpack.c.l.b16 %v3457
      %v3602 = vunpack.c.l.b16 %v3458
      %v3603 = vunpack.c.l.b16 %v3459
      %v3604 = vunpack.c.l.b16 %v3460
      %v3605 = vunpack.c.l.b16 %v3461
      %v3606 = vunpack.c.l.b16 %v3462
      %v3607 = vunpack.c.l.b16 %v3463
      %v3608 = vunpack.c.l.b16 %v3464
      %v3609 = vunpack.c.l.b16 %v3465
      %v3610 = vunpack.c.l.b16 %v3466
      %v3611 = vunpack.c.l.b16 %v3467
      %v3612 = vunpack.c.l.b16 %v3468
      %v3613 = vunpack.c.l.b16 %v3469
      %v3614 = vunpack.c.l.b16 %v3470
      %v3615 = vunpack.c.l.b16 %v3471
      %v3616 = vunpack.c.l.b16 %v3472
      %v3617 = vunpack.c.l.b16 %v3473
      %v3618 = vunpack.c.l.b16 %v3474
      %v3619 = vunpack.c.l.b16 %v3475
      %v3620 = vunpack.c.l.b16 %v3476
      %v3621 = vunpack.c.l.b16 %v3477
      %v3622 = vunpack.c.l.b16 %v3478
      %v3623 = vunpack.c.l.b16 %v3479
      %v3624 = vunpack.c.l.b16 %v3480
      %v3625 = vunpack.c.l.b16 %v3481
      %v3626 = vunpack.c.l.b16 %v3482
      %v3627 = vunpack.c.l.b16 %v3483
      %v3628 = vunpack.c.l.b16 %v3484
      %v3629 = vunpack.c.l.b16 %v3485
      %v3630 = vunpack.c.l.b16 %v3486
      %v3631 = vunpack.c.l.b16 %v3487
      %v3632 = vunpack.c.l.b16 %v3488
      %v3633 = vunpack.c.l.b16 %v3489
      %v3634 = vunpack.c.l.b16 %v3490
      %v3635 = vunpack.c.l.b16 %v3491
      %v3636 = vunpack.c.l.b16 %v3492
      %v3637 = vunpack.c.l.b16 %v3493
      %v3638 = vunpack.c.l.b16 %v3494
      %v3639 = vunpack.c.l.b16 %v3495
      %v3640 = vunpack.c.l.b16 %v3496
      %v3641 = vunpack.c.l.b16 %v3497
      %v3642 = vunpack.c.l.b16 %v3498
      %v3643 = vunpack.c.l.b16 %v3499
      %v3644 = vunpack.c.l.b16 %v3500
      %v3645 = vunpack.c.l.b16 %v3501
      %v3646 = vunpack.c.l.b16 %v3502
      %v3647 = vunpack.c.l.b16 %v3503
      %v3648 = vunpack.c.l.b16 %v3504
      %v3649 = vunpack.c.l.b16 %v3505
      %v3650 = vunpack.c.l.b16 %v3506
      %v3651 = vunpack.c.l.b16 %v3507
      %v3652 = vunpack.c.l.b16 %v3508
      %v3653 = vunpack.c.l.b16 %v3509
      %v3654 = vunpack.c.l.b16 %v3510
      %v3655 = vunpack.c.l.b16 %v3511
      %v3656 = vunpack.c.l.b16 %v3512
      %v3657 = vunpack.c.l.b16 %v3513
      %v3658 = vunpack.c.l.b16 %v3514
      %v3659 = vunpack.c.l.b16 %v3515
      %v3660 = vunpack.c.l.b16 %v3516
      %v3661 = vunpack.c.l.b16 %v3517
      %v3662 = vunpack.c.l.b16 %v3518
      %v3663 = vunpack.c.l.b16 %v3519
      %v3664 = vunpack.c.l.b16 %v3520
      %v3665 = vunpack.c.l.b16 %v3521
      %v3666 = vunpack.c.l.b16 %v3522
      %v3667 = vunpack.c.l.b16 %v3523
      %v3668 = vunpack.c.l.b16 %v3524
      %v3669 = vpack.c.b16 %v3598, %v3597
      %v3670 = vpack.c.b16 %v3600, %v3599
      %v3671 = vpack.c.b16 %v3602, %v3601
      %v3672 = vpack.c.b16 %v3604, %v3603
      %v3673 = vpack.c.b16 %v3606, %v3605
      %v3674 = vpack.c.b16 %v3608, %v3607
      %v3675 = vpack.c.b16 %v3610, %v3609
      %v3676 = vpack.c.b16 %v3612, %v3611
      %v3677 = vpack.c.b16 %v3614, %v3613
      %v3678 = vpack.c.b16 %v3616, %v3615
      %v3679 = vpack.c.b16 %v3618, %v3617
      %v3680 = vpack.c.b16 %v3620, %v3619
      %v3681 = vpack.c.b16 %v3622, %v3621
      %v3682 = vpack.c.b16 %v3624, %v3623
      %v3683 = vpack.c.b16 %v3626, %v3625
      %v3684 = vpack.c.b16 %v3628, %v3627
      %v3685 = vpack.c.b16 %v3630, %v3629
      %v3686 = vpack.c.b16 %v3632, %v3631
      %v3687 = vpack.c.b16 %v3634, %v3633
      %v3688 = vpack.c.b16 %v3636, %v3635
      %v3689 = vpack.c.b16 %v3638, %v3637
      %v3690 = vpack.c.b16 %v3640, %v3639
      %v3691 = vpack.c.b16 %v3642, %v3641
      %v3692 = vpack.c.b16 %v3644, %v3643
      %v3693 = vpack.c.b16 %v3646, %v3645
      %v3694 = vpack.c.b16 %v3648, %v3647
      %v3695 = vpack.c.b16 %v3650, %v3649
      %v3696 = vpack.c.b16 %v3652, %v3651
      %v3697 = vpack.c.b16 %v3654, %v3653
      %v3698 = vpack.c.b16 %v3656, %v3655
      %v3699 = vpack.c.b16 %v3658, %v3657
      %v3700 = vpack.c.b16 %v3660, %v3659
      %v3701 = vpack.c.b16 %v3662, %v3661
      %v3702 = vpack.c.b16 %v3664, %v3663
      %v3703 = vpack.c.b16 %v3666, %v3665
      %v3704 = vpack.c.b16 %v3668, %v3667
      %v3742 = vsel %vm280, %v3377, 0
      %v3745 = vsel %vm280, %v3382, 0
      %v3748 = vsel %vm280, %v3387, 0
      %v3751 = vsel %vm280, %v3392, 0
      %v3754 = vsel %vm280, %v3397, 0
      %v3757 = vsel %vm280, %v3402, 0
      %v3760 = vsel %vm280, %v3407, 0
      %v3763 = vsel %vm280, %v3412, 0
      %v3766 = vsel %vm280, %v3417, 0
      %v3769 = vsel %vm280, %v3422, 0
      %v3772 = vsel %vm280, %v3427, 0
      %v3775 = vsel %vm280, %v3432, 0
      %v3778 = vsel %vm280, %v3437, 0
      %v3781 = vsel %vm280, %v3442, 0
      %v3784 = vsel %vm280, %v3447, 0
      %v3787 = vsel %vm280, %v3452, 0
      %3789 = vmatprep.subr.bf16.mxu0 0
      %3790 = vmatpush1.bf16.msra.mxu0 %v3669
      %3791 = vmatprep.subr.bf16.mxu0 0
      %3792 = vmatpush1.bf16.msra.mxu0 %v3670
      %3793 = vmatprep.subr.bf16.mxu0 0
      %3794 = vmatpush1.bf16.msra.mxu0 %v3671
      %3795 = vmatprep.subr.bf16.mxu0 0
      %3796 = vmatpush1.bf16.msra.mxu0 %v3672
      %3797 = vmatprep.subr.bf16.mxu0 0
      %3798 = vmatpush1.bf16.msra.mxu0 %v3673
      %3799 = vmatprep.subr.bf16.mxu0 0
      %3800 = vmatpush1.bf16.msra.mxu0 %v3674
      %3801 = vmatprep.subr.bf16.mxu0 0
      %3802 = vmatpush1.bf16.msra.mxu0 %v3675
      %3803 = vmatprep.subr.bf16.mxu0 0
      %3804 = vmatpush1.bf16.msra.mxu0 %v3676
      %3805 = vmatprep.subr.bf16.mxu0 0
      %3806 = vmatpush1.bf16.msra.mxu0 %v3677
      %3807 = vmatprep.subr.bf16.mxu0 0
      %3808 = vmatpush1.bf16.msra.mxu0 %v3678
      %3809 = vmatprep.subr.bf16.mxu0 0
      %3810 = vmatpush1.bf16.msra.mxu0 %v3679
      %3811 = vmatprep.subr.bf16.mxu0 0
      %3812 = vmatpush1.bf16.msra.mxu0 %v3680
      %3813 = vmatprep.subr.bf16.mxu0 0
      %3814 = vmatpush1.bf16.msra.mxu0 %v3681
      %3815 = vmatprep.subr.bf16.mxu0 0
      %3816 = vmatpush1.bf16.msra.mxu0 %v3682
      %3817 = vmatprep.subr.bf16.mxu0 0
      %3818 = vmatpush1.bf16.msra.mxu0 %v3683
      %3819 = vmatprep.subr.bf16.mxu0 0
      %3820 = vmatpush1.bf16.msra.mxu0 %v3684
      %3821 = vmatprep.mubr.bf16.mxu0 %v3374
      %3822 = vmatmul.mubr.bf16.gmra.mrb[0].mxu0 %v3373
      %v3823 = vpop.f32.mrb[0].mxu0
      %v3824 = vadd.f32 0.0, %v3823
      %v3825 = vpop.f32.mrb[0].mxu0
      %v3826 = vpop.f32.mrb[0].mxu0
      %v3827 = vadd.f32 0.0, %v3826
      %v3828 = vpop.f32.mrb[0].mxu0
      %3829 = vmatprep.mubr.bf16.mxu0 %v3379
      %3830 = vmatmul.mubr.bf16.gmra.mrb[0].mxu0 %v3378
      %v3831 = vpop.f32.mrb[0].mxu0
      %v3832 = vadd.f32 0.0, %v3831
      %v3833 = vpop.f32.mrb[0].mxu0
      %v3834 = vpop.f32.mrb[0].mxu0
      %v3835 = vadd.f32 0.0, %v3834
      %v3836 = vpop.f32.mrb[0].mxu0
      %3837 = vmatprep.mubr.bf16.mxu0 %v3384
      %3838 = vmatmul.mubr.bf16.gmra.mrb[0].mxu0 %v3383
      %v3839 = vpop.f32.mrb[0].mxu0
      %v3840 = vadd.f32 0.0, %v3839
      %v3841 = vpop.f32.mrb[0].mxu0
      %v3842 = vpop.f32.mrb[0].mxu0
      %v3843 = vadd.f32 0.0, %v3842
      %v3844 = vpop.f32.mrb[0].mxu0
      %3845 = vmatprep.mubr.bf16.mxu0 %v3389
      %3846 = vmatmul.mubr.bf16.gmra.mrb[0].mxu0 %v3388
      %v3847 = vpop.f32.mrb[0].mxu0
      %v3848 = vadd.f32 0.0, %v3847
      %v3849 = vpop.f32.mrb[0].mxu0
      %v3850 = vpop.f32.mrb[0].mxu0
      %v3851 = vadd.f32 0.0, %v3850
      %v3852 = vpop.f32.mrb[0].mxu0
      %3853 = vmatprep.mubr.bf16.mxu0 %v3394
      %3854 = vmatmul.mubr.bf16.gmra.mrb[0].mxu0 %v3393
      %v3855 = vpop.f32.mrb[0].mxu0
      %v3856 = vadd.f32 0.0, %v3855
      %v3857 = vpop.f32.mrb[0].mxu0
      %v3858 = vpop.f32.mrb[0].mxu0
      %v3859 = vadd.f32 0.0, %v3858
      %v3860 = vpop.f32.mrb[0].mxu0
      %3861 = vmatprep.mubr.bf16.mxu0 %v3399
      %3862 = vmatmul.mubr.bf16.gmra.mrb[0].mxu0 %v3398
      %v3863 = vpop.f32.mrb[0].mxu0
      %v3864 = vadd.f32 0.0, %v3863
      %v3865 = vpop.f32.mrb[0].mxu0
      %v3866 = vpop.f32.mrb[0].mxu0
      %v3867 = vadd.f32 0.0, %v3866
      %v3868 = vpop.f32.mrb[0].mxu0
      %3869 = vmatprep.mubr.bf16.mxu0 %v3404
      %3870 = vmatmul.mubr.bf16.gmra.mrb[0].mxu0 %v3403
      %v3871 = vpop.f32.mrb[0].mxu0
      %v3872 = vadd.f32 0.0, %v3871
      %v3873 = vpop.f32.mrb[0].mxu0
      %v3874 = vpop.f32.mrb[0].mxu0
      %v3875 = vadd.f32 0.0, %v3874
      %v3876 = vpop.f32.mrb[0].mxu0
      %3877 = vmatprep.mubr.bf16.mxu0 %v3409
      %3878 = vmatmul.mubr.bf16.gmra.mrb[0].mxu0 %v3408
      %v3879 = vpop.f32.mrb[0].mxu0
      %v3880 = vadd.f32 0.0, %v3879
      %v3881 = vpop.f32.mrb[0].mxu0
      %v3882 = vpop.f32.mrb[0].mxu0
      %v3883 = vadd.f32 0.0, %v3882
      %v3884 = vpop.f32.mrb[0].mxu0
      %3885 = vmatprep.mubr.bf16.mxu0 %v3414
      %3886 = vmatmul.mubr.bf16.gmra.mrb[0].mxu0 %v3413
      %v3887 = vpop.f32.mrb[0].mxu0
      %v3888 = vadd.f32 0.0, %v3887
      %v3889 = vpop.f32.mrb[0].mxu0
      %v3890 = vpop.f32.mrb[0].mxu0
      %v3891 = vadd.f32 0.0, %v3890
      %v3892 = vpop.f32.mrb[0].mxu0
      %3893 = vmatprep.mubr.bf16.mxu0 %v3419
      %3894 = vmatmul.mubr.bf16.gmra.mrb[0].mxu0 %v3418
      %v3895 = vpop.f32.mrb[0].mxu0
      %v3896 = vadd.f32 0.0, %v3895
      %v3897 = vpop.f32.mrb[0].mxu0
      %v3898 = vpop.f32.mrb[0].mxu0
      %v3899 = vadd.f32 0.0, %v3898
      %v3900 = vpop.f32.mrb[0].mxu0
      %3901 = vmatprep.mubr.bf16.mxu0 %v3424
      %3902 = vmatmul.mubr.bf16.gmra.mrb[0].mxu0 %v3423
      %v3903 = vpop.f32.mrb[0].mxu0
      %v3904 = vadd.f32 0.0, %v3903
      %v3905 = vpop.f32.mrb[0].mxu0
      %v3906 = vpop.f32.mrb[0].mxu0
      %v3907 = vadd.f32 0.0, %v3906
      %v3908 = vpop.f32.mrb[0].mxu0
      %3909 = vmatprep.mubr.bf16.mxu0 %v3429
      %3910 = vmatmul.mubr.bf16.gmra.mrb[0].mxu0 %v3428
      %v3911 = vpop.f32.mrb[0].mxu0
      %v3912 = vadd.f32 0.0, %v3911
      %v3913 = vpop.f32.mrb[0].mxu0
      %v3914 = vpop.f32.mrb[0].mxu0
      %v3915 = vadd.f32 0.0, %v3914
      %v3916 = vpop.f32.mrb[0].mxu0
      %3917 = vmatprep.mubr.bf16.mxu0 %v3434
      %3918 = vmatmul.mubr.bf16.gmra.mrb[0].mxu0 %v3433
      %v3919 = vpop.f32.mrb[0].mxu0
      %v3920 = vadd.f32 0.0, %v3919
      %v3921 = vpop.f32.mrb[0].mxu0
      %v3922 = vpop.f32.mrb[0].mxu0
      %v3923 = vadd.f32 0.0, %v3922
      %v3924 = vpop.f32.mrb[0].mxu0
      %3925 = vmatprep.mubr.bf16.mxu0 %v3439
      %3926 = vmatmul.mubr.bf16.gmra.mrb[0].mxu0 %v3438
      %v3927 = vpop.f32.mrb[0].mxu0
      %v3928 = vadd.f32 0.0, %v3927
      %v3929 = vpop.f32.mrb[0].mxu0
      %v3930 = vpop.f32.mrb[0].mxu0
      %v3931 = vadd.f32 0.0, %v3930
      %v3932 = vpop.f32.mrb[0].mxu0
      %3933 = vmatprep.mubr.bf16.mxu0 %v3444
      %3934 = vmatmul.mubr.bf16.gmra.mrb[0].mxu0 %v3443
      %v3935 = vpop.f32.mrb[0].mxu0
      %v3936 = vadd.f32 0.0, %v3935
      %v3937 = vpop.f32.mrb[0].mxu0
      %v3938 = vpop.f32.mrb[0].mxu0
      %v3939 = vadd.f32 0.0, %v3938
      %v3940 = vpop.f32.mrb[0].mxu0
      %3941 = vmatprep.mubr.bf16.mxu0 %v3449
      %3942 = vmatmul.mubr.bf16.gmra.mrb[0].mxu0 %v3448
      %v3943 = vpop.f32.mrb[0].mxu0
      %v3944 = vadd.f32 0.0, %v3943
      %v3945 = vpop.f32.mrb[0].mxu0
      %v3946 = vpop.f32.mrb[0].mxu0
      %v3947 = vadd.f32 0.0, %v3946
      %v3948 = vpop.f32.mrb[0].mxu0
      %3949 = vdwg.mxu0
      %3950 = vmatprep.subr.bf16.mxu0 0
      %3951 = vmatpush1.bf16.msra.mxu0 %v3685
      %3952 = vmatprep.subr.bf16.mxu0 0
      %3953 = vmatpush1.bf16.msra.mxu0 %v3686
      %3954 = vmatprep.subr.bf16.mxu0 0
      %3955 = vmatpush1.bf16.msra.mxu0 %v3687
      %3956 = vmatprep.subr.bf16.mxu0 0
      %3957 = vmatpush1.bf16.msra.mxu0 %v3688
      %3958 = vmatprep.subr.bf16.mxu0 0
      %3959 = vmatpush1.bf16.msra.mxu0 %v3689
      %3960 = vmatprep.subr.bf16.mxu0 0
      %3961 = vmatpush1.bf16.msra.mxu0 %v3690
      %3962 = vmatprep.subr.bf16.mxu0 0
      %3963 = vmatpush1.bf16.msra.mxu0 %v3691
      %3964 = vmatprep.subr.bf16.mxu0 0
      %3965 = vmatpush1.bf16.msra.mxu0 %v3692
      %3966 = vmatprep.subr.bf16.mxu0 0
      %3967 = vmatpush1.bf16.msra.mxu0 %v3693
      %3968 = vmatprep.subr.bf16.mxu0 0
      %3969 = vmatpush1.bf16.msra.mxu0 %v3694
      %3970 = vmatprep.subr.bf16.mxu0 0
      %3971 = vmatpush1.bf16.msra.mxu0 %v3695
      %3972 = vmatprep.subr.bf16.mxu0 0
      %3973 = vmatpush1.bf16.msra.mxu0 %v3696
      %3974 = vmatprep.subr.bf16.mxu0 0
      %3975 = vmatpush1.bf16.msra.mxu0 %v3697
      %3976 = vmatprep.subr.bf16.mxu0 0
      %3977 = vmatpush1.bf16.msra.mxu0 %v3698
      %3978 = vmatprep.subr.bf16.mxu0 0
      %3979 = vmatpush1.bf16.msra.mxu0 %v3699
      %3980 = vmatprep.subr.bf16.mxu0 0
      %3981 = vmatpush1.bf16.msra.mxu0 %v3700
      %3982 = vmatprep.mubr.bf16.mxu0 %v3376
      %3983 = vmatmul.mubr.bf16.gmra.mrb[0].mxu0 %v3375
      %v3984 = vpop.f32.mrb[0].mxu0
      %v3985 = vadd.f32 %v3824, %v3984
      %v3986 = vpop.f32.mrb[0].mxu0
      %v3987 = vpop.f32.mrb[0].mxu0
      %v3988 = vadd.f32 %v3827, %v3987
      %v3989 = vpop.f32.mrb[0].mxu0
      %3990 = vmatprep.mubr.bf16.mxu0 %v3381
      %3991 = vmatmul.mubr.bf16.gmra.mrb[0].mxu0 %v3380
      %v3992 = vpop.f32.mrb[0].mxu0
      %v3993 = vadd.f32 %v3832, %v3992
      %v3994 = vpop.f32.mrb[0].mxu0
      %v3995 = vpop.f32.mrb[0].mxu0
      %v3996 = vadd.f32 %v3835, %v3995
      %v3997 = vpop.f32.mrb[0].mxu0
      %3998 = vmatprep.mubr.bf16.mxu0 %v3386
      %3999 = vmatmul.mubr.bf16.gmra.mrb[0].mxu0 %v3385
      %v4000 = vpop.f32.mrb[0].mxu0
      %v4001 = vadd.f32 %v3840, %v4000
      %v4002 = vpop.f32.mrb[0].mxu0
      %v4003 = vpop.f32.mrb[0].mxu0
      %v4004 = vadd.f32 %v3843, %v4003
      %v4005 = vpop.f32.mrb[0].mxu0
      %4006 = vmatprep.mubr.bf16.mxu0 %v3391
      %4007 = vmatmul.mubr.bf16.gmra.mrb[0].mxu0 %v3390
      %v4008 = vpop.f32.mrb[0].mxu0
      %v4009 = vadd.f32 %v3848, %v4008
      %v4010 = vpop.f32.mrb[0].mxu0
      %v4011 = vpop.f32.mrb[0].mxu0
      %v4012 = vadd.f32 %v3851, %v4011
      %v4013 = vpop.f32.mrb[0].mxu0
      %4014 = vmatprep.mubr.bf16.mxu0 %v3396
      %4015 = vmatmul.mubr.bf16.gmra.mrb[0].mxu0 %v3395
      %v4016 = vpop.f32.mrb[0].mxu0
      %v4017 = vadd.f32 %v3856, %v4016
      %v4018 = vpop.f32.mrb[0].mxu0
      %v4019 = vpop.f32.mrb[0].mxu0
      %v4020 = vadd.f32 %v3859, %v4019
      %v4021 = vpop.f32.mrb[0].mxu0
      %4022 = vmatprep.mubr.bf16.mxu0 %v3401
      %4023 = vmatmul.mubr.bf16.gmra.mrb[0].mxu0 %v3400
      %v4024 = vpop.f32.mrb[0].mxu0
      %v4025 = vadd.f32 %v3864, %v4024
      %v4026 = vpop.f32.mrb[0].mxu0
      %v4027 = vpop.f32.mrb[0].mxu0
      %v4028 = vadd.f32 %v3867, %v4027
      %v4029 = vpop.f32.mrb[0].mxu0
      %4030 = vmatprep.mubr.bf16.mxu0 %v3406
      %4031 = vmatmul.mubr.bf16.gmra.mrb[0].mxu0 %v3405
      %v4032 = vpop.f32.mrb[0].mxu0
      %v4033 = vadd.f32 %v3872, %v4032
      %v4034 = vpop.f32.mrb[0].mxu0
      %v4035 = vpop.f32.mrb[0].mxu0
      %v4036 = vadd.f32 %v3875, %v4035
      %v4037 = vpop.f32.mrb[0].mxu0
      %4038 = vmatprep.mubr.bf16.mxu0 %v3411
      %4039 = vmatmul.mubr.bf16.gmra.mrb[0].mxu0 %v3410
      %v4040 = vpop.f32.mrb[0].mxu0
      %v4041 = vadd.f32 %v3880, %v4040
      %v4042 = vpop.f32.mrb[0].mxu0
      %v4043 = vpop.f32.mrb[0].mxu0
      %v4044 = vadd.f32 %v3883, %v4043
      %v4045 = vpop.f32.mrb[0].mxu0
      %4046 = vmatprep.mubr.bf16.mxu0 %v3416
      %4047 = vmatmul.mubr.bf16.gmra.mrb[0].mxu0 %v3415
      %v4048 = vpop.f32.mrb[0].mxu0
      %v4049 = vadd.f32 %v3888, %v4048
      %v4050 = vpop.f32.mrb[0].mxu0
      %v4051 = vpop.f32.mrb[0].mxu0
      %v4052 = vadd.f32 %v3891, %v4051
      %v4053 = vpop.f32.mrb[0].mxu0
      %4054 = vmatprep.mubr.bf16.mxu0 %v3421
      %4055 = vmatmul.mubr.bf16.gmra.mrb[0].mxu0 %v3420
      %v4056 = vpop.f32.mrb[0].mxu0
      %v4057 = vadd.f32 %v3896, %v4056
      %v4058 = vpop.f32.mrb[0].mxu0
      %v4059 = vpop.f32.mrb[0].mxu0
      %v4060 = vadd.f32 %v3899, %v4059
      %v4061 = vpop.f32.mrb[0].mxu0
      %4062 = vmatprep.mubr.bf16.mxu0 %v3426
      %4063 = vmatmul.mubr.bf16.gmra.mrb[0].mxu0 %v3425
      %v4064 = vpop.f32.mrb[0].mxu0
      %v4065 = vadd.f32 %v3904, %v4064
      %v4066 = vpop.f32.mrb[0].mxu0
      %v4067 = vpop.f32.mrb[0].mxu0
      %v4068 = vadd.f32 %v3907, %v4067
      %v4069 = vpop.f32.mrb[0].mxu0
      %4070 = vmatprep.mubr.bf16.mxu0 %v3431
      %4071 = vmatmul.mubr.bf16.gmra.mrb[0].mxu0 %v3430
      %v4072 = vpop.f32.mrb[0].mxu0
      %v4073 = vadd.f32 %v3912, %v4072
      %v4074 = vpop.f32.mrb[0].mxu0
      %v4075 = vpop.f32.mrb[0].mxu0
      %v4076 = vadd.f32 %v3915, %v4075
      %v4077 = vpop.f32.mrb[0].mxu0
      %4078 = vmatprep.mubr.bf16.mxu0 %v3436
      %4079 = vmatmul.mubr.bf16.gmra.mrb[0].mxu0 %v3435
      %v4080 = vpop.f32.mrb[0].mxu0
      %v4081 = vadd.f32 %v3920, %v4080
      %v4082 = vpop.f32.mrb[0].mxu0
      %v4083 = vpop.f32.mrb[0].mxu0
      %v4084 = vadd.f32 %v3923, %v4083
      %v4085 = vpop.f32.mrb[0].mxu0
      %4086 = vmatprep.mubr.bf16.mxu0 %v3441
      %4087 = vmatmul.mubr.bf16.gmra.mrb[0].mxu0 %v3440
      %v4088 = vpop.f32.mrb[0].mxu0
      %v4089 = vadd.f32 %v3928, %v4088
      %v4090 = vpop.f32.mrb[0].mxu0
      %v4091 = vpop.f32.mrb[0].mxu0
      %v4092 = vadd.f32 %v3931, %v4091
      %v4093 = vpop.f32.mrb[0].mxu0
      %4094 = vmatprep.mubr.bf16.mxu0 %v3446
      %4095 = vmatmul.mubr.bf16.gmra.mrb[0].mxu0 %v3445
      %v4096 = vpop.f32.mrb[0].mxu0
      %v4097 = vadd.f32 %v3936, %v4096
      %v4098 = vpop.f32.mrb[0].mxu0
      %v4099 = vpop.f32.mrb[0].mxu0
      %v4100 = vadd.f32 %v3939, %v4099
      %v4101 = vpop.f32.mrb[0].mxu0
      %4102 = vmatprep.mubr.bf16.mxu0 %v3451
      %4103 = vmatmul.mubr.bf16.gmra.mrb[0].mxu0 %v3450
      %v4104 = vpop.f32.mrb[0].mxu0
      %v4105 = vadd.f32 %v3944, %v4104
      %v4106 = vpop.f32.mrb[0].mxu0
      %v4107 = vpop.f32.mrb[0].mxu0
      %v4108 = vadd.f32 %v3947, %v4107
      %v4109 = vpop.f32.mrb[0].mxu0
      %4110 = vdwg.mxu0
      %4111 = vmatprep.subr.bf16.mxu0 0
      %4112 = vmatpush1.bf16.msra.mxu0 %v3701
      %4113 = vmatprep.subr.bf16.mxu0 0
      %4114 = vmatpush1.bf16.msra.mxu0 %v3702
      %4115 = vmatprep.subr.bf16.mxu0 0
      %4116 = vmatpush1.bf16.msra.mxu0 %v3703
      %4117 = vmatprep.subr.bf16.mxu0 0
      %4118 = vmatpush1.bf16.msra.mxu0 %v3704
      %4119 = vmatprep.subr.bf16.mxu0 0
      %4120 = vmatpush1.bf16.msra.mxu0 0
      %4121 = vmatprep.subr.bf16.mxu0 0
      %4122 = vmatpush1.bf16.msra.mxu0 0
      %4123 = vmatprep.subr.bf16.mxu0 0
      %4124 = vmatpush1.bf16.msra.mxu0 0
      %4125 = vmatprep.subr.bf16.mxu0 0
      %4126 = vmatpush1.bf16.msra.mxu0 0
      %4127 = vmatprep.subr.bf16.mxu0 0
      %4128 = vmatpush1.bf16.msra.mxu0 0
      %4129 = vmatprep.subr.bf16.mxu0 0
      %4130 = vmatpush1.bf16.msra.mxu0 0
      %4131 = vmatprep.subr.bf16.mxu0 0
      %4132 = vmatpush1.bf16.msra.mxu0 0
      %4133 = vmatprep.subr.bf16.mxu0 0
      %4134 = vmatpush1.bf16.msra.mxu0 0
      %4135 = vmatprep.subr.bf16.mxu0 0
      %4136 = vmatpush1.bf16.msra.mxu0 0
      %4137 = vmatprep.subr.bf16.mxu0 0
      %4138 = vmatpush1.bf16.msra.mxu0 0
      %4139 = vmatprep.subr.bf16.mxu0 0
      %4140 = vmatpush1.bf16.msra.mxu0 0
      %4141 = vmatprep.subr.bf16.mxu0 0
      %4142 = vmatpush1.bf16.msra.mxu0 0
      %4143 = vmatprep.mubr.bf16.mxu0 0
      %4144 = vmatmul.mubr.bf16.gmra.mrb[0].mxu0 %v3742
      %v4145 = vpop.f32.mrb[0].mxu0
      %v4146 = vadd.f32 %v3985, %v4145
      %v4147 = vpop.f32.mrb[0].mxu0
      %v4148 = vpop.f32.mrb[0].mxu0
      %v4149 = vadd.f32 %v3988, %v4148
      %v4150 = vpop.f32.mrb[0].mxu0
      %4151 = vmatprep.mubr.bf16.mxu0 0
      %4152 = vmatmul.mubr.bf16.gmra.mrb[0].mxu0 %v3745
      %v4153 = vpop.f32.mrb[0].mxu0
      %v4154 = vadd.f32 %v3993, %v4153
      %v4155 = vpop.f32.mrb[0].mxu0
      %v4156 = vpop.f32.mrb[0].mxu0
      %v4157 = vadd.f32 %v3996, %v4156
      %v4158 = vpop.f32.mrb[0].mxu0
      %4159 = vmatprep.mubr.bf16.mxu0 0
      %4160 = vmatmul.mubr.bf16.gmra.mrb[0].mxu0 %v3748
      %v4161 = vpop.f32.mrb[0].mxu0
      %v4162 = vadd.f32 %v4001, %v4161
      %v4163 = vpop.f32.mrb[0].mxu0
      %v4164 = vpop.f32.mrb[0].mxu0
      %v4165 = vadd.f32 %v4004, %v4164
      %v4166 = vpop.f32.mrb[0].mxu0
      %4167 = vmatprep.mubr.bf16.mxu0 0
      %4168 = vmatmul.mubr.bf16.gmra.mrb[0].mxu0 %v3751
      %v4169 = vpop.f32.mrb[0].mxu0
      %v4170 = vadd.f32 %v4009, %v4169
      %v4171 = vpop.f32.mrb[0].mxu0
      %v4172 = vpop.f32.mrb[0].mxu0
      %v4173 = vadd.f32 %v4012, %v4172
      %v4174 = vpop.f32.mrb[0].mxu0
      %4175 = vmatprep.mubr.bf16.mxu0 0
      %4176 = vmatmul.mubr.bf16.gmra.mrb[0].mxu0 %v3754
      %v4177 = vpop.f32.mrb[0].mxu0
      %v4178 = vadd.f32 %v4017, %v4177
      %v4179 = vpop.f32.mrb[0].mxu0
      %v4180 = vpop.f32.mrb[0].mxu0
      %v4181 = vadd.f32 %v4020, %v4180
      %v4182 = vpop.f32.mrb[0].mxu0
      %4183 = vmatprep.mubr.bf16.mxu0 0
      %4184 = vmatmul.mubr.bf16.gmra.mrb[0].mxu0 %v3757
      %v4185 = vpop.f32.mrb[0].mxu0
      %v4186 = vadd.f32 %v4025, %v4185
      %v4187 = vpop.f32.mrb[0].mxu0
      %v4188 = vpop.f32.mrb[0].mxu0
      %v4189 = vadd.f32 %v4028, %v4188
      %v4190 = vpop.f32.mrb[0].mxu0
      %4191 = vmatprep.mubr.bf16.mxu0 0
      %4192 = vmatmul.mubr.bf16.gmra.mrb[0].mxu0 %v3760
      %v4193 = vpop.f32.mrb[0].mxu0
      %v4194 = vadd.f32 %v4033, %v4193
      %v4195 = vpop.f32.mrb[0].mxu0
      %v4196 = vpop.f32.mrb[0].mxu0
      %v4197 = vadd.f32 %v4036, %v4196
      %v4198 = vpop.f32.mrb[0].mxu0
      %4199 = vmatprep.mubr.bf16.mxu0 0
      %4200 = vmatmul.mubr.bf16.gmra.mrb[0].mxu0 %v3763
      %v4201 = vpop.f32.mrb[0].mxu0
      %v4202 = vadd.f32 %v4041, %v4201
      %v4203 = vpop.f32.mrb[0].mxu0
      %v4204 = vpop.f32.mrb[0].mxu0
      %v4205 = vadd.f32 %v4044, %v4204
      %v4206 = vpop.f32.mrb[0].mxu0
      %4207 = vmatprep.mubr.bf16.mxu0 0
      %4208 = vmatmul.mubr.bf16.gmra.mrb[0].mxu0 %v3766
      %v4209 = vpop.f32.mrb[0].mxu0
      %v4210 = vadd.f32 %v4049, %v4209
      %v4211 = vpop.f32.mrb[0].mxu0
      %v4212 = vpop.f32.mrb[0].mxu0
      %v4213 = vadd.f32 %v4052, %v4212
      %v4214 = vpop.f32.mrb[0].mxu0
      %4215 = vmatprep.mubr.bf16.mxu0 0
      %4216 = vmatmul.mubr.bf16.gmra.mrb[0].mxu0 %v3769
      %v4217 = vpop.f32.mrb[0].mxu0
      %v4218 = vadd.f32 %v4057, %v4217
      %v4219 = vpop.f32.mrb[0].mxu0
      %v4220 = vpop.f32.mrb[0].mxu0
      %v4221 = vadd.f32 %v4060, %v4220
      %v4222 = vpop.f32.mrb[0].mxu0
      %4223 = vmatprep.mubr.bf16.mxu0 0
      %4224 = vmatmul.mubr.bf16.gmra.mrb[0].mxu0 %v3772
      %v4225 = vpop.f32.mrb[0].mxu0
      %v4226 = vadd.f32 %v4065, %v4225
      %v4227 = vpop.f32.mrb[0].mxu0
      %v4228 = vpop.f32.mrb[0].mxu0
      %v4229 = vadd.f32 %v4068, %v4228
      %v4230 = vpop.f32.mrb[0].mxu0
      %4231 = vmatprep.mubr.bf16.mxu0 0
      %4232 = vmatmul.mubr.bf16.gmra.mrb[0].mxu0 %v3775
      %v4233 = vpop.f32.mrb[0].mxu0
      %v4234 = vadd.f32 %v4073, %v4233
      %v4235 = vpop.f32.mrb[0].mxu0
      %v4236 = vpop.f32.mrb[0].mxu0
      %v4237 = vadd.f32 %v4076, %v4236
      %v4238 = vpop.f32.mrb[0].mxu0
      %4239 = vmatprep.mubr.bf16.mxu0 0
      %4240 = vmatmul.mubr.bf16.gmra.mrb[0].mxu0 %v3778
      %v4241 = vpop.f32.mrb[0].mxu0
      %v4242 = vadd.f32 %v4081, %v4241
      %v4243 = vpop.f32.mrb[0].mxu0
      %v4244 = vpop.f32.mrb[0].mxu0
      %v4245 = vadd.f32 %v4084, %v4244
      %v4246 = vpop.f32.mrb[0].mxu0
      %4247 = vmatprep.mubr.bf16.mxu0 0
      %4248 = vmatmul.mubr.bf16.gmra.mrb[0].mxu0 %v3781
      %v4249 = vpop.f32.mrb[0].mxu0
      %v4250 = vadd.f32 %v4089, %v4249
      %v4251 = vpop.f32.mrb[0].mxu0
      %v4252 = vpop.f32.mrb[0].mxu0
      %v4253 = vadd.f32 %v4092, %v4252
      %v4254 = vpop.f32.mrb[0].mxu0
      %4255 = vmatprep.mubr.bf16.mxu0 0
      %4256 = vmatmul.mubr.bf16.gmra.mrb[0].mxu0 %v3784
      %v4257 = vpop.f32.mrb[0].mxu0
      %v4258 = vadd.f32 %v4097, %v4257
      %v4259 = vpop.f32.mrb[0].mxu0
      %v4260 = vpop.f32.mrb[0].mxu0
      %v4261 = vadd.f32 %v4100, %v4260
      %v4262 = vpop.f32.mrb[0].mxu0
      %4263 = vmatprep.mubr.bf16.mxu0 0
      %4264 = vmatmul.mubr.bf16.gmra.mrb[0].mxu0 %v3787
      %v4265 = vpop.f32.mrb[0].mxu0
      %v4266 = vadd.f32 %v4105, %v4265
      %v4267 = vpop.f32.mrb[0].mxu0
      %v4268 = vpop.f32.mrb[0].mxu0
      %v4269 = vadd.f32 %v4108, %v4268
      %v4270 = vpop.f32.mrb[0].mxu0
      %4271 = vdwg.mxu0
      %v4272 = vlaneseq
      %v4273 = vshrl.u32 %v4272, 7
      %v4274 = vlaneseq
      %v4275 = vand.u32 %v4274, 127
      %vm4276 = vcmp.eq.s32.totalorder %v4273, %v4275
      %vm4277 = vcmp.lt.s32.totalorder %v4275, 1
      %vm4278 = vmand %vm4276, %vm4277
      %v4279 = vsel %vm4278, 1, 0
      %v4280 = vcvt.s32.f32 %v4279
      %4281 = vmatprep.subr.mxu0 0.0
      %4282 = vmatpush1.xpose.msra.mxu0 %v4146
      %4283 = vmatprep.subr.mxu0 0.0
      %4284 = vmatpush1.xpose.msra.mxu0 %v4149
      %4285 = vmatprep.subr.mxu0 0.0
      %4286 = vmatpush1.xpose.msra.mxu0 %v4154
      %4287 = vmatprep.subr.mxu0 0.0
      %4288 = vmatpush1.xpose.msra.mxu0 %v4157
      %4289 = vmatprep.subr.mxu0 0.0
      %4290 = vmatpush1.xpose.msra.mxu0 %v4162
      %4291 = vmatprep.subr.mxu0 0.0
      %4292 = vmatpush1.xpose.msra.mxu0 %v4165
      %4293 = vmatprep.subr.mxu0 0.0
      %4294 = vmatpush1.xpose.msra.mxu0 %v4170
      %4295 = vmatprep.subr.mxu0 0.0
      %4296 = vmatpush1.xpose.msra.mxu0 %v4173
      %4297 = vmatprep.subr.mxu0 0.0
      %4298 = vmatpush1.xpose.msra.mxu0 %v4178
      %4299 = vmatprep.subr.mxu0 0.0
      %4300 = vmatpush1.xpose.msra.mxu0 %v4181
      %4301 = vmatprep.subr.mxu0 0.0
      %4302 = vmatpush1.xpose.msra.mxu0 %v4186
      %4303 = vmatprep.subr.mxu0 0.0
      %4304 = vmatpush1.xpose.msra.mxu0 %v4189
      %4305 = vmatprep.subr.mxu0 0.0
      %4306 = vmatpush1.xpose.msra.mxu0 %v4194
      %4307 = vmatprep.subr.mxu0 0.0
      %4308 = vmatpush1.xpose.msra.mxu0 %v4197
      %4309 = vmatprep.subr.mxu0 0.0
      %4310 = vmatpush1.xpose.msra.mxu0 %v4202
      %4311 = vmatprep.subr.mxu0 0.0
      %4312 = vmatpush1.xpose.msra.mxu0 %v4205
      %4313 = vmatprep.subr.mxu0 0.0
      %4314 = vmatpush1.xpose.msra.mxu0 %v4210
      %4315 = vmatprep.subr.mxu0 0.0
      %4316 = vmatpush1.xpose.msra.mxu0 %v4213
      %4317 = vmatprep.subr.mxu0 0.0
      %4318 = vmatpush1.xpose.msra.mxu0 %v4218
      %4319 = vmatprep.subr.mxu0 0.0
      %4320 = vmatpush1.xpose.msra.mxu0 %v4221
      %4321 = vmatprep.subr.mxu0 0.0
      %4322 = vmatpush1.xpose.msra.mxu0 %v4226
      %4323 = vmatprep.subr.mxu0 0.0
      %4324 = vmatpush1.xpose.msra.mxu0 %v4229
      %4325 = vmatprep.subr.mxu0 0.0
      %4326 = vmatpush1.xpose.msra.mxu0 %v4234
      %4327 = vmatprep.subr.mxu0 0.0
      %4328 = vmatpush1.xpose.msra.mxu0 %v4237
      %4329 = vmatprep.subr.mxu0 0.0
      %4330 = vmatpush1.xpose.msra.mxu0 %v4242
      %4331 = vmatprep.subr.mxu0 0.0
      %4332 = vmatpush1.xpose.msra.mxu0 %v4245
      %4333 = vmatprep.subr.mxu0 0.0
      %4334 = vmatpush1.xpose.msra.mxu0 %v4250
      %4335 = vmatprep.subr.mxu0 0.0
      %4336 = vmatpush1.xpose.msra.mxu0 %v4253
      %4337 = vmatprep.subr.mxu0 0.0
      %4338 = vmatpush1.xpose.msra.mxu0 %v4258
      %4339 = vmatprep.subr.mxu0 0.0
      %4340 = vmatpush1.xpose.msra.mxu0 %v4261
      %4341 = vmatprep.subr.mxu0 0.0
      %4342 = vmatpush1.xpose.msra.mxu0 %v4266
      %4343 = vmatprep.subr.mxu0 0.0
      %4344 = vmatpush1.xpose.msra.mxu0 %v4269
      %4345 = vmatprep.mubr.f32.mxu0 0.0
      %4346 = vmatmul.mubr.f32.gmra.mrb[0].mxu0 %v4280
      %v4347 = vpop.f32.mrb[0].mxu0
      %v4348 = vadd.f32 0.0, %v4347
      %v4349 = vpop.f32.mrb[0].mxu0
      %v4350 = vadd.f32 0.0, %v4349
      %4351 = vdwg.mxu0
      %v4352 = vld [vmem:[#allocation4] sm:$0x1]
      %4354 = vset.pattern.permute.xlu0 0
      %4355 = vperm.xlu0 %4354, %v4352
      %v4356 = vpop.permute.xlu0 %4355
      %v4358 = vlaneseq
      %v4359 = vshrl.u32 %v4358, 7
      %v4360 = vsub.s32 0, %v4359
      %v4361 = vrot.slane %v4356, %v4360
      %v4362 = vadd.f32 %v4348, %v4361
      %v4363 = vadd.f32 %v4350, %v4361
      %v4364 = vand.u32 2147483647, %v4362
      %v4365 = vand.u32 2147483647, %v4363
      %v4366 = vsub.f32 0.0, %v4364
      %v4367 = vsub.f32 0.0, %v4365
      %v4368 = vmul.f32 %v4366, 1.442695
      %v4369 = vpow.pop %v4368
      %v4370 = vmul.f32 %v4367, 1.442695
      %v4371 = vpow.pop %v4370
      %v4372 = vadd.f32 %v4369, 1.0
      %v4373 = vadd.f32 %v4371, 1.0
      %v4374 = vrcp.pop %v4372
      %v4375 = vmul.f32 1.0, %v4374
      %v4376 = vrcp.pop %v4373
      %v4377 = vmul.f32 1.0, %v4376
      %vm4378 = vcmp.ge.f32.partialorder %v4362, 0.0
      %vm4379 = vcmp.ge.f32.partialorder %v4363, 0.0
      %v4380 = vmul.f32 %v4369, %v4375
      %v4381 = vmul.f32 %v4371, %v4377
      %v4382 = vsel %vm4378, %v4375, %v4380
      %v4383 = vsel %vm4379, %v4377, %v4381
      %v4386 = vcombine.low %v4382, %v4383
      %v4388 = vunpack.c.l.s4 1966171168
      %v4389 = vunpack.c.0.s8 %v4388
      %v4390 = vlaneseq
      %v4391 = vshrl.u32 %v4390, 7
      %v4392 = vsub.s32 %v4389, %v4391
      %v4393 = vrot.slane %v4386, %v4392
      %v4395 = vunpack.c.l.s4 1966171168
      %v4396 = vunpack.c.0.s8 %v4395
      %v4397 = vlaneseq
      %v4398 = vshrl.u32 %v4397, 7
      %v4399 = vsub.s32 %v4396, %v4398
      %v4400 = vrot.slane %v4393, %v4399
      %v4402 = vlaneseq
      %vm4403 = vcmp.ge.s32.totalorder %v4402, 0
      %vm4404 = vcmp.lt.s32.totalorder %v4402, 256
      %vm4405 = vmand %vm4403, %vm4404
      %4406 = vst.msk [vmem:[%s278] sm:$0x3] %vm4405, %v4400
      %p4407 = scmp.lt.s32.totalorder %s20, 1
      %s4408 = scalar_select %p4407, %s20, 1
      %s4409 = smul.addr %s4408, 2
      %s4410 = scalar_lea.vmem %s7, %s4409
      // Predicated region
      $region49: #{unet_forward.1} parent=47 // pred_check
        %p4411 = pneg %p190
      $region50: #{unet_forward.1} parent=47 // pred_check_branch
        %4413 = sbr.rel (%p4411) target = $region52
      $region51: #{unet_forward.1} parent=47 // pred_region
        _
      $region52: #{unet_forward.1} parent=47 // pred_fallthru
        _
    $region48: #{unet_forward.1} parent=5 // pred_fallthru
      _
    %p4414 = scmp.le.s32.totalorder 2, %s15
    // Predicated region
    $region53: #{unet_forward.1} parent=5 // pred_check
      %p4415 = pneg %p4414
    $region54: #{unet_forward.1} parent=5 // pred_check_branch
      %4417 = sbr.rel (%p4415) target = $region56
    $region55: #{unet_forward.1} parent=5 // pred_region
      %s4418 = ssub.s32 %s15, 2
      // Predicated region
      $region57: #{unet_forward.1} parent=55 // pred_check
        %p4419 = pneg %p196
      $region58: #{unet_forward.1} parent=55 // pred_check_branch
        %4421 = sbr.rel (%p4419) target = $region60
      $region59: #{unet_forward.1} parent=55 // pred_region
        %p4422 = scmp.lt.s32.totalorder %s21, 1
        %s4423 = scalar_select %p4422, %s21, 1
        %s4424 = smul.addr %s4423, 2
        %s4425 = scalar_lea.vmem %s7, %s4424
      $region60: #{unet_forward.1} parent=55 // pred_fallthru
        _
    $region56: #{unet_forward.1} parent=5 // pred_fallthru
      _
  $region6: #{unet_forward.1} parent=0 // loop_footer
    %s19 = sadd.s32 1, %s15
  $region7: #{unet_forward.1} parent=0 // loop_footer_branch
    %14 = sbr.rel target = $region3
  $region8: #{unet_forward.1} parent=0 // loop_exit
    _

</llo_original>
